<compile_context>
chip_gen: v6e
topology: v6e:2x2x1
jax: 0.10.0
libtpu: 0.0.40
codegen_flags: <defaults>
</compile_context>

<pallas_src>
import functools

import jax
import jax.numpy as jnp
from jax.experimental import pallas as pl
from jax.experimental.pallas import tpu as pltpu

# Small, shape-consistent config (config.hidden_size, config.num_labels, ...).
HIDDEN = 32      # config.hidden_size
NUM_CLASS = 8    # config.num_labels
EMB = 64         # emb_size
BLOCK = 16       # block_size
TAU = 0.5        # tau in linear_attention.forward
LANE = 128       # TPU lane width (class dim padded to this)


def _round_up(x, m):
    return ((x + m - 1) // m) * m


def _device_kind():
    try:
        return jax.devices()[0].device_kind.lower()
    except Exception:
        return ""


# ----------------------------------------------------------------------------
# Pallas kernel: label-attentive context + extractors + block bilinear + labels
# ----------------------------------------------------------------------------
def _docre_head_kernel(hs_ref, ts_ref, rs_ref, slab_ref, bias_ref, v_ref,
                       whh_ref, wtt_ref, wz_ref, bz_ref,
                       logits_ref, pred_ref,
                       *, hidden, emb_size, block_size, num_class, wb_row0,
                       outer_in_md):
    f32 = jnp.float32
    md = v_ref.dtype                      # matmul operand dtype (bf16 by default)

    hs = hs_ref[...]                      # (TM, H)
    ts = ts_ref[...]                      # (TM, H)
    rs = rs_ref[...]                      # (TM, H)

    # Packed 128-lane bf16 parameter slab (one DMA, single-buffered):
    #   rows [0, H)              : tau * Wq.T @ K.T          (folded Q/K path)
    #   rows [wb_row0, +E*B)     : bilinear.weight.T (class-padded with zeros)
    # Small f32 side block (no bf16 rounding, no masked bf16 row loads):
    #   bias_ref row 0 : tau * bq @ K.T  (+ -1e30 in padded class lanes)
    #   bias_ref row 1 : bilinear bias (class-padded with zeros)
    wqk = slab_ref[0:hidden, :]                                     # (H, Cp)
    sbias = bias_ref[0:1, :]                                        # (1, Cp) f32
    bb = bias_ref[1:2, :]                                           # (1, Cp) f32

    # ---- linear_attention(rs, label_oh): K/V hoisted, Q/K matmuls + tau folded
    scores = jnp.dot(rs, wqk, preferred_element_type=f32) + sbias   # (TM, Cp)
    m = jnp.max(scores, axis=1, keepdims=True)
    e = jnp.exp(scores - m)                                         # padded lanes -> 0
    attn = e * pl.reciprocal(jnp.sum(e, axis=1, keepdims=True), approx=True)
    z = jnp.dot(attn.astype(md), v_ref[...], preferred_element_type=f32)  # (TM, H)

    # ---- head/tail extractors; both z-path matmuls fused into one (H, 2E) GEMM
    zw = (jnp.dot(z.astype(md), wz_ref[...], preferred_element_type=f32)
          + bz_ref[...].astype(f32))                                # (TM, 2E)
    h_act = jnp.tanh(jnp.dot(hs, whh_ref[...], preferred_element_type=f32)
                     + zw[:, :emb_size])                            # (TM, E) f32
    t_act = jnp.tanh(jnp.dot(ts, wtt_ref[...], preferred_element_type=f32)
                     + zw[:, emb_size:])                            # (TM, E) f32

    if outer_in_md:
        # v6e/v7x: native bf16 VALU -> cast the small (TM, E) tensors once and
        # keep the outer product / reshape in bf16 (half the vst pressure).
        h_e = h_act.astype(md)
        t_e = t_act.astype(md)
    else:
        # v5e: no bf16 VALU; keep the multiply in f32 and cast only the
        # per-group (TM, B*B) product right before the MXU.
        h_e = h_act
        t_e = t_act

    # ---- grouped block-bilinear features -> per-group ACCUMULATING GEMMs.
    # No (TM, E*B) tensor is ever materialized: the live intermediate is
    # capped at (TM, B*B) per group, which is what lets tm grow to 256-512 at
    # real ATLOP sizes (E=768, B=64).
    n_rows = h_act.shape[0]
    bsq = block_size * block_size
    num_groups = emb_size // block_size
    acc = jnp.zeros(logits_ref.shape, f32)                          # (TM, Cp)
    for g in range(num_groups):            # static python loop, small count
        h_g = h_e[:, g * block_size:(g + 1) * block_size]           # (TM, B)
        t_g = t_e[:, g * block_size:(g + 1) * block_size]           # (TM, B)
        bl_g = (h_g[:, :, None] * t_g[:, None, :]).reshape(n_rows, bsq)
        if not outer_in_md:
            bl_g = bl_g.astype(md)
        wbT_g = slab_ref[wb_row0 + g * bsq:wb_row0 + (g + 1) * bsq, :]
        acc = acc + jnp.dot(bl_g, wbT_g, preferred_element_type=f32)
    logits = acc + bb
    logits_ref[...] = logits

    # ---- ATLoss.get_label(logits, num_labels=-1), padded lanes masked out ----
    col = jax.lax.broadcasted_iota(jnp.int32, logits.shape, 1)
    valid = col < num_class
    th = logits[:, 0:1]
    pos = jnp.where(jnp.logical_and(logits > th, valid), 1.0, 0.0).astype(f32)
    no_pos = (jnp.sum(pos, axis=1, keepdims=True) == 0.0).astype(f32)
    pred_ref[...] = jnp.where(col == 0, no_pos, pos).astype(pred_ref.dtype)


def docre_head(hs, ts, rs, label_emb, params, *,
               emb_size=EMB, block_size=BLOCK, tau=TAU,
               tm=None, matmul_dtype=jnp.bfloat16, outer_in_matmul_dtype=None):
    """Trace-time algebraic folding / packing + gridded pallas_call.

    tm: entity-pair tile size.  With per-group accumulation and
    single-buffered constants, at real ATLOP sizes (hidden=768, emb=768,
    block=64) use tm ~ 256 on v7x (64 MiB VMEM per TensorCore; weights are
    replicated into both cores by the parallel pair axis) and tm ~ 512-1024 on
    v5e/v6e (128 MiB VMEM).  Defaults are picked per device when tm is None.
    """
    wq, bq, wk, bk, wv, bv, wh, bh, wt, bt, wb, bb = params
    f32 = jnp.float32
    md = matmul_dtype
    n = hs.shape[0]
    h = wq.shape[0]
    c = wb.shape[0]
    cpad = _round_up(c, LANE)
    ebk = emb_size * block_size

    kind = _device_kind()
    if tm is None:
        tm = 256 if "v7" in kind else 512
    if outer_in_matmul_dtype is None:
        # v2-v5 VPUs have no native bf16 ALU -> keep the outer product in f32.
        outer_in_matmul_dtype = not any(v in kind for v in ("v2", "v3", "v4", "v5"))

    # K/V of the constant label embedding hoisted out of the kernel; the Q
    # projection, the Q@K.T matmul and tau are folded into one (H, C) matrix.
    # (Valid because label_emb is fixed per call, as in the module's buffer.)
    K = label_emb.astype(f32) @ wk.T + bk                   # (C, H)
    V = label_emb.astype(f32) @ wv.T + bv                   # (C, H)
    wqk = tau * (wq.T @ K.T)                                # (H, C)
    sbias = tau * (bq @ K.T)                                # (C,)

    v_p = jnp.zeros((cpad, h), f32).at[:c, :].set(V)

    # Extractor weights split over the concat([x, z]) input; z-paths fused.
    whh = wh[:, :h].T                                       # (H, E)
    wtt = wt[:, :h].T                                       # (H, E)
    wz = jnp.concatenate([wh[:, h:].T, wt[:, h:].T], axis=1)     # (H, 2E)
    bz = jnp.concatenate([bh, bt])[None, :]                      # (1, 2E)

    # Pack the two big cpad-wide bf16 constants into one contiguous slab
    # (one DMA).  Biases live in a separate small f32 block (exact, and no
    # masked single-row reads of a bf16 (16,128)-tiled buffer).
    wb_row0 = _round_up(h, 32)                              # sublane-aligned slice
    slab_rows = wb_row0 + ebk
    slab = jnp.zeros((slab_rows, cpad), f32)
    slab = slab.at[:h, :c].set(wqk)
    slab = slab.at[wb_row0:, :c].set(wb.T)

    bias_blk = jnp.zeros((8, cpad), f32)
    bias_blk = bias_blk.at[0].set(
        jnp.full((cpad,), -1e30, f32).at[:c].set(sbias))    # mask padded lanes
    bias_blk = bias_blk.at[1, :c].set(bb)

    # Tile + pad the entity-pair dimension (padded rows are zeros, sliced off).
    # Round tm to the native sublane packing of the matmul dtype (16 for bf16).
    sub = 16 if jnp.dtype(md).itemsize <= 2 else 8
    tm_ = min(max(int(tm), sub), _round_up(n, sub))
    tm_ = _round_up(tm_, sub)
    npad = _round_up(n, tm_)
    pad_rows = npad - n

    def prep(x):
        x = x.astype(md)
        return jnp.pad(x, ((0, pad_rows), (0, 0))) if pad_rows else x

    hs_p, ts_p, rs_p = prep(hs), prep(ts), prep(rs)

    row_spec = pl.BlockSpec((tm_, h), lambda i: (i, 0))
    out_spec = pl.BlockSpec((tm_, cpad), lambda i: (i, 0))

    def const_spec(shape):
        # Constant index_map -> VMEM-resident; single-buffer (2nd pipeline
        # buffer would be pure VMEM waste, ~weights x2 at real sizes).
        return pl.BlockSpec(shape, lambda i: (0, 0), pipeline_mode=pl.Buffered(1))

    kernel = functools.partial(
        _docre_head_kernel, hidden=h, emb_size=emb_size,
        block_size=block_size, num_class=c, wb_row0=wb_row0,
        outer_in_md=bool(outer_in_matmul_dtype))

    # ---- VMEM budget (explicit vmem_limit_bytes; default scoped limits are
    # below the weight set at real ATLOP sizes, esp. on v5e's 16 MiB default).
    itemsize = jnp.dtype(md).itemsize
    const_bytes = ((slab_rows * cpad + cpad * h + 2 * h * emb_size
                    + h * 2 * emb_size + 2 * emb_size) * itemsize
                   + 8 * cpad * 4)
    io_bytes = 2 * 3 * tm_ * h * itemsize + 2 * tm_ * cpad * (4 + 2)
    interm_bytes = tm_ * (3 * cpad * 4 + 4 * emb_size * 4
                          + 2 * block_size * block_size * 4)
    budget = const_bytes + io_bytes + interm_bytes + (8 << 20)
    try:
        vmem_cap = int(pltpu.get_tpu_info().vmem_capacity_bytes)
    except Exception:
        vmem_cap = 64 << 20
    vmem_limit = int(min(0.85 * vmem_cap, max(32 << 20, budget)))

    # ---- advisory cost estimate for XLA's scheduler around the custom call.
    flops = (2 * npad * h * cpad            # folded Q/K scores
             + 2 * npad * cpad * h          # attn @ V
             + 2 * npad * h * 2 * emb_size  # fused z-path GEMM
             + 2 * 2 * npad * h * emb_size  # head/tail x-path GEMMs
             + npad * emb_size * block_size          # outer products
             + 2 * npad * emb_size * block_size * cpad)  # classifier GEMM
    transcendentals = npad * cpad + 2 * npad * emb_size + npad
    bytes_accessed = (3 * npad * h * itemsize + const_bytes
                      + npad * cpad * (4 + 2))

    logits_p, pred_p = pl.pallas_call(
        kernel,
        grid=(npad // tm_,),
        in_specs=[row_spec, row_spec, row_spec,
                  const_spec((slab_rows, cpad)),
                  const_spec((8, cpad)),
                  const_spec((cpad, h)),
                  const_spec((h, emb_size)),
                  const_spec((h, emb_size)),
                  const_spec((h, 2 * emb_size)),
                  const_spec((1, 2 * emb_size))],
        out_specs=(out_spec, out_spec),
        out_shape=(jax.ShapeDtypeStruct((npad, cpad), f32),
                   # pred is a 0/1 mask; bf16 is exact and halves writeback.
                   jax.ShapeDtypeStruct((npad, cpad), jnp.bfloat16)),
        compiler_params=pltpu.CompilerParams(
            # Parallel pair axis -> shards across v7x's two TensorCores;
            # harmless (single core) on v5e/v6e.
            dimension_semantics=("parallel",),
            vmem_limit_bytes=vmem_limit),
        cost_estimate=pl.CostEstimate(flops=int(flops),
                                      transcendentals=int(transcendentals),
                                      bytes_accessed=int(bytes_accessed)),
    )(hs_p, ts_p, rs_p, slab.astype(md), bias_blk, v_p.astype(md),
      whh.astype(md), wtt.astype(md), wz.astype(md), bz.astype(md))

    return logits_p[:n, :c], pred_p[:n, :c].astype(f32)


# ----------------------------------------------------------------------------
# Plain-JAX glue: get_hrt (data-dependent, host-side lists of entity mentions)
# ----------------------------------------------------------------------------
def get_hrt_jax(sequence_output, attention, entity_pos, hts, hidden, offset=1):
    n, h, _, c = attention.shape
    hss, tss, rss = [], [], []
    for i in range(len(entity_pos)):
        entity_embs, entity_atts = [], []
        for e in entity_pos[i]:
            if len(e) > 1:
                e_emb = [sequence_output[i, s + offset] for (s, _) in e if s + offset < c]
                e_att = [attention[i, :, s + offset] for (s, _) in e if s + offset < c]
                if len(e_emb) > 0:
                    emb = jax.nn.logsumexp(jnp.stack(e_emb, 0), axis=0)
                    att = jnp.stack(e_att, 0).mean(0)
                else:
                    emb = jnp.zeros((hidden,), sequence_output.dtype)
                    att = jnp.zeros((h, c), attention.dtype)
            else:
                s, _ = e[0]
                if s + offset < c:
                    emb = sequence_output[i, s + offset]
                    att = attention[i, :, s + offset]
                else:
                    emb = jnp.zeros((hidden,), sequence_output.dtype)
                    att = jnp.zeros((h, c), attention.dtype)
            entity_embs.append(emb)
            entity_atts.append(att)
        entity_embs = jnp.stack(entity_embs, 0)
        entity_atts = jnp.stack(entity_atts, 0)
        ht_i = jnp.asarray(hts[i], dtype=jnp.int32)
        hs = entity_embs[ht_i[:, 0]]
        ts = entity_embs[ht_i[:, 1]]
        h_att = entity_atts[ht_i[:, 0]]
        t_att = entity_atts[ht_i[:, 1]]
        ht_att = (h_att * t_att).mean(1)
        ht_att = ht_att / (ht_att.sum(1, keepdims=True) + 1e-5)
        rs = jnp.einsum('ld,rl->rd', sequence_output[i], ht_att)
        hss.append(hs)
        tss.append(ts)
        rss.append(rs)
    return (jnp.concatenate(hss, 0), jnp.concatenate(rss, 0),
            jnp.concatenate(tss, 0))


# ----------------------------------------------------------------------------
# Deterministic parameter init (matches nn.Linear shapes from __init__)
# ----------------------------------------------------------------------------
def _linear_init(key, out_dim, in_dim):
    kw, kb = jax.random.split(key)
    bound = 1.0 / (in_dim ** 0.5)
    w = jax.random.uniform(kw, (out_dim, in_dim), jnp.float32, -bound, bound)
    b = jax.random.uniform(kb, (out_dim,), jnp.float32, -bound, bound)
    return w, b


def init_params(key):
    ks = jax.random.split(key, 6)
    wq, bq = _linear_init(ks[0], HIDDEN, HIDDEN)          # label_attentive.layerQ
    wk, bk = _linear_init(ks[1], HIDDEN, NUM_CLASS)       # label_attentive.layerK
    wv, bv = _linear_init(ks[2], HIDDEN, NUM_CLASS)       # label_attentive.layerV
    wh, bh = _linear_init(ks[3], EMB, 2 * HIDDEN)         # head_extractor
    wt, bt = _linear_init(ks[4], EMB, 2 * HIDDEN)         # tail_extractor
    wb, bb = _linear_init(ks[5], NUM_CLASS, EMB * BLOCK)  # bilinear
    return (wq, bq, wk, bk, wv, bv, wh, bh, wt, bt, wb, bb)


# ----------------------------------------------------------------------------
# Pure-JAX (f32) reference for validation
# ----------------------------------------------------------------------------
def reference_head(hs, ts, rs, label_oh, params, tau=TAU):
    wq, bq, wk, bk, wv, bv, wh, bh, wt, bt, wb, bb = params
    q = rs @ wq.T + bq
    k = label_oh @ wk.T + bk
    v = label_oh @ wv.T + bv
    attn = jax.nn.softmax((q @ k.T) * tau, axis=1)
    z = attn @ v
    h_e = jnp.tanh(jnp.concatenate([hs, z], 1) @ wh.T + bh)
    t_e = jnp.tanh(jnp.concatenate([ts, z], 1) @ wt.T + bt)
    n = h_e.shape[0]
    g = EMB // BLOCK
    b1 = h_e.reshape(n, g, BLOCK)
    b2 = t_e.reshape(n, g, BLOCK)
    bl = (b1[:, :, :, None] * b2[:, :, None, :]).reshape(n, EMB * BLOCK)
    return bl @ wb.T + bb


def get_label_ref(logits):
    th = logits[:, 0:1]
    out = jnp.where(logits > th, 1.0, 0.0)
    out = out.at[:, 0].set((out.sum(1) == 0.0).astype(logits.dtype))
    return out


if __name__ == "__main__":
    key = jax.random.PRNGKey(0)
    keys = jax.random.split(key, 4)

    # Synthetic encoder outputs (replaces BERT / process_long_input).
    batch, heads, seq = 2, 2, 12
    sequence_output = jax.random.normal(keys[0], (batch, seq, HIDDEN), jnp.float32)
    attention = jax.random.uniform(keys[1], (batch, heads, seq, seq), jnp.float32)

    # Host-side entity mention spans and head/tail pair indices.
    # 4 entities per doc, all 12 ordered pairs -> 24 pairs total, so the
    # padded pair axis (32) runs 2 pipelined grid steps even at toy tm=16.
    entity_pos = [
        [[(0, 2)], [(3, 5), (7, 8)], [(9, 10)], [(6, 7)]],
        [[(1, 2)], [(4, 6)], [(8, 9), (10, 11)], [(5, 6)]],
    ]
    pairs4 = [[i, j] for i in range(4) for j in range(4) if i != j]
    hts = [pairs4, pairs4]

    hs, rs, ts = get_hrt_jax(sequence_output, attention, entity_pos, hts,
                             HIDDEN, offset=1)
    label_oh = jnp.eye(NUM_CLASS, dtype=jnp.float32)   # F.one_hot(range(num_labels))
    params = init_params(keys[2])

    logits, pred = docre_head(hs, ts, rs, label_oh, params, tm=16,
                              matmul_dtype=jnp.bfloat16)
    logits, pred = jax.block_until_ready((logits, pred))

    n_pairs = sum(len(x) for x in hts)
    assert logits.shape == (n_pairs, NUM_CLASS) and pred.shape == (n_pairs, NUM_CLASS)

    ref_logits = reference_head(hs, ts, rs, label_oh, params)
    # bf16 matmul operands with f32 accumulation -> bf16-level tolerance.
    assert jnp.allclose(logits, ref_logits, rtol=5e-2, atol=5e-2), "logits mismatch"
    # Thresholding must be exactly self-consistent with the returned logits.
    assert jnp.allclose(pred, get_label_ref(logits)), "get_label mismatch"

    print("KERNEL_OK")
</pallas_src>

<mosaic_0001>
module attributes {stable_mosaic.version = 11 : i64} {
  func.func @_docre_head_kernel(%arg0: i32, %arg1: memref<16x32xbf16, #tpu.memory_space<vmem>>, %arg2: memref<16x32xbf16, #tpu.memory_space<vmem>>, %arg3: memref<16x32xbf16, #tpu.memory_space<vmem>>, %arg4: memref<1056x128xbf16, #tpu.memory_space<vmem>>, %arg5: memref<8x128xf32, #tpu.memory_space<vmem>>, %arg6: memref<128x32xbf16, #tpu.memory_space<vmem>>, %arg7: memref<32x64xbf16, #tpu.memory_space<vmem>>, %arg8: memref<32x64xbf16, #tpu.memory_space<vmem>>, %arg9: memref<32x128xbf16, #tpu.memory_space<vmem>>, %arg10: memref<1x128xbf16, #tpu.memory_space<vmem>>, %arg11: memref<16x128xf32, #tpu.memory_space<vmem>>, %arg12: memref<16x128xbf16, #tpu.memory_space<vmem>>) attributes {dimension_semantics = [#tpu.dimension_semantics<parallel>], iteration_bounds = array<i64: 2>, scalar_prefetch = 0 : i64, scratch_operands = 0 : i64, tpu.core_type = #tpu.core_type<tc>, window_params = [{transform_indices = @transform_0, window_bounds = array<i64: 16, 32>}, {transform_indices = @transform_1, window_bounds = array<i64: 16, 32>}, {transform_indices = @transform_2, window_bounds = array<i64: 16, 32>}, {pipeline_mode = #tpu.pipeline_mode<synchronous>, transform_indices = @transform_3, window_bounds = array<i64: 1056, 128>}, {pipeline_mode = #tpu.pipeline_mode<synchronous>, transform_indices = @transform_4, window_bounds = array<i64: 8, 128>}, {pipeline_mode = #tpu.pipeline_mode<synchronous>, transform_indices = @transform_5, window_bounds = array<i64: 128, 32>}, {pipeline_mode = #tpu.pipeline_mode<synchronous>, transform_indices = @transform_6, window_bounds = array<i64: 32, 64>}, {pipeline_mode = #tpu.pipeline_mode<synchronous>, transform_indices = @transform_7, window_bounds = array<i64: 32, 64>}, {pipeline_mode = #tpu.pipeline_mode<synchronous>, transform_indices = @transform_8, window_bounds = array<i64: 32, 128>}, {pipeline_mode = #tpu.pipeline_mode<synchronous>, transform_indices = @transform_9, window_bounds = array<i64: 1, 128>}, {transform_indices = @transform_10, window_bounds = array<i64: 16, 128>}, {transform_indices = @transform_11, window_bounds = array<i64: 16, 128>}]} {
    %c0 = arith.constant 0 : index
    %c0_0 = arith.constant 0 : index
    %0 = vector.load %arg1[%c0, %c0_0] : memref<16x32xbf16, #tpu.memory_space<vmem>>, vector<16x32xbf16>
    %c0_1 = arith.constant 0 : index
    %c0_2 = arith.constant 0 : index
    %1 = vector.load %arg2[%c0_1, %c0_2] : memref<16x32xbf16, #tpu.memory_space<vmem>>, vector<16x32xbf16>
    %c0_3 = arith.constant 0 : index
    %c0_4 = arith.constant 0 : index
    %2 = vector.load %arg3[%c0_3, %c0_4] : memref<16x32xbf16, #tpu.memory_space<vmem>>, vector<16x32xbf16>
    %c0_5 = arith.constant 0 : index
    %c0_6 = arith.constant 0 : index
    %3 = vector.load %arg4[%c0_5, %c0_6] : memref<1056x128xbf16, #tpu.memory_space<vmem>>, vector<32x128xbf16>
    %c0_7 = arith.constant 0 : index
    %c0_8 = arith.constant 0 : index
    %4 = vector.load %arg5[%c0_7, %c0_8] : memref<8x128xf32, #tpu.memory_space<vmem>>, vector<1x128xf32>
    %c1 = arith.constant 1 : index
    %c0_9 = arith.constant 0 : index
    %5 = vector.load %arg5[%c1, %c0_9] : memref<8x128xf32, #tpu.memory_space<vmem>>, vector<1x128xf32>
    %cst = arith.constant dense<0.000000e+00> : vector<16x128xf32>
    %6 = tpu.matmul %2, %3, %cst {dimension_numbers = #tpu.dot_dimension_numbers<[1], [0], [0], [1], [0, 0, 1, 1], [], []>} : vector<16x32xbf16>, vector<32x128xbf16>, vector<16x128xf32> -> vector<16x128xf32>
    %7 = vector.broadcast %4 : vector<1x128xf32> to vector<16x128xf32>
    %8 = arith.addf %6, %7 : vector<16x128xf32>
    %cst_10 = arith.constant dense<0xFF800000> : vector<16xf32>
    %9 = vector.multi_reduction <maximumf>, %8, %cst_10 [1] : vector<16x128xf32> to vector<16xf32>
    %10 = vector.shape_cast %9 : vector<16xf32> to vector<16x1xf32>
    %11 = vector.broadcast %10 : vector<16x1xf32> to vector<16x128xf32>
    %12 = arith.subf %8, %11 : vector<16x128xf32>
    %13 = math.exp %12 : vector<16x128xf32>
    %cst_11 = arith.constant dense<0.000000e+00> : vector<16xf32>
    %14 = vector.multi_reduction <add>, %13, %cst_11 [1] : vector<16x128xf32> to vector<16xf32>
    %15 = vector.shape_cast %14 : vector<16xf32> to vector<16x1xf32>
    %16 = tpu.reciprocal %15 {approx = true} : vector<16x1xf32> -> vector<16x1xf32>
    %17 = vector.broadcast %16 : vector<16x1xf32> to vector<16x128xf32>
    %18 = arith.mulf %13, %17 : vector<16x128xf32>
    %19 = arith.truncf %18 : vector<16x128xf32> to vector<16x128xbf16>
    %c0_12 = arith.constant 0 : index
    %c0_13 = arith.constant 0 : index
    %20 = vector.load %arg6[%c0_12, %c0_13] : memref<128x32xbf16, #tpu.memory_space<vmem>>, vector<128x32xbf16>
    %cst_14 = arith.constant dense<0.000000e+00> : vector<16x32xf32>
    %21 = tpu.matmul %19, %20, %cst_14 {dimension_numbers = #tpu.dot_dimension_numbers<[1], [0], [0], [1], [0, 0, 1, 1], [], []>} : vector<16x128xbf16>, vector<128x32xbf16>, vector<16x32xf32> -> vector<16x32xf32>
    %22 = arith.truncf %21 : vector<16x32xf32> to vector<16x32xbf16>
    %c0_15 = arith.constant 0 : index
    %c0_16 = arith.constant 0 : index
    %23 = vector.load %arg9[%c0_15, %c0_16] : memref<32x128xbf16, #tpu.memory_space<vmem>>, vector<32x128xbf16>
    %cst_17 = arith.constant dense<0.000000e+00> : vector<16x128xf32>
    %24 = tpu.matmul %22, %23, %cst_17 {dimension_numbers = #tpu.dot_dimension_numbers<[1], [0], [0], [1], [0, 0, 1, 1], [], []>} : vector<16x32xbf16>, vector<32x128xbf16>, vector<16x128xf32> -> vector<16x128xf32>
    %c0_18 = arith.constant 0 : index
    %c0_19 = arith.constant 0 : index
    %25 = vector.load %arg10[%c0_18, %c0_19] : memref<1x128xbf16, #tpu.memory_space<vmem>>, vector<1x128xbf16>
    %26 = arith.extf %25 : vector<1x128xbf16> to vector<1x128xf32>
    %27 = vector.broadcast %26 : vector<1x128xf32> to vector<16x128xf32>
    %28 = arith.addf %24, %27 : vector<16x128xf32>
    %c0_20 = arith.constant 0 : index
    %c0_21 = arith.constant 0 : index
    %29 = vector.load %arg7[%c0_20, %c0_21] : memref<32x64xbf16, #tpu.memory_space<vmem>>, vector<32x64xbf16>
    %cst_22 = arith.constant dense<0.000000e+00> : vector<16x64xf32>
    %30 = tpu.matmul %0, %29, %cst_22 {dimension_numbers = #tpu.dot_dimension_numbers<[1], [0], [0], [1], [0, 0, 1, 1], [], []>} : vector<16x32xbf16>, vector<32x64xbf16>, vector<16x64xf32> -> vector<16x64xf32>
    %31 = vector.extract_strided_slice %28 {offsets = [0, 0], sizes = [16, 64], strides = [1, 1]} : vector<16x128xf32> to vector<16x64xf32>
    %32 = arith.addf %30, %31 : vector<16x64xf32>
    %33 = math.tanh %32 : vector<16x64xf32>
    %c0_23 = arith.constant 0 : index
    %c0_24 = arith.constant 0 : index
    %34 = vector.load %arg8[%c0_23, %c0_24] : memref<32x64xbf16, #tpu.memory_space<vmem>>, vector<32x64xbf16>
    %cst_25 = arith.constant dense<0.000000e+00> : vector<16x64xf32>
    %35 = tpu.matmul %1, %34, %cst_25 {dimension_numbers = #tpu.dot_dimension_numbers<[1], [0], [0], [1], [0, 0, 1, 1], [], []>} : vector<16x32xbf16>, vector<32x64xbf16>, vector<16x64xf32> -> vector<16x64xf32>
    %36 = vector.extract_strided_slice %28 {offsets = [0, 64], sizes = [16, 64], strides = [1, 1]} : vector<16x128xf32> to vector<16x64xf32>
    %37 = arith.addf %35, %36 : vector<16x64xf32>
    %38 = math.tanh %37 : vector<16x64xf32>
    %39 = arith.truncf %33 : vector<16x64xf32> to vector<16x64xbf16>
    %40 = arith.truncf %38 : vector<16x64xf32> to vector<16x64xbf16>
    %cst_26 = arith.constant 0.000000e+00 : f32
    %41 = vector.broadcast %cst_26 : f32 to vector<16x128xf32>
    %42 = vector.extract_strided_slice %39 {offsets = [0, 0], sizes = [16, 16], strides = [1, 1]} : vector<16x64xbf16> to vector<16x16xbf16>
    %43 = vector.extract_strided_slice %40 {offsets = [0, 0], sizes = [16, 16], strides = [1, 1]} : vector<16x64xbf16> to vector<16x16xbf16>
    %44 = vector.shape_cast %42 : vector<16x16xbf16> to vector<16x16x1xbf16>
    %45 = vector.shape_cast %43 : vector<16x16xbf16> to vector<16x1x16xbf16>
    %46 = vector.broadcast %44 : vector<16x16x1xbf16> to vector<16x16x16xbf16>
    %47 = vector.broadcast %45 : vector<16x1x16xbf16> to vector<16x16x16xbf16>
    %48 = arith.mulf %46, %47 : vector<16x16x16xbf16>
    %49 = vector.shape_cast %48 : vector<16x16x16xbf16> to vector<16x256xbf16>
    %c32 = arith.constant 32 : index
    %c0_27 = arith.constant 0 : index
    %50 = vector.load %arg4[%c32, %c0_27] : memref<1056x128xbf16, #tpu.memory_space<vmem>>, vector<256x128xbf16>
    %cst_28 = arith.constant dense<0.000000e+00> : vector<16x128xf32>
    %51 = tpu.matmul %49, %50, %cst_28 {dimension_numbers = #tpu.dot_dimension_numbers<[1], [0], [0], [1], [0, 0, 1, 1], [], []>} : vector<16x256xbf16>, vector<256x128xbf16>, vector<16x128xf32> -> vector<16x128xf32>
    %52 = arith.addf %41, %51 : vector<16x128xf32>
    %53 = vector.extract_strided_slice %39 {offsets = [0, 16], sizes = [16, 16], strides = [1, 1]} : vector<16x64xbf16> to vector<16x16xbf16>
    %54 = vector.extract_strided_slice %40 {offsets = [0, 16], sizes = [16, 16], strides = [1, 1]} : vector<16x64xbf16> to vector<16x16xbf16>
    %55 = vector.shape_cast %53 : vector<16x16xbf16> to vector<16x16x1xbf16>
    %56 = vector.shape_cast %54 : vector<16x16xbf16> to vector<16x1x16xbf16>
    %57 = vector.broadcast %55 : vector<16x16x1xbf16> to vector<16x16x16xbf16>
    %58 = vector.broadcast %56 : vector<16x1x16xbf16> to vector<16x16x16xbf16>
    %59 = arith.mulf %57, %58 : vector<16x16x16xbf16>
    %60 = vector.shape_cast %59 : vector<16x16x16xbf16> to vector<16x256xbf16>
    %c288 = arith.constant 288 : index
    %c0_29 = arith.constant 0 : index
    %61 = vector.load %arg4[%c288, %c0_29] : memref<1056x128xbf16, #tpu.memory_space<vmem>>, vector<256x128xbf16>
    %cst_30 = arith.constant dense<0.000000e+00> : vector<16x128xf32>
    %62 = tpu.matmul %60, %61, %cst_30 {dimension_numbers = #tpu.dot_dimension_numbers<[1], [0], [0], [1], [0, 0, 1, 1], [], []>} : vector<16x256xbf16>, vector<256x128xbf16>, vector<16x128xf32> -> vector<16x128xf32>
    %63 = arith.addf %52, %62 : vector<16x128xf32>
    %64 = vector.extract_strided_slice %39 {offsets = [0, 32], sizes = [16, 16], strides = [1, 1]} : vector<16x64xbf16> to vector<16x16xbf16>
    %65 = vector.extract_strided_slice %40 {offsets = [0, 32], sizes = [16, 16], strides = [1, 1]} : vector<16x64xbf16> to vector<16x16xbf16>
    %66 = vector.shape_cast %64 : vector<16x16xbf16> to vector<16x16x1xbf16>
    %67 = vector.shape_cast %65 : vector<16x16xbf16> to vector<16x1x16xbf16>
    %68 = vector.broadcast %66 : vector<16x16x1xbf16> to vector<16x16x16xbf16>
    %69 = vector.broadcast %67 : vector<16x1x16xbf16> to vector<16x16x16xbf16>
    %70 = arith.mulf %68, %69 : vector<16x16x16xbf16>
    %71 = vector.shape_cast %70 : vector<16x16x16xbf16> to vector<16x256xbf16>
    %c544 = arith.constant 544 : index
    %c0_31 = arith.constant 0 : index
    %72 = vector.load %arg4[%c544, %c0_31] : memref<1056x128xbf16, #tpu.memory_space<vmem>>, vector<256x128xbf16>
    %cst_32 = arith.constant dense<0.000000e+00> : vector<16x128xf32>
    %73 = tpu.matmul %71, %72, %cst_32 {dimension_numbers = #tpu.dot_dimension_numbers<[1], [0], [0], [1], [0, 0, 1, 1], [], []>} : vector<16x256xbf16>, vector<256x128xbf16>, vector<16x128xf32> -> vector<16x128xf32>
    %74 = arith.addf %63, %73 : vector<16x128xf32>
    %75 = vector.extract_strided_slice %39 {offsets = [0, 48], sizes = [16, 16], strides = [1, 1]} : vector<16x64xbf16> to vector<16x16xbf16>
    %76 = vector.extract_strided_slice %40 {offsets = [0, 48], sizes = [16, 16], strides = [1, 1]} : vector<16x64xbf16> to vector<16x16xbf16>
    %77 = vector.shape_cast %75 : vector<16x16xbf16> to vector<16x16x1xbf16>
    %78 = vector.shape_cast %76 : vector<16x16xbf16> to vector<16x1x16xbf16>
    %79 = vector.broadcast %77 : vector<16x16x1xbf16> to vector<16x16x16xbf16>
    %80 = vector.broadcast %78 : vector<16x1x16xbf16> to vector<16x16x16xbf16>
    %81 = arith.mulf %79, %80 : vector<16x16x16xbf16>
    %82 = vector.shape_cast %81 : vector<16x16x16xbf16> to vector<16x256xbf16>
    %c800 = arith.constant 800 : index
    %c0_33 = arith.constant 0 : index
    %83 = vector.load %arg4[%c800, %c0_33] : memref<1056x128xbf16, #tpu.memory_space<vmem>>, vector<256x128xbf16>
    %cst_34 = arith.constant dense<0.000000e+00> : vector<16x128xf32>
    %84 = tpu.matmul %82, %83, %cst_34 {dimension_numbers = #tpu.dot_dimension_numbers<[1], [0], [0], [1], [0, 0, 1, 1], [], []>} : vector<16x256xbf16>, vector<256x128xbf16>, vector<16x128xf32> -> vector<16x128xf32>
    %85 = arith.addf %74, %84 : vector<16x128xf32>
    %86 = vector.broadcast %5 : vector<1x128xf32> to vector<16x128xf32>
    %87 = arith.addf %85, %86 : vector<16x128xf32>
    %c0_35 = arith.constant 0 : index
    %c0_36 = arith.constant 0 : index
    %88 = vector.load %arg11[%c0_35, %c0_36] : memref<16x128xf32, #tpu.memory_space<vmem>>, vector<16x128xf32>
    tpu.vector_store %arg11[%c0_35, %c0_36], %87 {strides = array<i32>} : memref<16x128xf32, #tpu.memory_space<vmem>>, vector<16x128xf32>,
    %89 = tpu.iota {dimensions = array<i32: 1>} : vector<16x128xi32>
    %c8_i32 = arith.constant 8 : i32
    %90 = vector.broadcast %c8_i32 : i32 to vector<16x128xi32>
    %91 = arith.cmpi slt, %89, %90 : vector<16x128xi32>
    %92 = vector.extract_strided_slice %87 {offsets = [0, 0], sizes = [16, 1], strides = [1, 1]} : vector<16x128xf32> to vector<16x1xf32>
    %93 = vector.broadcast %92 : vector<16x1xf32> to vector<16x128xf32>
    %94 = arith.cmpf ogt, %87, %93 : vector<16x128xf32>
    %95 = arith.andi %94, %91 : vector<16x128xi1>
    %cst_37 = arith.constant 1.000000e+00 : f32
    %cst_38 = arith.constant 0.000000e+00 : f32
    %96 = vector.broadcast %cst_37 : f32 to vector<16x128xf32>
    %97 = vector.broadcast %cst_38 : f32 to vector<16x128xf32>
    %98 = arith.select %95, %96, %97 : vector<16x128xi1>, vector<16x128xf32>
    %cst_39 = arith.constant dense<0.000000e+00> : vector<16xf32>
    %99 = vector.multi_reduction <add>, %98, %cst_39 [1] : vector<16x128xf32> to vector<16xf32>
    %100 = vector.shape_cast %99 : vector<16xf32> to vector<16x1xf32>
    %cst_40 = arith.constant 0.000000e+00 : f32
    %101 = vector.broadcast %cst_40 : f32 to vector<16x1xf32>
    %102 = arith.cmpf oeq, %100, %101 : vector<16x1xf32>
    %103 = arith.extui %102 : vector<16x1xi1> to vector<16x1xi32>
    %104 = arith.sitofp %103 : vector<16x1xi32> to vector<16x1xf32>
    %c0_i32 = arith.constant 0 : i32
    %105 = vector.broadcast %c0_i32 : i32 to vector<16x128xi32>
    %106 = arith.cmpi eq, %89, %105 : vector<16x128xi32>
    %107 = vector.shape_cast %104 : vector<16x1xf32> to vector<16x1xf32>
    %108 = vector.broadcast %107 : vector<16x1xf32> to vector<16x128xf32>
    %109 = arith.select %106, %108, %98 : vector<16x128xi1>, vector<16x128xf32>
    %110 = arith.truncf %109 : vector<16x128xf32> to vector<16x128xbf16>
    %c0_41 = arith.constant 0 : index
    %c0_42 = arith.constant 0 : index
    %111 = vector.load %arg12[%c0_41, %c0_42] : memref<16x128xbf16, #tpu.memory_space<vmem>>, vector<16x128xbf16>
    tpu.vector_store %arg12[%c0_41, %c0_42], %110 {strides = array<i32>} : memref<16x128xbf16, #tpu.memory_space<vmem>>, vector<16x128xbf16>,
    return
  }
  func.func @transform_0(%arg0: i32) -> (i32, i32) {
    %c0_i32 = arith.constant 0 : i32
    %c0_i32_0 = arith.constant 0 : i32
    return %arg0, %c0_i32 : i32, i32
  }
  func.func @transform_1(%arg0: i32) -> (i32, i32) {
    %c0_i32 = arith.constant 0 : i32
    %c0_i32_0 = arith.constant 0 : i32
    return %arg0, %c0_i32 : i32, i32
  }
  func.func @transform_2(%arg0: i32) -> (i32, i32) {
    %c0_i32 = arith.constant 0 : i32
    %c0_i32_0 = arith.constant 0 : i32
    return %arg0, %c0_i32 : i32, i32
  }
  func.func @transform_3(%arg0: i32) -> (i32, i32) {
    %c0_i32 = arith.constant 0 : i32
    %c0_i32_0 = arith.constant 0 : i32
    %c0_i32_1 = arith.constant 0 : i32
    return %c0_i32, %c0_i32_0 : i32, i32
  }
  func.func @transform_4(%arg0: i32) -> (i32, i32) {
    %c0_i32 = arith.constant 0 : i32
    %c0_i32_0 = arith.constant 0 : i32
    %c0_i32_1 = arith.constant 0 : i32
    return %c0_i32, %c0_i32_0 : i32, i32
  }
  func.func @transform_5(%arg0: i32) -> (i32, i32) {
    %c0_i32 = arith.constant 0 : i32
    %c0_i32_0 = arith.constant 0 : i32
    %c0_i32_1 = arith.constant 0 : i32
    return %c0_i32, %c0_i32_0 : i32, i32
  }
  func.func @transform_6(%arg0: i32) -> (i32, i32) {
    %c0_i32 = arith.constant 0 : i32
    %c0_i32_0 = arith.constant 0 : i32
    %c0_i32_1 = arith.constant 0 : i32
    return %c0_i32, %c0_i32_0 : i32, i32
  }
  func.func @transform_7(%arg0: i32) -> (i32, i32) {
    %c0_i32 = arith.constant 0 : i32
    %c0_i32_0 = arith.constant 0 : i32
    %c0_i32_1 = arith.constant 0 : i32
    return %c0_i32, %c0_i32_0 : i32, i32
  }
  func.func @transform_8(%arg0: i32) -> (i32, i32) {
    %c0_i32 = arith.constant 0 : i32
    %c0_i32_0 = arith.constant 0 : i32
    %c0_i32_1 = arith.constant 0 : i32
    return %c0_i32, %c0_i32_0 : i32, i32
  }
  func.func @transform_9(%arg0: i32) -> (i32, i32) {
    %c0_i32 = arith.constant 0 : i32
    %c0_i32_0 = arith.constant 0 : i32
    %c0_i32_1 = arith.constant 0 : i32
    return %c0_i32, %c0_i32_0 : i32, i32
  }
  func.func @transform_10(%arg0: i32) -> (i32, i32) {
    %c0_i32 = arith.constant 0 : i32
    %c0_i32_0 = arith.constant 0 : i32
    return %arg0, %c0_i32 : i32, i32
  }
  func.func @transform_11(%arg0: i32) -> (i32, i32) {
    %c0_i32 = arith.constant 0 : i32
    %c0_i32_0 = arith.constant 0 : i32
    return %arg0, %c0_i32 : i32, i32
  }
}

</mosaic_0001>

<llo_original>
// kernel: tpu_custom_call.1
$region0: #{tpu_custom_call.1}
  #allocation0 [shape = 'u32[]', space=smem, size = 0x4, offset = 0x4, fixed_abs, tag = 'smem constant byte address 0x4 - core index']
  #allocation1 [shape = 'u32[144,128]{1,0:T(1,128)}', space=vmem, size = 0x12000, scoped, tag = 'internal scratch']
  %s0 = inlined_call_operand.vmem [shape: bf16[32,32], index: 0, kind: input, shape index: {}]
  %s1 = inlined_call_operand.vmem [shape: bf16[32,32], index: 1, kind: input, shape index: {}]
  %s2 = inlined_call_operand.vmem [shape: bf16[32,32], index: 2, kind: input, shape index: {}]
  %s3 = inlined_call_operand.hbm [shape: bf16[1056,128], index: 3, kind: input, shape index: {}]
  %s4 = inlined_call_operand.hbm [shape: f32[8,128], index: 4, kind: input, shape index: {}]
  %s5 = inlined_call_operand.vmem [shape: bf16[128,32], index: 5, kind: input, shape index: {}]
  %s6 = inlined_call_operand.vmem [shape: bf16[32,64], index: 6, kind: input, shape index: {}]
  %s7 = inlined_call_operand.vmem [shape: bf16[32,64], index: 7, kind: input, shape index: {}]
  %s8 = inlined_call_operand.hbm [shape: bf16[32,128], index: 8, kind: input, shape index: {}]
  %s9 = inlined_call_operand.vmem [shape: bf16[1,128], index: 9, kind: input, shape index: {}]
  %s10 = inlined_call_operand.hbm [shape: f32[32,128], index: 10, kind: output, shape index: {0}]
  %s11 = inlined_call_operand.hbm [shape: bf16[32,128], index: 11, kind: output, shape index: {1}]
  %12 = xla_tuple %s10, %s11
  %s13 = sld [smem:[#allocation0]]
  $region93: #{tpu_custom_call.1} parent=0
    _
  %s15 = ssub.s32 1, %s13
  %s16 = scalar_select 0, %s15, %s13
  $region1: #{tpu_custom_call.1} parent=0
    #allocation2 [shape = 'u8[270336]{0}', space=vmem, size = 0x42000, scoped, tag = 'input window, operand 3, single buffered']
    #allocation3 [shape = 's32[2]{0}', space=sflag, size = 0x8, scoped, tag = 'scoped memory for tpu_custom_call.1']
    #allocation4 [shape = 's32[2]{0}', space=sflag, size = 0x8, scoped, tag = 'scoped memory for tpu_custom_call.1']
    #allocation5 [shape = 'u8[4096]{0}', space=vmem, size = 0x1000, scoped, tag = 'input window, operand 4, single buffered']
    #allocation6 [shape = 's32[1]{0}', space=sflag, size = 0x4, scoped, tag = 'scoped memory for tpu_custom_call.1']
    #allocation7 [shape = 'u8[8192]{0}', space=vmem, size = 0x2000, scoped, tag = 'input window, operand 8, single buffered']
    #allocation8 [shape = 'u8[16384]{0}', space=vmem, size = 0x4000, scoped, tag = 'output window, operand 0']
    #allocation9 [shape = 'u8[8192]{0}', space=vmem, size = 0x2000, scoped, tag = 'output window, operand 1']
    #allocation10 [shape = 's32[2]{0}', space=sflag, size = 0x8, scoped, tag = 'scoped memory for tpu_custom_call.1']
    %17 = vsyncpa [#allocation3], 0
    %18 = vsyncpa [#allocation6], 0
    %19 = vsyncpa [#allocation4], 0
    %s20 = scalar_lea.sflag [#allocation4], 1
    %21 = vsyncpa %s20, 0
    %22 = vsyncpa [#allocation10], 0
    %s23 = scalar_lea.sflag [#allocation10], 1
    %24 = vsyncpa %s23, 0
    loop: start=0, step=1, limit=4
    $region2: #{tpu_custom_call.1} parent=1 // loop_pre_header
      _
    $region3: #{tpu_custom_call.1} parent=1 // loop_header
      %s26 = sphi 0, %s30
      %p27 = scmp.ge.s32.totalorder %s26, 4
      %s36 = sphi 0, %s38
      %s39 = sphi 0, %s36
      %s40 = sphi 0, %s39
      %s56 = sphi 0, %s40
      %s62 = sphi 0, %s64
      %s65 = sphi 0, %s62
      %s66 = sphi 0, %s65
      %s82 = sphi 0, %s66
      %s88 = sphi 0, %s90
      %s91 = sphi 0, %s88
      %s92 = sphi 0, %s91
      %s108 = sphi 0, %s92
      %s112 = sphi 0, %s112
      %s114 = sphi 0, %s112
      %s115 = sphi 0, %s114
      %s129 = sphi 0, %s115
      %s133 = sphi 0, %s133
      %s135 = sphi 0, %s133
      %s136 = sphi 0, %s135
      %s150 = sphi 0, %s136
      %s154 = sphi 0, %s154
      %s156 = sphi 0, %s154
      %s157 = sphi 0, %s156
      %s171 = sphi 0, %s157
      %s175 = sphi 0, %s175
      %s177 = sphi 0, %s175
      %s178 = sphi 0, %s177
      %s192 = sphi 0, %s178
      %s196 = sphi 0, %s196
      %s198 = sphi 0, %s196
      %s199 = sphi 0, %s198
      %s213 = sphi 0, %s199
      %s217 = sphi 0, %s217
      %s219 = sphi 0, %s217
      %s220 = sphi 0, %s219
      %s234 = sphi 0, %s220
      %s238 = sphi 0, %s238
      %s240 = sphi 0, %s238
      %s241 = sphi 0, %s240
      %s255 = sphi 0, %s241
      %s261 = sphi 0, %s263
      %s264 = sphi 0, %s261
      %s265 = sphi 0, %s264
      %s281 = sphi 0, %s265
      %s287 = sphi 0, %s289
      %s290 = sphi 0, %s287
      %s291 = sphi 0, %s290
      %s307 = sphi 0, %s291
    $region4: #{tpu_custom_call.1} parent=1 // loop_header_branch
      %29 = sbr.rel (%p27) target = $region8
    $region5: #{tpu_custom_call.1} parent=1 // loop_body
      %s31 = ssub.s32 %s26, 1
      %s32 = ssub.s32 %s26, 2
      %s33 = sadd.s32 %s26, 1
      %s34 = ssub.s32 %s26, %s33
      %p35 = scmp.eq.s32.totalorder %s34, 0
      %s37 = sadd.s32 %s36, 1
      %s38 = scalar_select %p35, %s36, %s37
      %p41 = pneg %p35
      %p42 = scmp.eq.s32.totalorder %s26, 1
      %p43 = por %p41, %p42
      %p44 = scmp.ne.s32.totalorder %s36, %s39
      %p45 = scmp.eq.s32.totalorder %s26, 0
      %p46 = por %p44, %p45
      %p47 = scmp.ne.s32.totalorder %s36, %s39
      %p48 = scmp.eq.s32.totalorder %s31, 1
      %p49 = por %p47, %p48
      %p50 = scmp.ne.s32.totalorder %s39, %s40
      %p51 = scmp.eq.s32.totalorder %s31, 0
      %p52 = por %p50, %p51
      %p53 = scmp.ne.s32.totalorder %s39, %s40
      %p54 = scmp.eq.s32.totalorder %s32, 1
      %p55 = por %p53, %p54
      %p57 = scmp.ne.s32.totalorder %s40, %s56
      %p58 = scmp.eq.s32.totalorder %s32, 0
      %p59 = por %p57, %p58
      %s60 = ssub.s32 %s26, %s33
      %p61 = scmp.eq.s32.totalorder %s60, 0
      %s63 = sadd.s32 %s62, 1
      %s64 = scalar_select %p61, %s62, %s63
      %p67 = pneg %p61
      %p68 = scmp.eq.s32.totalorder %s26, 1
      %p69 = por %p67, %p68
      %p70 = scmp.ne.s32.totalorder %s62, %s65
      %p71 = scmp.eq.s32.totalorder %s26, 0
      %p72 = por %p70, %p71
      %p73 = scmp.ne.s32.totalorder %s62, %s65
      %p74 = scmp.eq.s32.totalorder %s31, 1
      %p75 = por %p73, %p74
      %p76 = scmp.ne.s32.totalorder %s65, %s66
      %p77 = scmp.eq.s32.totalorder %s31, 0
      %p78 = por %p76, %p77
      %p79 = scmp.ne.s32.totalorder %s65, %s66
      %p80 = scmp.eq.s32.totalorder %s32, 1
      %p81 = por %p79, %p80
      %p83 = scmp.ne.s32.totalorder %s66, %s82
      %p84 = scmp.eq.s32.totalorder %s32, 0
      %p85 = por %p83, %p84
      %s86 = ssub.s32 %s26, %s33
      %p87 = scmp.eq.s32.totalorder %s86, 0
      %s89 = sadd.s32 %s88, 1
      %s90 = scalar_select %p87, %s88, %s89
      %p93 = pneg %p87
      %p94 = scmp.eq.s32.totalorder %s26, 1
      %p95 = por %p93, %p94
      %p96 = scmp.ne.s32.totalorder %s88, %s91
      %p97 = scmp.eq.s32.totalorder %s26, 0
      %p98 = por %p96, %p97
      %p99 = scmp.ne.s32.totalorder %s88, %s91
      %p100 = scmp.eq.s32.totalorder %s31, 1
      %p101 = por %p99, %p100
      %p102 = scmp.ne.s32.totalorder %s91, %s92
      %p103 = scmp.eq.s32.totalorder %s31, 0
      %p104 = por %p102, %p103
      %p105 = scmp.ne.s32.totalorder %s91, %s92
      %p106 = scmp.eq.s32.totalorder %s32, 1
      %p107 = por %p105, %p106
      %p109 = scmp.ne.s32.totalorder %s92, %s108
      %p110 = scmp.eq.s32.totalorder %s32, 0
      %p111 = por %p109, %p110
      %s113 = sadd.s32 %s112, 1
      %p116 = scmp.eq.s32.totalorder %s26, 1
      %p117 = scmp.ne.s32.totalorder %s112, %s114
      %p118 = scmp.eq.s32.totalorder %s26, 0
      %p119 = por %p117, %p118
      %p120 = scmp.ne.s32.totalorder %s112, %s114
      %p121 = scmp.eq.s32.totalorder %s31, 1
      %p122 = por %p120, %p121
      %p123 = scmp.ne.s32.totalorder %s114, %s115
      %p124 = scmp.eq.s32.totalorder %s31, 0
      %p125 = por %p123, %p124
      %p126 = scmp.ne.s32.totalorder %s114, %s115
      %p127 = scmp.eq.s32.totalorder %s32, 1
      %p128 = por %p126, %p127
      %p130 = scmp.ne.s32.totalorder %s115, %s129
      %p131 = scmp.eq.s32.totalorder %s32, 0
      %p132 = por %p130, %p131
      %s134 = sadd.s32 %s133, 1
      %p137 = scmp.eq.s32.totalorder %s26, 1
      %p138 = scmp.ne.s32.totalorder %s133, %s135
      %p139 = scmp.eq.s32.totalorder %s26, 0
      %p140 = por %p138, %p139
      %p141 = scmp.ne.s32.totalorder %s133, %s135
      %p142 = scmp.eq.s32.totalorder %s31, 1
      %p143 = por %p141, %p142
      %p144 = scmp.ne.s32.totalorder %s135, %s136
      %p145 = scmp.eq.s32.totalorder %s31, 0
      %p146 = por %p144, %p145
      %p147 = scmp.ne.s32.totalorder %s135, %s136
      %p148 = scmp.eq.s32.totalorder %s32, 1
      %p149 = por %p147, %p148
      %p151 = scmp.ne.s32.totalorder %s136, %s150
      %p152 = scmp.eq.s32.totalorder %s32, 0
      %p153 = por %p151, %p152
      %s155 = sadd.s32 %s154, 1
      %p158 = scmp.eq.s32.totalorder %s26, 1
      %p159 = scmp.ne.s32.totalorder %s154, %s156
      %p160 = scmp.eq.s32.totalorder %s26, 0
      %p161 = por %p159, %p160
      %p162 = scmp.ne.s32.totalorder %s154, %s156
      %p163 = scmp.eq.s32.totalorder %s31, 1
      %p164 = por %p162, %p163
      %p165 = scmp.ne.s32.totalorder %s156, %s157
      %p166 = scmp.eq.s32.totalorder %s31, 0
      %p167 = por %p165, %p166
      %p168 = scmp.ne.s32.totalorder %s156, %s157
      %p169 = scmp.eq.s32.totalorder %s32, 1
      %p170 = por %p168, %p169
      %p172 = scmp.ne.s32.totalorder %s157, %s171
      %p173 = scmp.eq.s32.totalorder %s32, 0
      %p174 = por %p172, %p173
      %s176 = sadd.s32 %s175, 1
      %p179 = scmp.eq.s32.totalorder %s26, 1
      %p180 = scmp.ne.s32.totalorder %s175, %s177
      %p181 = scmp.eq.s32.totalorder %s26, 0
      %p182 = por %p180, %p181
      %p183 = scmp.ne.s32.totalorder %s175, %s177
      %p184 = scmp.eq.s32.totalorder %s31, 1
      %p185 = por %p183, %p184
      %p186 = scmp.ne.s32.totalorder %s177, %s178
      %p187 = scmp.eq.s32.totalorder %s31, 0
      %p188 = por %p186, %p187
      %p189 = scmp.ne.s32.totalorder %s177, %s178
      %p190 = scmp.eq.s32.totalorder %s32, 1
      %p191 = por %p189, %p190
      %p193 = scmp.ne.s32.totalorder %s178, %s192
      %p194 = scmp.eq.s32.totalorder %s32, 0
      %p195 = por %p193, %p194
      %s197 = sadd.s32 %s196, 1
      %p200 = scmp.eq.s32.totalorder %s26, 1
      %p201 = scmp.ne.s32.totalorder %s196, %s198
      %p202 = scmp.eq.s32.totalorder %s26, 0
      %p203 = por %p201, %p202
      %p204 = scmp.ne.s32.totalorder %s196, %s198
      %p205 = scmp.eq.s32.totalorder %s31, 1
      %p206 = por %p204, %p205
      %p207 = scmp.ne.s32.totalorder %s198, %s199
      %p208 = scmp.eq.s32.totalorder %s31, 0
      %p209 = por %p207, %p208
      %p210 = scmp.ne.s32.totalorder %s198, %s199
      %p211 = scmp.eq.s32.totalorder %s32, 1
      %p212 = por %p210, %p211
      %p214 = scmp.ne.s32.totalorder %s199, %s213
      %p215 = scmp.eq.s32.totalorder %s32, 0
      %p216 = por %p214, %p215
      %s218 = sadd.s32 %s217, 1
      %p221 = scmp.eq.s32.totalorder %s26, 1
      %p222 = scmp.ne.s32.totalorder %s217, %s219
      %p223 = scmp.eq.s32.totalorder %s26, 0
      %p224 = por %p222, %p223
      %p225 = scmp.ne.s32.totalorder %s217, %s219
      %p226 = scmp.eq.s32.totalorder %s31, 1
      %p227 = por %p225, %p226
      %p228 = scmp.ne.s32.totalorder %s219, %s220
      %p229 = scmp.eq.s32.totalorder %s31, 0
      %p230 = por %p228, %p229
      %p231 = scmp.ne.s32.totalorder %s219, %s220
      %p232 = scmp.eq.s32.totalorder %s32, 1
      %p233 = por %p231, %p232
      %p235 = scmp.ne.s32.totalorder %s220, %s234
      %p236 = scmp.eq.s32.totalorder %s32, 0
      %p237 = por %p235, %p236
      %s239 = sadd.s32 %s238, 1
      %p242 = scmp.eq.s32.totalorder %s26, 1
      %p243 = scmp.ne.s32.totalorder %s238, %s240
      %p244 = scmp.eq.s32.totalorder %s26, 0
      %p245 = por %p243, %p244
      %p246 = scmp.ne.s32.totalorder %s238, %s240
      %p247 = scmp.eq.s32.totalorder %s31, 1
      %p248 = por %p246, %p247
      %p249 = scmp.ne.s32.totalorder %s240, %s241
      %p250 = scmp.eq.s32.totalorder %s31, 0
      %p251 = por %p249, %p250
      %p252 = scmp.ne.s32.totalorder %s240, %s241
      %p253 = scmp.eq.s32.totalorder %s32, 1
      %p254 = por %p252, %p253
      %p256 = scmp.ne.s32.totalorder %s241, %s255
      %p257 = scmp.eq.s32.totalorder %s32, 0
      %p258 = por %p256, %p257
      %s259 = ssub.s32 %s26, %s33
      %p260 = scmp.eq.s32.totalorder %s259, 0
      %s262 = sadd.s32 %s261, 1
      %s263 = scalar_select %p260, %s261, %s262
      %p266 = pneg %p260
      %p267 = scmp.eq.s32.totalorder %s26, 1
      %p268 = por %p266, %p267
      %p269 = scmp.ne.s32.totalorder %s261, %s264
      %p270 = scmp.eq.s32.totalorder %s26, 0
      %p271 = por %p269, %p270
      %p272 = scmp.ne.s32.totalorder %s261, %s264
      %p273 = scmp.eq.s32.totalorder %s31, 1
      %p274 = por %p272, %p273
      %p275 = scmp.ne.s32.totalorder %s264, %s265
      %p276 = scmp.eq.s32.totalorder %s31, 0
      %p277 = por %p275, %p276
      %p278 = scmp.ne.s32.totalorder %s264, %s265
      %p279 = scmp.eq.s32.totalorder %s32, 1
      %p280 = por %p278, %p279
      %p282 = scmp.ne.s32.totalorder %s265, %s281
      %p283 = scmp.eq.s32.totalorder %s32, 0
      %p284 = por %p282, %p283
      %s285 = ssub.s32 %s26, %s33
      %p286 = scmp.eq.s32.totalorder %s285, 0
      %s288 = sadd.s32 %s287, 1
      %s289 = scalar_select %p286, %s287, %s288
      %p292 = pneg %p286
      %p293 = scmp.eq.s32.totalorder %s26, 1
      %p294 = por %p292, %p293
      %p295 = scmp.ne.s32.totalorder %s287, %s290
      %p296 = scmp.eq.s32.totalorder %s26, 0
      %p297 = por %p295, %p296
      %p298 = scmp.ne.s32.totalorder %s287, %s290
      %p299 = scmp.eq.s32.totalorder %s31, 1
      %p300 = por %p298, %p299
      %p301 = scmp.ne.s32.totalorder %s290, %s291
      %p302 = scmp.eq.s32.totalorder %s31, 0
      %p303 = por %p301, %p302
      %p304 = scmp.ne.s32.totalorder %s290, %s291
      %p305 = scmp.eq.s32.totalorder %s32, 1
      %p306 = por %p304, %p305
      %p308 = scmp.ne.s32.totalorder %s291, %s307
      %p309 = scmp.eq.s32.totalorder %s32, 0
      %p310 = por %p308, %p309
      %p311 = scmp.le.s32.totalorder 1, %s26
      %p312 = scmp.lt.s32.totalorder %s26, 3
      %p313 = pnand %p311, %p312
      %p314 = pneg %p313
      // Predicated region
      $region9: #{tpu_custom_call.1} parent=5 // pred_check
        _
      $region10: #{tpu_custom_call.1} parent=5 // pred_check_branch
        %316 = sbr.rel (%p313) target = $region12
      $region11: #{tpu_custom_call.1} parent=5 // pred_region
        %s317 = ssub.s32 %s26, 1
        // Predicated region
        $region13: #{tpu_custom_call.1} parent=11 // pred_check
          %p318 = pneg %p125
        $region14: #{tpu_custom_call.1} parent=11 // pred_check_branch
          %320 = sbr.rel (%p318) target = $region16
        $region15: #{tpu_custom_call.1} parent=11 // pred_region
          %s322 = ssub.s32 8448, 8448
          %323 = vsyncadd [#allocation3], %s322
          %s324 = sshll.u32 [#allocation2], 4
          %s325 = int_to_ptr.vmem [resolvable:$true] %s324
          %330 = dma.hbm_to_vmem [thread:$0]  %s3, 8448, %s325, [#allocation3], 64, 64, 4
        $region16: #{tpu_custom_call.1} parent=11 // pred_fallthru
          _
        // Predicated region
        $region17: #{tpu_custom_call.1} parent=11 // pred_check
          %p331 = pneg %p146
        $region18: #{tpu_custom_call.1} parent=11 // pred_check_branch
          %333 = sbr.rel (%p331) target = $region20
        $region19: #{tpu_custom_call.1} parent=11 // pred_region
          %s335 = ssub.s32 128, 128
          %336 = vsyncadd [#allocation6], %s335
          %s338 = sshll.u32 [#allocation5], 4
          %s339 = int_to_ptr.vmem [resolvable:$true] %s338
          %341 = dma.hbm_to_vmem [thread:$0]  %s4, 128, %s339, [#allocation6]
        $region20: #{tpu_custom_call.1} parent=11 // pred_fallthru
          _
        // Predicated region
        $region21: #{tpu_custom_call.1} parent=11 // pred_check
          %p342 = pneg %p167
        $region22: #{tpu_custom_call.1} parent=11 // pred_check_branch
          %344 = sbr.rel (%p342) target = $region24
        $region23: #{tpu_custom_call.1} parent=11 // pred_region
          _
        $region24: #{tpu_custom_call.1} parent=11 // pred_fallthru
          _
        // Predicated region
        $region25: #{tpu_custom_call.1} parent=11 // pred_check
          %p345 = pneg %p188
        $region26: #{tpu_custom_call.1} parent=11 // pred_check_branch
          %347 = sbr.rel (%p345) target = $region28
        $region27: #{tpu_custom_call.1} parent=11 // pred_region
          _
        $region28: #{tpu_custom_call.1} parent=11 // pred_fallthru
          _
        // Predicated region
        $region29: #{tpu_custom_call.1} parent=11 // pred_check
          %p348 = pneg %p209
        $region30: #{tpu_custom_call.1} parent=11 // pred_check_branch
          %350 = sbr.rel (%p348) target = $region32
        $region31: #{tpu_custom_call.1} parent=11 // pred_region
          _
        $region32: #{tpu_custom_call.1} parent=11 // pred_fallthru
          _
        // Predicated region
        $region33: #{tpu_custom_call.1} parent=11 // pred_check
          %p351 = pneg %p230
        $region34: #{tpu_custom_call.1} parent=11 // pred_check_branch
          %353 = sbr.rel (%p351) target = $region36
        $region35: #{tpu_custom_call.1} parent=11 // pred_region
          %s355 = ssub.s32 256, 256
          %356 = vsyncadd [#allocation6], %s355
          %s357 = sshll.u32 [#allocation7], 4
          %s358 = int_to_ptr.vmem [resolvable:$true] %s357
          %363 = dma.hbm_to_vmem [thread:$0]  %s8, 256, %s358, [#allocation6], 64, 64, 4
        $region36: #{tpu_custom_call.1} parent=11 // pred_fallthru
          _
        // Predicated region
        $region37: #{tpu_custom_call.1} parent=11 // pred_check
          %p364 = pneg %p251
        $region38: #{tpu_custom_call.1} parent=11 // pred_check_branch
          %366 = sbr.rel (%p364) target = $region40
        $region39: #{tpu_custom_call.1} parent=11 // pred_region
          _
        $region40: #{tpu_custom_call.1} parent=11 // pred_fallthru
          _
      $region12: #{tpu_custom_call.1} parent=5 // pred_fallthru
        _
      %p367 = scmp.lt.s32.totalorder %s26, 2
      // Predicated region
      $region41: #{tpu_custom_call.1} parent=5 // pred_check
        %p368 = pneg %p367
      $region42: #{tpu_custom_call.1} parent=5 // pred_check_branch
        %370 = sbr.rel (%p368) target = $region44
      $region43: #{tpu_custom_call.1} parent=5 // pred_region
        // Predicated region
        $region45: #{tpu_custom_call.1} parent=43 // pred_check
          %p371 = pneg %p46
        $region46: #{tpu_custom_call.1} parent=43 // pred_check_branch
          %373 = sbr.rel (%p371) target = $region48
        $region47: #{tpu_custom_call.1} parent=43 // pred_region
          %s374 = smul.u32 2, %s26
          %p375 = scmp.lt.s32.totalorder %s374, 3
          %s376 = scalar_select %p375, %s374, 3
          %s377 = smul.addr %s376, 4
          %s378 = scalar_lea.vmem %s0, %s377
          %s379 = smul.u32 2, %s26
        $region48: #{tpu_custom_call.1} parent=43 // pred_fallthru
          _
        // Predicated region
        $region49: #{tpu_custom_call.1} parent=43 // pred_check
          %p380 = pneg %p72
        $region50: #{tpu_custom_call.1} parent=43 // pred_check_branch
          %382 = sbr.rel (%p380) target = $region52
        $region51: #{tpu_custom_call.1} parent=43 // pred_region
          %s383 = smul.u32 2, %s26
          %p384 = scmp.lt.s32.totalorder %s383, 3
          %s385 = scalar_select %p384, %s383, 3
          %s386 = smul.addr %s385, 4
          %s387 = scalar_lea.vmem %s1, %s386
          %s388 = smul.u32 2, %s26
        $region52: #{tpu_custom_call.1} parent=43 // pred_fallthru
          _
        // Predicated region
        $region53: #{tpu_custom_call.1} parent=43 // pred_check
          %p389 = pneg %p98
        $region54: #{tpu_custom_call.1} parent=43 // pred_check_branch
          %391 = sbr.rel (%p389) target = $region56
        $region55: #{tpu_custom_call.1} parent=43 // pred_region
          %s392 = smul.u32 2, %s26
          %p393 = scmp.lt.s32.totalorder %s392, 3
          %s394 = scalar_select %p393, %s392, 3
          %s395 = smul.addr %s394, 4
          %s396 = scalar_lea.vmem %s2, %s395
          %s397 = smul.u32 2, %s26
        $region56: #{tpu_custom_call.1} parent=43 // pred_fallthru
          _
      $region44: #{tpu_custom_call.1} parent=5 // pred_fallthru
        _
      %p398 = scmp.le.s32.totalorder 1, %s26
      %p399 = scmp.lt.s32.totalorder %s26, 3
      %p400 = pnand %p398, %p399
      %p401 = pneg %p400
      // Predicated region
      $region57: #{tpu_custom_call.1} parent=5 // pred_check
        _
      $region58: #{tpu_custom_call.1} parent=5 // pred_check_branch
        %403 = sbr.rel (%p400) target = $region60
      $region59: #{tpu_custom_call.1} parent=5 // pred_region
        %s404 = ssub.s32 %s26, 1
        // Predicated region
        $region61: #{tpu_custom_call.1} parent=59 // pred_check
          %p405 = pneg %p125
        $region62: #{tpu_custom_call.1} parent=59 // pred_check_branch
          %407 = sbr.rel (%p405) target = $region64
        $region63: #{tpu_custom_call.1} parent=59 // pred_region
          %408 = dma.done [#allocation3], 8448
        $region64: #{tpu_custom_call.1} parent=59 // pred_fallthru
          _
        // Predicated region
        $region65: #{tpu_custom_call.1} parent=59 // pred_check
          %p409 = pneg %p146
        $region66: #{tpu_custom_call.1} parent=59 // pred_check_branch
          %411 = sbr.rel (%p409) target = $region68
        $region67: #{tpu_custom_call.1} parent=59 // pred_region
          %412 = dma.done [#allocation6], 128
        $region68: #{tpu_custom_call.1} parent=59 // pred_fallthru
          _
        // Predicated region
        $region69: #{tpu_custom_call.1} parent=59 // pred_check
          %p413 = pneg %p230
        $region70: #{tpu_custom_call.1} parent=59 // pred_check_branch
          %415 = sbr.rel (%p413) target = $region72
        $region71: #{tpu_custom_call.1} parent=59 // pred_region
          %416 = dma.done [#allocation6], 256
        $region72: #{tpu_custom_call.1} parent=59 // pred_fallthru
          _
        %s417 = smul.u32 2, %s31
        %p418 = scmp.lt.s32.totalorder %s417, 3
        %s419 = scalar_select %p418, %s417, 3
        %s420 = smul.addr %s419, 4
        %s421 = scalar_lea.vmem %s0, %s420
        %p422 = pneg %p52
        %p423 = pneg %p49
        %s424 = smul.u32 2, %s31
        %p425 = scmp.lt.s32.totalorder %s424, 3
        %s426 = scalar_select %p425, %s424, 3
        %s427 = smul.addr %s426, 4
        %s428 = scalar_lea.vmem %s1, %s427
        %p429 = pneg %p78
        %p430 = pneg %p75
        %s431 = smul.u32 2, %s31
        %p432 = scmp.lt.s32.totalorder %s431, 3
        %s433 = scalar_select %p432, %s431, 3
        %s434 = smul.addr %s433, 4
        %s435 = scalar_lea.vmem %s2, %s434
        %p436 = pneg %p104
        %p437 = pneg %p101
        %p438 = pneg %p125
        %p439 = pneg %p122
        %p440 = pneg %p146
        %p441 = pneg %p143
        %p442 = pneg %p167
        %p443 = pneg %p164
        %p444 = pneg %p188
        %p445 = pneg %p185
        %p446 = pneg %p209
        %p447 = pneg %p206
        %p448 = pneg %p230
        %p449 = pneg %p227
        %p450 = pneg %p251
        %p451 = pneg %p248
        %p452 = pneg %p277
        %p453 = pneg %p274
        %s454 = sand.u32 %s264, 1
        %s455 = scalar_lea.sflag [#allocation4], %s454
        %s456 = sand.u32 %s264, 1
        %s457 = smul.addr %s456, 16
        %s458 = scalar_lea.vmem [#allocation8], %s457
        %p459 = pneg %p303
        %p460 = pneg %p300
        %s461 = sand.u32 %s290, 1
        %s462 = scalar_lea.sflag [#allocation10], %s461
        %s463 = sand.u32 %s290, 1
        %s464 = smul.addr %s463, 8
        %s465 = scalar_lea.vmem [#allocation9], %s464
        %s466 = smul.u32 2, %s31
        %p467 = scmp.lt.s32.totalorder %s466, 3
        %s468 = scalar_select %p467, %s466, 3
        %s469 = smul.addr %s468, 4
        %s470 = scalar_lea.vmem %s0, %s469
        %s471 = smul.u32 2, %s31
        %s472 = smul.u32 2, %s31
        %p473 = scmp.lt.s32.totalorder %s472, 3
        %s474 = scalar_select %p473, %s472, 3
        %s475 = smul.addr %s474, 4
        %s476 = scalar_lea.vmem %s1, %s475
        %s477 = smul.u32 2, %s31
        %s478 = smul.u32 2, %s31
        %p479 = scmp.lt.s32.totalorder %s478, 3
        %s480 = scalar_select %p479, %s478, 3
        %s481 = smul.addr %s480, 4
        %s482 = scalar_lea.vmem %s2, %s481
        %s483 = smul.u32 2, %s31
        %s484 = smul.u32 2, %s31
        %s485 = smul.u32 2, %s31
        %v487 = vld [vmem:[%s470] sm:$0xf]
        %v488 = vld [vmem:[%s470 + $0x4] sm:$0xf]
        %v489 = vld [vmem:[%s476] sm:$0xf]
        %v490 = vld [vmem:[%s476 + $0x4] sm:$0xf]
        %v491 = vld [vmem:[%s482] sm:$0xf]
        %v492 = vld [vmem:[%s482 + $0x4] sm:$0xf]
        %v493 = vld [vmem:[#allocation2] sm:$0xf]
        %v494 = vld [vmem:[#allocation2 + $0x4] sm:$0xf]
        %v495 = vld [vmem:[#allocation2 + $0x8] sm:$0xf]
        %v496 = vld [vmem:[#allocation2 + $0xc] sm:$0xf]
        %v497 = vld [vmem:[#allocation5] sm:$0x1]
        %v498 = vld [vmem:[#allocation5 + $0x1] sm:$0x1]
        %v499 = vlaneseq
        %v500 = vshrl.u32 %v499, 7
        %v501 = vsub.s32 0, %v500
        %v502 = vrot.slane %v497, %v501
        %v505 = vunpack.c.l.b16 %v491
        %v506 = vunpack.c.l.b16 %v492
        %v507 = vpack.c.b16 %v506, %v505
        %v512 = vunpack.c.l.b16 %v493
        %v513 = vunpack.c.l.b16 %v494
        %v514 = vunpack.c.l.b16 %v495
        %v515 = vunpack.c.l.b16 %v496
        %v516 = vpack.c.b16 %v513, %v512
        %v517 = vpack.c.b16 %v515, %v514
        %vm520 = vcmask 261120
        %v522 = vsel %vm520, %v507, 0
        %524 = vmatprep.subr.bf16.mxu0 0
        %525 = vmatpush1.bf16.msra.mxu0 0
        %526 = vmatprep.subr.bf16.mxu0 0
        %527 = vmatpush1.bf16.msra.mxu0 0
        %528 = vmatprep.subr.bf16.mxu0 0
        %529 = vmatpush1.bf16.msra.mxu0 0
        %530 = vmatprep.subr.bf16.mxu0 0
        %531 = vmatpush1.bf16.msra.mxu0 0
        %532 = vmatprep.subr.bf16.mxu0 0
        %533 = vmatpush1.bf16.msra.mxu0 0
        %534 = vmatprep.subr.bf16.mxu0 0
        %535 = vmatpush1.bf16.msra.mxu0 0
        %536 = vmatprep.subr.bf16.mxu0 0
        %537 = vmatpush1.bf16.msra.mxu0 %v517
        %538 = vmatprep.subr.bf16.mxu0 0
        %539 = vmatpush1.bf16.msra.mxu0 %v516
        %540 = vmatprep.subr.bf16.mxu0 0
        %541 = vmatpush2.bf16.msra.mxu0 0
        %542 = vmatprep.subr.bf16.mxu0 0
        %543 = vmatpush2.bf16.msra.mxu0 0
        %544 = vmatprep.subr.bf16.mxu0 0
        %545 = vmatpush2.bf16.msra.mxu0 0
        %546 = vmatprep.subr.bf16.mxu0 0
        %547 = vmatpush2.bf16.msra.mxu0 0
        %548 = vmatprep.subr.bf16.mxu0 0
        %549 = vmatpush2.bf16.msra.mxu0 0
        %550 = vmatprep.subr.bf16.mxu0 0
        %551 = vmatpush2.bf16.msra.mxu0 0
        %552 = vmatprep.subr.bf16.mxu0 0
        %553 = vmatpush2.bf16.msra.mxu0 0
        %554 = vmatprep.subr.bf16.mxu0 0
        %555 = vmatpush2.bf16.msra.mxu0 0
        %556 = vmatprep.mubr.bf16.mxu0 0
        %557 = vmatmul.mubr.bf16.gmra.mxu0 %v522
        %v558 = vpop.f32.mrf.mxu0
        %v559 = vadd.f32 %v502, %v558
        %v560 = vpop.f32.mrf.mxu0
        %v561 = vpop.f32.mrf.mxu0
        %v562 = vadd.f32 %v502, %v561
        %v563 = vpop.f32.mrf.mxu0
        %564 = vdwg.mxu0
        %565 = vmax.xlane.f32.xlu0 %v559
        %v566 = vpop.xlane.xlu0 %565
        %567 = vmax.xlane.f32.xlu0 %v562
        %v568 = vpop.xlane.xlu0 %567
        %v569 = vsub.f32 %v559, %v566
        %v570 = vsub.f32 %v562, %v568
        %v571 = vmul.f32 %v569, 1.442695
        %v572 = vpow.pop %v571
        %v573 = vmul.f32 %v570, 1.442695
        %v574 = vpow.pop %v573
        %575 = vadd.xlane.f32.xlu0 %v572
        %v576 = vpop.xlane.xlu0 %575
        %577 = vadd.xlane.f32.xlu0 %v574
        %v578 = vpop.xlane.xlu0 %577
        %v579 = vrcp.pop %v576
        %v580 = vrcp.pop %v578
        %v581 = vmul.f32 %v572, %v579
        %v582 = vmul.f32 %v574, %v580
        %v583 = vpack.c.bf16 %v582, %v581
        %v584 = vld [vmem:[%s5] sm:$0xf]
        %v585 = vld [vmem:[%s5 + $0x4] sm:$0xf]
        %v586 = vld [vmem:[%s5 + $0x8] sm:$0xf]
        %v587 = vld [vmem:[%s5 + $0xc] sm:$0xf]
        %v588 = vld [vmem:[%s5 + $0x10] sm:$0xf]
        %v589 = vld [vmem:[%s5 + $0x14] sm:$0xf]
        %v590 = vld [vmem:[%s5 + $0x18] sm:$0xf]
        %v591 = vld [vmem:[%s5 + $0x1c] sm:$0xf]
        %v592 = vld [vmem:[%s5 + $0x20] sm:$0xf]
        %v593 = vld [vmem:[%s5 + $0x24] sm:$0xf]
        %v594 = vld [vmem:[%s5 + $0x28] sm:$0xf]
        %v595 = vld [vmem:[%s5 + $0x2c] sm:$0xf]
        %v596 = vld [vmem:[%s5 + $0x30] sm:$0xf]
        %v597 = vld [vmem:[%s5 + $0x34] sm:$0xf]
        %v598 = vld [vmem:[%s5 + $0x38] sm:$0xf]
        %v599 = vld [vmem:[%s5 + $0x3c] sm:$0xf]
        %v616 = vunpack.c.l.b16 %v584
        %v617 = vunpack.c.l.b16 %v585
        %v618 = vunpack.c.l.b16 %v586
        %v619 = vunpack.c.l.b16 %v587
        %v620 = vunpack.c.l.b16 %v588
        %v621 = vunpack.c.l.b16 %v589
        %v622 = vunpack.c.l.b16 %v590
        %v623 = vunpack.c.l.b16 %v591
        %v624 = vunpack.c.l.b16 %v592
        %v625 = vunpack.c.l.b16 %v593
        %v626 = vunpack.c.l.b16 %v594
        %v627 = vunpack.c.l.b16 %v595
        %v628 = vunpack.c.l.b16 %v596
        %v629 = vunpack.c.l.b16 %v597
        %v630 = vunpack.c.l.b16 %v598
        %v631 = vunpack.c.l.b16 %v599
        %v632 = vpack.c.b16 %v617, %v616
        %v633 = vpack.c.b16 %v619, %v618
        %v634 = vpack.c.b16 %v621, %v620
        %v635 = vpack.c.b16 %v623, %v622
        %v636 = vpack.c.b16 %v625, %v624
        %v637 = vpack.c.b16 %v627, %v626
        %v638 = vpack.c.b16 %v629, %v628
        %v639 = vpack.c.b16 %v631, %v630
        %648 = vmatprep.subr.bf16.mxu0 0
        %649 = vmatpush1.bf16.msra.mxu0 %v639
        %650 = vmatprep.subr.bf16.mxu0 0
        %651 = vmatpush1.bf16.msra.mxu0 %v638
        %652 = vmatprep.subr.bf16.mxu0 0
        %653 = vmatpush1.bf16.msra.mxu0 %v637
        %654 = vmatprep.subr.bf16.mxu0 0
        %655 = vmatpush1.bf16.msra.mxu0 %v636
        %656 = vmatprep.subr.bf16.mxu0 0
        %657 = vmatpush1.bf16.msra.mxu0 %v635
        %658 = vmatprep.subr.bf16.mxu0 0
        %659 = vmatpush1.bf16.msra.mxu0 %v634
        %660 = vmatprep.subr.bf16.mxu0 0
        %661 = vmatpush1.bf16.msra.mxu0 %v633
        %662 = vmatprep.subr.bf16.mxu0 0
        %663 = vmatpush1.bf16.msra.mxu0 %v632
        %664 = vmatprep.subr.bf16.mxu0 0
        %665 = vmatpush2.bf16.msra.mxu0 0
        %666 = vmatprep.subr.bf16.mxu0 0
        %667 = vmatpush2.bf16.msra.mxu0 0
        %668 = vmatprep.subr.bf16.mxu0 0
        %669 = vmatpush2.bf16.msra.mxu0 0
        %670 = vmatprep.subr.bf16.mxu0 0
        %671 = vmatpush2.bf16.msra.mxu0 0
        %672 = vmatprep.subr.bf16.mxu0 0
        %673 = vmatpush2.bf16.msra.mxu0 0
        %674 = vmatprep.subr.bf16.mxu0 0
        %675 = vmatpush2.bf16.msra.mxu0 0
        %676 = vmatprep.subr.bf16.mxu0 0
        %677 = vmatpush2.bf16.msra.mxu0 0
        %678 = vmatprep.subr.bf16.mxu0 0
        %679 = vmatpush2.bf16.msra.mxu0 0
        %680 = vmatprep.mubr.bf16.mxu0 0
        %681 = vmatmul.mubr.bf16.gmra.mxu0 %v583
        %v682 = vpop.f32.mrf.mxu0
        %v683 = vadd.f32 0.0, %v682
        %v684 = vpop.f32.mrf.mxu0
        %v685 = vpop.f32.mrf.mxu0
        %v686 = vadd.f32 0.0, %v685
        %v687 = vpop.f32.mrf.mxu0
        %688 = vdwg.mxu0
        %v689 = vpack.c.bf16 %v686, %v683
        %v690 = vld [vmem:[#allocation7] sm:$0xf]
        %v691 = vld [vmem:[#allocation7 + $0x4] sm:$0xf]
        %v692 = vld [vmem:[#allocation7 + $0x8] sm:$0xf]
        %v693 = vld [vmem:[#allocation7 + $0xc] sm:$0xf]
        %v694 = vld [vmem:[%s9] sm:$0x1]
        %v695 = vunpack.c.l.bf16 %v694
        %v696 = vlaneseq
        %v697 = vshrl.u32 %v696, 7
        %v698 = vsub.s32 0, %v697
        %v699 = vrot.slane %v695, %v698
        %v704 = vunpack.c.l.b16 %v690
        %v705 = vunpack.c.l.b16 %v691
        %v706 = vunpack.c.l.b16 %v692
        %v707 = vunpack.c.l.b16 %v693
        %v708 = vpack.c.b16 %v705, %v704
        %v709 = vpack.c.b16 %v707, %v706
        %v713 = vsel %vm520, %v689, 0
        %715 = vmatprep.subr.bf16.mxu0 0
        %716 = vmatpush1.bf16.msra.mxu0 0
        %717 = vmatprep.subr.bf16.mxu0 0
        %718 = vmatpush1.bf16.msra.mxu0 0
        %719 = vmatprep.subr.bf16.mxu0 0
        %720 = vmatpush1.bf16.msra.mxu0 0
        %721 = vmatprep.subr.bf16.mxu0 0
        %722 = vmatpush1.bf16.msra.mxu0 0
        %723 = vmatprep.subr.bf16.mxu0 0
        %724 = vmatpush1.bf16.msra.mxu0 0
        %725 = vmatprep.subr.bf16.mxu0 0
        %726 = vmatpush1.bf16.msra.mxu0 0
        %727 = vmatprep.subr.bf16.mxu0 0
        %728 = vmatpush1.bf16.msra.mxu0 %v709
        %729 = vmatprep.subr.bf16.mxu0 0
        %730 = vmatpush1.bf16.msra.mxu0 %v708
        %731 = vmatprep.subr.bf16.mxu0 0
        %732 = vmatpush2.bf16.msra.mxu0 0
        %733 = vmatprep.subr.bf16.mxu0 0
        %734 = vmatpush2.bf16.msra.mxu0 0
        %735 = vmatprep.subr.bf16.mxu0 0
        %736 = vmatpush2.bf16.msra.mxu0 0
        %737 = vmatprep.subr.bf16.mxu0 0
        %738 = vmatpush2.bf16.msra.mxu0 0
        %739 = vmatprep.subr.bf16.mxu0 0
        %740 = vmatpush2.bf16.msra.mxu0 0
        %741 = vmatprep.subr.bf16.mxu0 0
        %742 = vmatpush2.bf16.msra.mxu0 0
        %743 = vmatprep.subr.bf16.mxu0 0
        %744 = vmatpush2.bf16.msra.mxu0 0
        %745 = vmatprep.subr.bf16.mxu0 0
        %746 = vmatpush2.bf16.msra.mxu0 0
        %747 = vmatprep.mubr.bf16.mxu0 0
        %748 = vmatmul.mubr.bf16.gmra.mxu0 %v713
        %v749 = vpop.f32.mrf.mxu0
        %v750 = vadd.f32 %v699, %v749
        %v751 = vpop.f32.mrf.mxu0
        %v752 = vpop.f32.mrf.mxu0
        %v753 = vadd.f32 %v699, %v752
        %v754 = vpop.f32.mrf.mxu0
        %755 = vdwg.mxu0
        %v756 = vld [vmem:[%s6] sm:$0xf]
        %v757 = vld [vmem:[%s6 + $0x4] sm:$0xf]
        %v758 = vld [vmem:[%s6 + $0x8] sm:$0xf]
        %v759 = vld [vmem:[%s6 + $0xc] sm:$0xf]
        %v762 = vunpack.c.l.b16 %v487
        %v763 = vunpack.c.l.b16 %v488
        %v764 = vpack.c.b16 %v763, %v762
        %v769 = vunpack.c.l.b16 %v756
        %v770 = vunpack.c.l.b16 %v757
        %v771 = vunpack.c.l.b16 %v758
        %v772 = vunpack.c.l.b16 %v759
        %v773 = vpack.c.b16 %v770, %v769
        %v774 = vpack.c.b16 %v772, %v771
        %v778 = vsel %vm520, %v764, 0
        %780 = vmatprep.subr.bf16.mxu0 0
        %781 = vmatpush1.bf16.msra.mxu0 0
        %782 = vmatprep.subr.bf16.mxu0 0
        %783 = vmatpush1.bf16.msra.mxu0 0
        %784 = vmatprep.subr.bf16.mxu0 0
        %785 = vmatpush1.bf16.msra.mxu0 0
        %786 = vmatprep.subr.bf16.mxu0 0
        %787 = vmatpush1.bf16.msra.mxu0 0
        %788 = vmatprep.subr.bf16.mxu0 0
        %789 = vmatpush1.bf16.msra.mxu0 0
        %790 = vmatprep.subr.bf16.mxu0 0
        %791 = vmatpush1.bf16.msra.mxu0 0
        %792 = vmatprep.subr.bf16.mxu0 0
        %793 = vmatpush1.bf16.msra.mxu0 %v774
        %794 = vmatprep.subr.bf16.mxu0 0
        %795 = vmatpush1.bf16.msra.mxu0 %v773
        %796 = vmatprep.subr.bf16.mxu0 0
        %797 = vmatpush2.bf16.msra.mxu0 0
        %798 = vmatprep.subr.bf16.mxu0 0
        %799 = vmatpush2.bf16.msra.mxu0 0
        %800 = vmatprep.subr.bf16.mxu0 0
        %801 = vmatpush2.bf16.msra.mxu0 0
        %802 = vmatprep.subr.bf16.mxu0 0
        %803 = vmatpush2.bf16.msra.mxu0 0
        %804 = vmatprep.subr.bf16.mxu0 0
        %805 = vmatpush2.bf16.msra.mxu0 0
        %806 = vmatprep.subr.bf16.mxu0 0
        %807 = vmatpush2.bf16.msra.mxu0 0
        %808 = vmatprep.subr.bf16.mxu0 0
        %809 = vmatpush2.bf16.msra.mxu0 0
        %810 = vmatprep.subr.bf16.mxu0 0
        %811 = vmatpush2.bf16.msra.mxu0 0
        %812 = vmatprep.mubr.bf16.mxu0 0
        %813 = vmatmul.mubr.bf16.gmra.mxu0 %v778
        %v814 = vpop.f32.mrf.mxu0
        %v815 = vadd.f32 %v750, %v814
        %v816 = vpop.f32.mrf.mxu0
        %v817 = vpop.f32.mrf.mxu0
        %v818 = vadd.f32 %v753, %v817
        %v819 = vpop.f32.mrf.mxu0
        %820 = vdwg.mxu0
        %v821 = vtanh.pop %v815
        %v822 = vtanh.pop %v818
        %v823 = vld [vmem:[%s7] sm:$0xf]
        %v824 = vld [vmem:[%s7 + $0x4] sm:$0xf]
        %v825 = vld [vmem:[%s7 + $0x8] sm:$0xf]
        %v826 = vld [vmem:[%s7 + $0xc] sm:$0xf]
        %v829 = vunpack.c.l.b16 %v489
        %v830 = vunpack.c.l.b16 %v490
        %v831 = vpack.c.b16 %v830, %v829
        %v836 = vunpack.c.l.b16 %v823
        %v837 = vunpack.c.l.b16 %v824
        %v838 = vunpack.c.l.b16 %v825
        %v839 = vunpack.c.l.b16 %v826
        %v840 = vpack.c.b16 %v837, %v836
        %v841 = vpack.c.b16 %v839, %v838
        %846 = vrot.lane.b32.xlu0 %v750, 64
        %v847 = vpop.permute.xlu0 %846
        %848 = vrot.lane.b32.xlu0 %v753, 64
        %v849 = vpop.permute.xlu0 %848
        %v853 = vsel %vm520, %v831, 0
        %855 = vmatprep.subr.bf16.mxu0 0
        %856 = vmatpush1.bf16.msra.mxu0 0
        %857 = vmatprep.subr.bf16.mxu0 0
        %858 = vmatpush1.bf16.msra.mxu0 0
        %859 = vmatprep.subr.bf16.mxu0 0
        %860 = vmatpush1.bf16.msra.mxu0 0
        %861 = vmatprep.subr.bf16.mxu0 0
        %862 = vmatpush1.bf16.msra.mxu0 0
        %863 = vmatprep.subr.bf16.mxu0 0
        %864 = vmatpush1.bf16.msra.mxu0 0
        %865 = vmatprep.subr.bf16.mxu0 0
        %866 = vmatpush1.bf16.msra.mxu0 0
        %867 = vmatprep.subr.bf16.mxu0 0
        %868 = vmatpush1.bf16.msra.mxu0 %v841
        %869 = vmatprep.subr.bf16.mxu0 0
        %870 = vmatpush1.bf16.msra.mxu0 %v840
        %871 = vmatprep.subr.bf16.mxu0 0
        %872 = vmatpush2.bf16.msra.mxu0 0
        %873 = vmatprep.subr.bf16.mxu0 0
        %874 = vmatpush2.bf16.msra.mxu0 0
        %875 = vmatprep.subr.bf16.mxu0 0
        %876 = vmatpush2.bf16.msra.mxu0 0
        %877 = vmatprep.subr.bf16.mxu0 0
        %878 = vmatpush2.bf16.msra.mxu0 0
        %879 = vmatprep.subr.bf16.mxu0 0
        %880 = vmatpush2.bf16.msra.mxu0 0
        %881 = vmatprep.subr.bf16.mxu0 0
        %882 = vmatpush2.bf16.msra.mxu0 0
        %883 = vmatprep.subr.bf16.mxu0 0
        %884 = vmatpush2.bf16.msra.mxu0 0
        %885 = vmatprep.subr.bf16.mxu0 0
        %886 = vmatpush2.bf16.msra.mxu0 0
        %887 = vmatprep.mubr.bf16.mxu0 0
        %888 = vmatmul.mubr.bf16.gmra.mxu0 %v853
        %v889 = vpop.f32.mrf.mxu0
        %v890 = vadd.f32 %v847, %v889
        %v891 = vpop.f32.mrf.mxu0
        %v892 = vpop.f32.mrf.mxu0
        %v893 = vadd.f32 %v849, %v892
        %v894 = vpop.f32.mrf.mxu0
        %895 = vdwg.mxu0
        %v896 = vtanh.pop %v890
        %v897 = vtanh.pop %v893
        %v898 = vpack.c.bf16 %v822, %v821
        %v899 = vpack.c.bf16 %v897, %v896
        %v901 = vpack.i.b16 %v898, %v898
        %v903 = vlaneseq
        %v904 = vshrl.u32 %v903, 7
        %v905 = vsub.s32 0, %v904
        %v906 = vrot.slane %v901, %v905
        %908 = vbcast.lane.c.b16.xlu0 %v906, 256
        %v909 = vpop.permute.xlu0 %908
        %v910 = vshrl.u32 %v898, 16
        %v911 = vpack.i.b16 %v910, %v910
        %v913 = vlaneseq
        %v914 = vshrl.u32 %v913, 7
        %v915 = vsub.s32 0, %v914
        %v916 = vrot.slane %v911, %v915
        %918 = vbcast.lane.c.b16.xlu0 %v916, 256
        %v919 = vpop.permute.xlu0 %918
        %v920 = vlaneseq
        %v921 = vshrl.u32 %v920, 7
        %v922 = vsub.s32 1, %v921
        %v923 = vrot.slane %v901, %v922
        %925 = vbcast.lane.c.b16.xlu0 %v923, 256
        %v926 = vpop.permute.xlu0 %925
        %v927 = vlaneseq
        %v928 = vshrl.u32 %v927, 7
        %v929 = vsub.s32 1, %v928
        %v930 = vrot.slane %v911, %v929
        %932 = vbcast.lane.c.b16.xlu0 %v930, 256
        %v933 = vpop.permute.xlu0 %932
        %v934 = vlaneseq
        %v935 = vshrl.u32 %v934, 7
        %v936 = vsub.s32 2, %v935
        %v937 = vrot.slane %v901, %v936
        %939 = vbcast.lane.c.b16.xlu0 %v937, 256
        %v940 = vpop.permute.xlu0 %939
        %v941 = vlaneseq
        %v942 = vshrl.u32 %v941, 7
        %v943 = vsub.s32 2, %v942
        %v944 = vrot.slane %v911, %v943
        %946 = vbcast.lane.c.b16.xlu0 %v944, 256
        %v947 = vpop.permute.xlu0 %946
        %v948 = vlaneseq
        %v949 = vshrl.u32 %v948, 7
        %v950 = vsub.s32 3, %v949
        %v951 = vrot.slane %v901, %v950
        %953 = vbcast.lane.c.b16.xlu0 %v951, 256
        %v954 = vpop.permute.xlu0 %953
        %v955 = vlaneseq
        %v956 = vshrl.u32 %v955, 7
        %v957 = vsub.s32 3, %v956
        %v958 = vrot.slane %v911, %v957
        %960 = vbcast.lane.c.b16.xlu0 %v958, 256
        %v961 = vpop.permute.xlu0 %960
        %v962 = vlaneseq
        %v963 = vshrl.u32 %v962, 7
        %v964 = vsub.s32 4, %v963
        %v965 = vrot.slane %v901, %v964
        %967 = vbcast.lane.c.b16.xlu0 %v965, 256
        %v968 = vpop.permute.xlu0 %967
        %v969 = vlaneseq
        %v970 = vshrl.u32 %v969, 7
        %v971 = vsub.s32 4, %v970
        %v972 = vrot.slane %v911, %v971
        %974 = vbcast.lane.c.b16.xlu0 %v972, 256
        %v975 = vpop.permute.xlu0 %974
        %v976 = vlaneseq
        %v977 = vshrl.u32 %v976, 7
        %v978 = vsub.s32 5, %v977
        %v979 = vrot.slane %v901, %v978
        %981 = vbcast.lane.c.b16.xlu0 %v979, 256
        %v982 = vpop.permute.xlu0 %981
        %v983 = vlaneseq
        %v984 = vshrl.u32 %v983, 7
        %v985 = vsub.s32 5, %v984
        %v986 = vrot.slane %v911, %v985
        %988 = vbcast.lane.c.b16.xlu0 %v986, 256
        %v989 = vpop.permute.xlu0 %988
        %v990 = vlaneseq
        %v991 = vshrl.u32 %v990, 7
        %v992 = vsub.s32 6, %v991
        %v993 = vrot.slane %v901, %v992
        %995 = vbcast.lane.c.b16.xlu0 %v993, 256
        %v996 = vpop.permute.xlu0 %995
        %v997 = vlaneseq
        %v998 = vshrl.u32 %v997, 7
        %v999 = vsub.s32 6, %v998
        %v1000 = vrot.slane %v911, %v999
        %1002 = vbcast.lane.c.b16.xlu0 %v1000, 256
        %v1003 = vpop.permute.xlu0 %1002
        %v1004 = vlaneseq
        %v1005 = vshrl.u32 %v1004, 7
        %v1006 = vsub.s32 7, %v1005
        %v1007 = vrot.slane %v901, %v1006
        %1009 = vbcast.lane.c.b16.xlu0 %v1007, 256
        %v1010 = vpop.permute.xlu0 %1009
        %v1011 = vlaneseq
        %v1012 = vshrl.u32 %v1011, 7
        %v1013 = vsub.s32 7, %v1012
        %v1014 = vrot.slane %v911, %v1013
        %1016 = vbcast.lane.c.b16.xlu0 %v1014, 256
        %v1017 = vpop.permute.xlu0 %1016
        %v1019 = vcombine.high %v899, %v899
        %v1021 = vunpack.c.l.s4 1966171168
        %v1022 = vunpack.c.0.s8 %v1021
        %v1023 = vlaneseq
        %v1024 = vshrl.u32 %v1023, 7
        %v1025 = vsub.s32 %v1022, %v1024
        %v1026 = vrot.slane %v899, %v1025
        %v1028 = vunpack.c.l.s4 1966171168
        %v1029 = vunpack.c.0.s8 %v1028
        %v1030 = vlaneseq
        %v1031 = vshrl.u32 %v1030, 7
        %v1032 = vsub.s32 %v1029, %v1031
        %v1033 = vrot.slane %v1019, %v1032
        %v1034 = vcombine.high %v1026, %v1026
        %v1035 = vcombine.high %v1033, %v1033
        %v1037 = vunpack.c.l.s4 1966171168
        %v1038 = vunpack.c.0.s8 %v1037
        %v1039 = vlaneseq
        %v1040 = vshrl.u32 %v1039, 7
        %v1041 = vsub.s32 %v1038, %v1040
        %v1042 = vrot.slane %v1026, %v1041
        %v1044 = vunpack.c.l.s4 1966171168
        %v1045 = vunpack.c.0.s8 %v1044
        %v1046 = vlaneseq
        %v1047 = vshrl.u32 %v1046, 7
        %v1048 = vsub.s32 %v1045, %v1047
        %v1049 = vrot.slane %v1033, %v1048
        %v1051 = vunpack.c.l.s4 1966171168
        %v1052 = vunpack.c.0.s8 %v1051
        %v1053 = vlaneseq
        %v1054 = vshrl.u32 %v1053, 7
        %v1055 = vsub.s32 %v1052, %v1054
        %v1056 = vrot.slane %v1034, %v1055
        %v1058 = vunpack.c.l.s4 1966171168
        %v1059 = vunpack.c.0.s8 %v1058
        %v1060 = vlaneseq
        %v1061 = vshrl.u32 %v1060, 7
        %v1062 = vsub.s32 %v1059, %v1061
        %v1063 = vrot.slane %v1035, %v1062
        %v1064 = vcombine.high %v1042, %v1042
        %v1065 = vcombine.high %v1049, %v1049
        %v1066 = vcombine.high %v1056, %v1056
        %v1067 = vcombine.high %v1063, %v1063
        %v1068 = vunpack.i.l.s16 %v1042
        %v1069 = vunpack.i.h.s16 %v1042
        %v1070 = vunpack.i.l.s16 %v1056
        %v1071 = vunpack.i.h.s16 %v1056
        %v1072 = vunpack.i.l.s16 %v1064
        %v1073 = vunpack.i.h.s16 %v1064
        %v1074 = vunpack.i.l.s16 %v1066
        %v1075 = vunpack.i.h.s16 %v1066
        %v1076 = vunpack.i.l.s16 %v1049
        %v1077 = vunpack.i.h.s16 %v1049
        %v1078 = vunpack.i.l.s16 %v1063
        %v1079 = vunpack.i.h.s16 %v1063
        %v1080 = vunpack.i.l.s16 %v1065
        %v1081 = vunpack.i.h.s16 %v1065
        %v1082 = vunpack.i.l.s16 %v1067
        %v1083 = vunpack.i.h.s16 %v1067
        %v1084 = vpack.i.b16 %v1068, %v1068
        %v1085 = vpack.i.b16 %v1069, %v1069
        %v1086 = vpack.i.b16 %v1070, %v1070
        %v1087 = vpack.i.b16 %v1071, %v1071
        %v1088 = vpack.i.b16 %v1072, %v1072
        %v1089 = vpack.i.b16 %v1073, %v1073
        %v1090 = vpack.i.b16 %v1074, %v1074
        %v1091 = vpack.i.b16 %v1075, %v1075
        %v1092 = vpack.i.b16 %v1076, %v1076
        %v1093 = vpack.i.b16 %v1077, %v1077
        %v1094 = vpack.i.b16 %v1078, %v1078
        %v1095 = vpack.i.b16 %v1079, %v1079
        %v1096 = vpack.i.b16 %v1080, %v1080
        %v1097 = vpack.i.b16 %v1081, %v1081
        %v1098 = vpack.i.b16 %v1082, %v1082
        %v1099 = vpack.i.b16 %v1083, %v1083
        %v1100 = vlaneseq
        %v1101 = vshrl.u32 %v1100, 7
        %v1102 = vsub.s32 0, %v1101
        %v1103 = vrot.slane %v1084, %v1102
        %v1104 = vlaneseq
        %v1105 = vshrl.u32 %v1104, 7
        %v1106 = vsub.s32 0, %v1105
        %v1107 = vrot.slane %v1085, %v1106
        %v1108 = vlaneseq
        %v1109 = vshrl.u32 %v1108, 7
        %v1110 = vsub.s32 0, %v1109
        %v1111 = vrot.slane %v1086, %v1110
        %v1112 = vlaneseq
        %v1113 = vshrl.u32 %v1112, 7
        %v1114 = vsub.s32 0, %v1113
        %v1115 = vrot.slane %v1087, %v1114
        %v1116 = vlaneseq
        %v1117 = vshrl.u32 %v1116, 7
        %v1118 = vsub.s32 0, %v1117
        %v1119 = vrot.slane %v1088, %v1118
        %v1120 = vlaneseq
        %v1121 = vshrl.u32 %v1120, 7
        %v1122 = vsub.s32 0, %v1121
        %v1123 = vrot.slane %v1089, %v1122
        %v1124 = vlaneseq
        %v1125 = vshrl.u32 %v1124, 7
        %v1126 = vsub.s32 0, %v1125
        %v1127 = vrot.slane %v1090, %v1126
        %v1128 = vlaneseq
        %v1129 = vshrl.u32 %v1128, 7
        %v1130 = vsub.s32 0, %v1129
        %v1131 = vrot.slane %v1091, %v1130
        %v1132 = vlaneseq
        %v1133 = vshrl.u32 %v1132, 7
        %v1134 = vsub.s32 0, %v1133
        %v1135 = vrot.slane %v1092, %v1134
        %v1136 = vlaneseq
        %v1137 = vshrl.u32 %v1136, 7
        %v1138 = vsub.s32 0, %v1137
        %v1139 = vrot.slane %v1093, %v1138
        %v1140 = vlaneseq
        %v1141 = vshrl.u32 %v1140, 7
        %v1142 = vsub.s32 0, %v1141
        %v1143 = vrot.slane %v1094, %v1142
        %v1144 = vlaneseq
        %v1145 = vshrl.u32 %v1144, 7
        %v1146 = vsub.s32 0, %v1145
        %v1147 = vrot.slane %v1095, %v1146
        %v1148 = vlaneseq
        %v1149 = vshrl.u32 %v1148, 7
        %v1150 = vsub.s32 0, %v1149
        %v1151 = vrot.slane %v1096, %v1150
        %v1152 = vlaneseq
        %v1153 = vshrl.u32 %v1152, 7
        %v1154 = vsub.s32 0, %v1153
        %v1155 = vrot.slane %v1097, %v1154
        %v1156 = vlaneseq
        %v1157 = vshrl.u32 %v1156, 7
        %v1158 = vsub.s32 0, %v1157
        %v1159 = vrot.slane %v1098, %v1158
        %v1160 = vlaneseq
        %v1161 = vshrl.u32 %v1160, 7
        %v1162 = vsub.s32 0, %v1161
        %v1163 = vrot.slane %v1099, %v1162
        %v1165 = vpack.i.b16 %v1103, %v1103
        %v1167 = vlaneseq
        %v1168 = vshrl.u32 %v1167, 7
        %v1169 = vsub.s32 0, %v1168
        %v1170 = vrot.slane %v1165, %v1169
        %v1172 = vpack.i.b16 %v1107, %v1107
        %v1174 = vlaneseq
        %v1175 = vshrl.u32 %v1174, 7
        %v1176 = vsub.s32 0, %v1175
        %v1177 = vrot.slane %v1172, %v1176
        %v1179 = vpack.i.b16 %v1111, %v1111
        %v1181 = vlaneseq
        %v1182 = vshrl.u32 %v1181, 7
        %v1183 = vsub.s32 0, %v1182
        %v1184 = vrot.slane %v1179, %v1183
        %v1186 = vpack.i.b16 %v1115, %v1115
        %v1188 = vlaneseq
        %v1189 = vshrl.u32 %v1188, 7
        %v1190 = vsub.s32 0, %v1189
        %v1191 = vrot.slane %v1186, %v1190
        %v1193 = vpack.i.b16 %v1119, %v1119
        %v1195 = vlaneseq
        %v1196 = vshrl.u32 %v1195, 7
        %v1197 = vsub.s32 0, %v1196
        %v1198 = vrot.slane %v1193, %v1197
        %v1200 = vpack.i.b16 %v1123, %v1123
        %v1202 = vlaneseq
        %v1203 = vshrl.u32 %v1202, 7
        %v1204 = vsub.s32 0, %v1203
        %v1205 = vrot.slane %v1200, %v1204
        %v1207 = vpack.i.b16 %v1127, %v1127
        %v1209 = vlaneseq
        %v1210 = vshrl.u32 %v1209, 7
        %v1211 = vsub.s32 0, %v1210
        %v1212 = vrot.slane %v1207, %v1211
        %v1214 = vpack.i.b16 %v1131, %v1131
        %v1216 = vlaneseq
        %v1217 = vshrl.u32 %v1216, 7
        %v1218 = vsub.s32 0, %v1217
        %v1219 = vrot.slane %v1214, %v1218
        %v1221 = vpack.i.b16 %v1135, %v1135
        %v1223 = vlaneseq
        %v1224 = vshrl.u32 %v1223, 7
        %v1225 = vsub.s32 0, %v1224
        %v1226 = vrot.slane %v1221, %v1225
        %v1228 = vpack.i.b16 %v1139, %v1139
        %v1230 = vlaneseq
        %v1231 = vshrl.u32 %v1230, 7
        %v1232 = vsub.s32 0, %v1231
        %v1233 = vrot.slane %v1228, %v1232
        %v1235 = vpack.i.b16 %v1143, %v1143
        %v1237 = vlaneseq
        %v1238 = vshrl.u32 %v1237, 7
        %v1239 = vsub.s32 0, %v1238
        %v1240 = vrot.slane %v1235, %v1239
        %v1242 = vpack.i.b16 %v1147, %v1147
        %v1244 = vlaneseq
        %v1245 = vshrl.u32 %v1244, 7
        %v1246 = vsub.s32 0, %v1245
        %v1247 = vrot.slane %v1242, %v1246
        %v1249 = vpack.i.b16 %v1151, %v1151
        %v1251 = vlaneseq
        %v1252 = vshrl.u32 %v1251, 7
        %v1253 = vsub.s32 0, %v1252
        %v1254 = vrot.slane %v1249, %v1253
        %v1256 = vpack.i.b16 %v1155, %v1155
        %v1258 = vlaneseq
        %v1259 = vshrl.u32 %v1258, 7
        %v1260 = vsub.s32 0, %v1259
        %v1261 = vrot.slane %v1256, %v1260
        %v1263 = vpack.i.b16 %v1159, %v1159
        %v1265 = vlaneseq
        %v1266 = vshrl.u32 %v1265, 7
        %v1267 = vsub.s32 0, %v1266
        %v1268 = vrot.slane %v1263, %v1267
        %v1270 = vpack.i.b16 %v1163, %v1163
        %v1272 = vlaneseq
        %v1273 = vshrl.u32 %v1272, 7
        %v1274 = vsub.s32 0, %v1273
        %v1275 = vrot.slane %v1270, %v1274
        %v1276 = vmul.bf16 %v909, %v1170
        %v1277 = vmul.bf16 %v919, %v1177
        %v1278 = vmul.bf16 %v926, %v1184
        %v1279 = vmul.bf16 %v933, %v1191
        %v1280 = vmul.bf16 %v940, %v1198
        %v1281 = vmul.bf16 %v947, %v1205
        %v1282 = vmul.bf16 %v954, %v1212
        %v1283 = vmul.bf16 %v961, %v1219
        %v1284 = vmul.bf16 %v968, %v1226
        %v1285 = vmul.bf16 %v975, %v1233
        %v1286 = vmul.bf16 %v982, %v1240
        %v1287 = vmul.bf16 %v989, %v1247
        %v1288 = vmul.bf16 %v996, %v1254
        %v1289 = vmul.bf16 %v1003, %v1261
        %v1290 = vmul.bf16 %v1010, %v1268
        %v1291 = vmul.bf16 %v1017, %v1275
        %v1292 = vcombine.low %v1276, %v1280
        %v1293 = vcombine.high %v1276, %v1280
        %v1295 = vunpack.c.l.s4 1983009808
        %v1296 = vunpack.c.0.s8 %v1295
        %v1297 = vlaneseq
        %v1298 = vshrl.u32 %v1297, 7
        %v1299 = vsub.s32 %v1296, %v1298
        %v1300 = vrot.slane %v1292, %v1299
        %v1302 = vunpack.c.l.s4 1983009808
        %v1303 = vunpack.c.0.s8 %v1302
        %v1304 = vlaneseq
        %v1305 = vshrl.u32 %v1304, 7
        %v1306 = vsub.s32 %v1303, %v1305
        %v1307 = vrot.slane %v1293, %v1306
        %v1308 = vcombine.low %v1278, %v1282
        %v1309 = vcombine.high %v1278, %v1282
        %v1311 = vunpack.c.l.s4 1983009808
        %v1312 = vunpack.c.0.s8 %v1311
        %v1313 = vlaneseq
        %v1314 = vshrl.u32 %v1313, 7
        %v1315 = vsub.s32 %v1312, %v1314
        %v1316 = vrot.slane %v1308, %v1315
        %v1318 = vunpack.c.l.s4 1983009808
        %v1319 = vunpack.c.0.s8 %v1318
        %v1320 = vlaneseq
        %v1321 = vshrl.u32 %v1320, 7
        %v1322 = vsub.s32 %v1319, %v1321
        %v1323 = vrot.slane %v1309, %v1322
        %v1324 = vcombine.low %v1284, %v1288
        %v1325 = vcombine.high %v1284, %v1288
        %v1327 = vunpack.c.l.s4 1983009808
        %v1328 = vunpack.c.0.s8 %v1327
        %v1329 = vlaneseq
        %v1330 = vshrl.u32 %v1329, 7
        %v1331 = vsub.s32 %v1328, %v1330
        %v1332 = vrot.slane %v1324, %v1331
        %v1334 = vunpack.c.l.s4 1983009808
        %v1335 = vunpack.c.0.s8 %v1334
        %v1336 = vlaneseq
        %v1337 = vshrl.u32 %v1336, 7
        %v1338 = vsub.s32 %v1335, %v1337
        %v1339 = vrot.slane %v1325, %v1338
        %v1340 = vcombine.low %v1286, %v1290
        %v1341 = vcombine.high %v1286, %v1290
        %v1343 = vunpack.c.l.s4 1983009808
        %v1344 = vunpack.c.0.s8 %v1343
        %v1345 = vlaneseq
        %v1346 = vshrl.u32 %v1345, 7
        %v1347 = vsub.s32 %v1344, %v1346
        %v1348 = vrot.slane %v1340, %v1347
        %v1350 = vunpack.c.l.s4 1983009808
        %v1351 = vunpack.c.0.s8 %v1350
        %v1352 = vlaneseq
        %v1353 = vshrl.u32 %v1352, 7
        %v1354 = vsub.s32 %v1351, %v1353
        %v1355 = vrot.slane %v1341, %v1354
        %v1356 = vcombine.low %v1300, %v1316
        %v1357 = vcombine.high %v1300, %v1316
        %v1359 = vunpack.c.l.s4 1934713408
        %v1360 = vunpack.c.0.s8 %v1359
        %v1361 = vlaneseq
        %v1362 = vshrl.u32 %v1361, 7
        %v1363 = vsub.s32 %v1360, %v1362
        %v1364 = vrot.slane %v1356, %v1363
        %v1366 = vunpack.c.l.s4 1934713408
        %v1367 = vunpack.c.0.s8 %v1366
        %v1368 = vlaneseq
        %v1369 = vshrl.u32 %v1368, 7
        %v1370 = vsub.s32 %v1367, %v1369
        %v1371 = vrot.slane %v1357, %v1370
        %v1372 = vcombine.low %v1307, %v1323
        %v1373 = vcombine.high %v1307, %v1323
        %v1375 = vunpack.c.l.s4 1934713408
        %v1376 = vunpack.c.0.s8 %v1375
        %v1377 = vlaneseq
        %v1378 = vshrl.u32 %v1377, 7
        %v1379 = vsub.s32 %v1376, %v1378
        %v1380 = vrot.slane %v1372, %v1379
        %v1382 = vunpack.c.l.s4 1934713408
        %v1383 = vunpack.c.0.s8 %v1382
        %v1384 = vlaneseq
        %v1385 = vshrl.u32 %v1384, 7
        %v1386 = vsub.s32 %v1383, %v1385
        %v1387 = vrot.slane %v1373, %v1386
        %v1388 = vcombine.low %v1332, %v1348
        %v1389 = vcombine.high %v1332, %v1348
        %v1391 = vunpack.c.l.s4 1934713408
        %v1392 = vunpack.c.0.s8 %v1391
        %v1393 = vlaneseq
        %v1394 = vshrl.u32 %v1393, 7
        %v1395 = vsub.s32 %v1392, %v1394
        %v1396 = vrot.slane %v1388, %v1395
        %v1398 = vunpack.c.l.s4 1934713408
        %v1399 = vunpack.c.0.s8 %v1398
        %v1400 = vlaneseq
        %v1401 = vshrl.u32 %v1400, 7
        %v1402 = vsub.s32 %v1399, %v1401
        %v1403 = vrot.slane %v1389, %v1402
        %v1404 = vcombine.low %v1339, %v1355
        %v1405 = vcombine.high %v1339, %v1355
        %v1407 = vunpack.c.l.s4 1934713408
        %v1408 = vunpack.c.0.s8 %v1407
        %v1409 = vlaneseq
        %v1410 = vshrl.u32 %v1409, 7
        %v1411 = vsub.s32 %v1408, %v1410
        %v1412 = vrot.slane %v1404, %v1411
        %v1414 = vunpack.c.l.s4 1934713408
        %v1415 = vunpack.c.0.s8 %v1414
        %v1416 = vlaneseq
        %v1417 = vshrl.u32 %v1416, 7
        %v1418 = vsub.s32 %v1415, %v1417
        %v1419 = vrot.slane %v1405, %v1418
        %v1420 = vcombine.low %v1364, %v1396
        %v1421 = vcombine.high %v1364, %v1396
        %v1422 = vcombine.low %v1371, %v1403
        %v1423 = vcombine.high %v1371, %v1403
        %v1424 = vcombine.low %v1380, %v1412
        %v1425 = vcombine.high %v1380, %v1412
        %v1426 = vcombine.low %v1387, %v1419
        %v1427 = vcombine.high %v1387, %v1419
        %v1428 = vcombine.low %v1277, %v1281
        %v1429 = vcombine.high %v1277, %v1281
        %v1431 = vunpack.c.l.s4 1983009808
        %v1432 = vunpack.c.0.s8 %v1431
        %v1433 = vlaneseq
        %v1434 = vshrl.u32 %v1433, 7
        %v1435 = vsub.s32 %v1432, %v1434
        %v1436 = vrot.slane %v1428, %v1435
        %v1438 = vunpack.c.l.s4 1983009808
        %v1439 = vunpack.c.0.s8 %v1438
        %v1440 = vlaneseq
        %v1441 = vshrl.u32 %v1440, 7
        %v1442 = vsub.s32 %v1439, %v1441
        %v1443 = vrot.slane %v1429, %v1442
        %v1444 = vcombine.low %v1279, %v1283
        %v1445 = vcombine.high %v1279, %v1283
        %v1447 = vunpack.c.l.s4 1983009808
        %v1448 = vunpack.c.0.s8 %v1447
        %v1449 = vlaneseq
        %v1450 = vshrl.u32 %v1449, 7
        %v1451 = vsub.s32 %v1448, %v1450
        %v1452 = vrot.slane %v1444, %v1451
        %v1454 = vunpack.c.l.s4 1983009808
        %v1455 = vunpack.c.0.s8 %v1454
        %v1456 = vlaneseq
        %v1457 = vshrl.u32 %v1456, 7
        %v1458 = vsub.s32 %v1455, %v1457
        %v1459 = vrot.slane %v1445, %v1458
        %v1460 = vcombine.low %v1285, %v1289
        %v1461 = vcombine.high %v1285, %v1289
        %v1463 = vunpack.c.l.s4 1983009808
        %v1464 = vunpack.c.0.s8 %v1463
        %v1465 = vlaneseq
        %v1466 = vshrl.u32 %v1465, 7
        %v1467 = vsub.s32 %v1464, %v1466
        %v1468 = vrot.slane %v1460, %v1467
        %v1470 = vunpack.c.l.s4 1983009808
        %v1471 = vunpack.c.0.s8 %v1470
        %v1472 = vlaneseq
        %v1473 = vshrl.u32 %v1472, 7
        %v1474 = vsub.s32 %v1471, %v1473
        %v1475 = vrot.slane %v1461, %v1474
        %v1476 = vcombine.low %v1287, %v1291
        %v1477 = vcombine.high %v1287, %v1291
        %v1479 = vunpack.c.l.s4 1983009808
        %v1480 = vunpack.c.0.s8 %v1479
        %v1481 = vlaneseq
        %v1482 = vshrl.u32 %v1481, 7
        %v1483 = vsub.s32 %v1480, %v1482
        %v1484 = vrot.slane %v1476, %v1483
        %v1486 = vunpack.c.l.s4 1983009808
        %v1487 = vunpack.c.0.s8 %v1486
        %v1488 = vlaneseq
        %v1489 = vshrl.u32 %v1488, 7
        %v1490 = vsub.s32 %v1487, %v1489
        %v1491 = vrot.slane %v1477, %v1490
        %v1492 = vcombine.low %v1436, %v1452
        %v1493 = vcombine.high %v1436, %v1452
        %v1495 = vunpack.c.l.s4 1934713408
        %v1496 = vunpack.c.0.s8 %v1495
        %v1497 = vlaneseq
        %v1498 = vshrl.u32 %v1497, 7
        %v1499 = vsub.s32 %v1496, %v1498
        %v1500 = vrot.slane %v1492, %v1499
        %v1502 = vunpack.c.l.s4 1934713408
        %v1503 = vunpack.c.0.s8 %v1502
        %v1504 = vlaneseq
        %v1505 = vshrl.u32 %v1504, 7
        %v1506 = vsub.s32 %v1503, %v1505
        %v1507 = vrot.slane %v1493, %v1506
        %v1508 = vcombine.low %v1443, %v1459
        %v1509 = vcombine.high %v1443, %v1459
        %v1511 = vunpack.c.l.s4 1934713408
        %v1512 = vunpack.c.0.s8 %v1511
        %v1513 = vlaneseq
        %v1514 = vshrl.u32 %v1513, 7
        %v1515 = vsub.s32 %v1512, %v1514
        %v1516 = vrot.slane %v1508, %v1515
        %v1518 = vunpack.c.l.s4 1934713408
        %v1519 = vunpack.c.0.s8 %v1518
        %v1520 = vlaneseq
        %v1521 = vshrl.u32 %v1520, 7
        %v1522 = vsub.s32 %v1519, %v1521
        %v1523 = vrot.slane %v1509, %v1522
        %v1524 = vcombine.low %v1468, %v1484
        %v1525 = vcombine.high %v1468, %v1484
        %v1527 = vunpack.c.l.s4 1934713408
        %v1528 = vunpack.c.0.s8 %v1527
        %v1529 = vlaneseq
        %v1530 = vshrl.u32 %v1529, 7
        %v1531 = vsub.s32 %v1528, %v1530
        %v1532 = vrot.slane %v1524, %v1531
        %v1534 = vunpack.c.l.s4 1934713408
        %v1535 = vunpack.c.0.s8 %v1534
        %v1536 = vlaneseq
        %v1537 = vshrl.u32 %v1536, 7
        %v1538 = vsub.s32 %v1535, %v1537
        %v1539 = vrot.slane %v1525, %v1538
        %v1540 = vcombine.low %v1475, %v1491
        %v1541 = vcombine.high %v1475, %v1491
        %v1543 = vunpack.c.l.s4 1934713408
        %v1544 = vunpack.c.0.s8 %v1543
        %v1545 = vlaneseq
        %v1546 = vshrl.u32 %v1545, 7
        %v1547 = vsub.s32 %v1544, %v1546
        %v1548 = vrot.slane %v1540, %v1547
        %v1550 = vunpack.c.l.s4 1934713408
        %v1551 = vunpack.c.0.s8 %v1550
        %v1552 = vlaneseq
        %v1553 = vshrl.u32 %v1552, 7
        %v1554 = vsub.s32 %v1551, %v1553
        %v1555 = vrot.slane %v1541, %v1554
        %v1556 = vcombine.low %v1500, %v1532
        %v1557 = vcombine.high %v1500, %v1532
        %v1558 = vcombine.low %v1507, %v1539
        %v1559 = vcombine.high %v1507, %v1539
        %v1560 = vcombine.low %v1516, %v1548
        %v1561 = vcombine.high %v1516, %v1548
        %v1562 = vcombine.low %v1523, %v1555
        %v1563 = vcombine.high %v1523, %v1555
        %v1566 = vpack.i.b16 %v1556, %v1420
        %v1567 = vshrl.u32 %v1420, 16
        %v1568 = vshrl.u32 %v1556, 16
        %v1569 = vpack.i.b16 %v1568, %v1567
        %v1572 = vpack.i.b16 %v1557, %v1421
        %v1573 = vshrl.u32 %v1421, 16
        %v1574 = vshrl.u32 %v1557, 16
        %v1575 = vpack.i.b16 %v1574, %v1573
        %v1578 = vpack.i.b16 %v1558, %v1422
        %v1579 = vshrl.u32 %v1422, 16
        %v1580 = vshrl.u32 %v1558, 16
        %v1581 = vpack.i.b16 %v1580, %v1579
        %v1584 = vpack.i.b16 %v1559, %v1423
        %v1585 = vshrl.u32 %v1423, 16
        %v1586 = vshrl.u32 %v1559, 16
        %v1587 = vpack.i.b16 %v1586, %v1585
        %v1590 = vpack.i.b16 %v1560, %v1424
        %v1591 = vshrl.u32 %v1424, 16
        %v1592 = vshrl.u32 %v1560, 16
        %v1593 = vpack.i.b16 %v1592, %v1591
        %v1596 = vpack.i.b16 %v1561, %v1425
        %v1597 = vshrl.u32 %v1425, 16
        %v1598 = vshrl.u32 %v1561, 16
        %v1599 = vpack.i.b16 %v1598, %v1597
        %v1602 = vpack.i.b16 %v1562, %v1426
        %v1603 = vshrl.u32 %v1426, 16
        %v1604 = vshrl.u32 %v1562, 16
        %v1605 = vpack.i.b16 %v1604, %v1603
        %v1608 = vpack.i.b16 %v1563, %v1427
        %v1609 = vshrl.u32 %v1427, 16
        %v1610 = vshrl.u32 %v1563, 16
        %v1611 = vpack.i.b16 %v1610, %v1609
        %1612 = vrot.lane.b32.xlu0 %v1569, 16
        %v1613 = vpop.permute.xlu0 %1612
        %1614 = vrot.lane.b32.xlu0 %v1572, 32
        %v1615 = vpop.permute.xlu0 %1614
        %1616 = vrot.lane.b32.xlu0 %v1575, 48
        %v1617 = vpop.permute.xlu0 %1616
        %1618 = vrot.lane.b32.xlu0 %v1578, 64
        %v1619 = vpop.permute.xlu0 %1618
        %1620 = vrot.lane.b32.xlu0 %v1581, 80
        %v1621 = vpop.permute.xlu0 %1620
        %1622 = vrot.lane.b32.xlu0 %v1584, 96
        %v1623 = vpop.permute.xlu0 %1622
        %1624 = vrot.lane.b32.xlu0 %v1587, 112
        %v1625 = vpop.permute.xlu0 %1624
        %1626 = vrot.lane.b32.xlu0 %v1593, 16
        %v1627 = vpop.permute.xlu0 %1626
        %1628 = vrot.lane.b32.xlu0 %v1596, 32
        %v1629 = vpop.permute.xlu0 %1628
        %1630 = vrot.lane.b32.xlu0 %v1599, 48
        %v1631 = vpop.permute.xlu0 %1630
        %1632 = vrot.lane.b32.xlu0 %v1602, 64
        %v1633 = vpop.permute.xlu0 %1632
        %1634 = vrot.lane.b32.xlu0 %v1605, 80
        %v1635 = vpop.permute.xlu0 %1634
        %1636 = vrot.lane.b32.xlu0 %v1608, 96
        %v1637 = vpop.permute.xlu0 %1636
        %1638 = vrot.lane.b32.xlu0 %v1611, 112
        %v1639 = vpop.permute.xlu0 %1638
        %vm1640 = vcmask 130048
        %v1643 = vsel %vm1640, %v1566, %v1613
        %v1645 = vsel %vm520, %v1643, %v1615
        %vm1646 = vcmask 392192
        %v1648 = vsel %vm1646, %v1645, %v1617
        %vm1649 = vcmask 523264
        %v1651 = vsel %vm1649, %v1648, %v1619
        %vm1652 = vcmask 654336
        %v1654 = vsel %vm1652, %v1651, %v1621
        %vm1655 = vcmask 785408
        %v1657 = vsel %vm1655, %v1654, %v1623
        %vm1658 = vcmask 916480
        %v1660 = vsel %vm1658, %v1657, %v1625
        %v1664 = vsel %vm1640, %v1590, %v1627
        %v1666 = vsel %vm520, %v1664, %v1629
        %v1668 = vsel %vm1646, %v1666, %v1631
        %v1670 = vsel %vm1649, %v1668, %v1633
        %v1672 = vsel %vm1652, %v1670, %v1635
        %v1674 = vsel %vm1655, %v1672, %v1637
        %v1676 = vsel %vm1658, %v1674, %v1639
        %v1678 = vld [vmem:[#allocation2 + $0x10] sm:$0xf]
        %v1679 = vld [vmem:[#allocation2 + $0x14] sm:$0xf]
        %v1680 = vld [vmem:[#allocation2 + $0x18] sm:$0xf]
        %v1681 = vld [vmem:[#allocation2 + $0x1c] sm:$0xf]
        %v1682 = vld [vmem:[#allocation2 + $0x20] sm:$0xf]
        %v1683 = vld [vmem:[#allocation2 + $0x24] sm:$0xf]
        %v1684 = vld [vmem:[#allocation2 + $0x28] sm:$0xf]
        %v1685 = vld [vmem:[#allocation2 + $0x2c] sm:$0xf]
        %v1686 = vld [vmem:[#allocation2 + $0x30] sm:$0xf]
        %v1687 = vld [vmem:[#allocation2 + $0x34] sm:$0xf]
        %v1688 = vld [vmem:[#allocation2 + $0x38] sm:$0xf]
        %v1689 = vld [vmem:[#allocation2 + $0x3c] sm:$0xf]
        %v1690 = vld [vmem:[#allocation2 + $0x40] sm:$0xf]
        %v1691 = vld [vmem:[#allocation2 + $0x44] sm:$0xf]
        %v1692 = vld [vmem:[#allocation2 + $0x48] sm:$0xf]
        %v1693 = vld [vmem:[#allocation2 + $0x4c] sm:$0xf]
        %v1694 = vld [vmem:[#allocation2 + $0x50] sm:$0xf]
        %v1695 = vld [vmem:[#allocation2 + $0x54] sm:$0xf]
        %v1696 = vld [vmem:[#allocation2 + $0x58] sm:$0xf]
        %v1697 = vld [vmem:[#allocation2 + $0x5c] sm:$0xf]
        %v1698 = vld [vmem:[#allocation2 + $0x60] sm:$0xf]
        %v1699 = vld [vmem:[#allocation2 + $0x64] sm:$0xf]
        %v1700 = vld [vmem:[#allocation2 + $0x68] sm:$0xf]
        %v1701 = vld [vmem:[#allocation2 + $0x6c] sm:$0xf]
        %v1702 = vld [vmem:[#allocation2 + $0x70] sm:$0xf]
        %v1703 = vld [vmem:[#allocation2 + $0x74] sm:$0xf]
        %v1704 = vld [vmem:[#allocation2 + $0x78] sm:$0xf]
        %v1705 = vld [vmem:[#allocation2 + $0x7c] sm:$0xf]
        %v1706 = vld [vmem:[#allocation2 + $0x80] sm:$0xf]
        %v1707 = vld [vmem:[#allocation2 + $0x84] sm:$0xf]
        %v1708 = vld [vmem:[#allocation2 + $0x88] sm:$0xf]
        %v1709 = vld [vmem:[#allocation2 + $0x8c] sm:$0xf]
        %s1711 = sor.u32 256, 16
        %1712 = vbcast.lane.c.b16.xlu0 %v906, %s1711
        %v1713 = vpop.permute.xlu0 %1712
        %s1715 = sor.u32 256, 16
        %1716 = vbcast.lane.c.b16.xlu0 %v916, %s1715
        %v1717 = vpop.permute.xlu0 %1716
        %s1719 = sor.u32 256, 16
        %1720 = vbcast.lane.c.b16.xlu0 %v923, %s1719
        %v1721 = vpop.permute.xlu0 %1720
        %s1723 = sor.u32 256, 16
        %1724 = vbcast.lane.c.b16.xlu0 %v930, %s1723
        %v1725 = vpop.permute.xlu0 %1724
        %s1727 = sor.u32 256, 16
        %1728 = vbcast.lane.c.b16.xlu0 %v937, %s1727
        %v1729 = vpop.permute.xlu0 %1728
        %s1731 = sor.u32 256, 16
        %1732 = vbcast.lane.c.b16.xlu0 %v944, %s1731
        %v1733 = vpop.permute.xlu0 %1732
        %s1735 = sor.u32 256, 16
        %1736 = vbcast.lane.c.b16.xlu0 %v951, %s1735
        %v1737 = vpop.permute.xlu0 %1736
        %s1739 = sor.u32 256, 16
        %1740 = vbcast.lane.c.b16.xlu0 %v958, %s1739
        %v1741 = vpop.permute.xlu0 %1740
        %s1743 = sor.u32 256, 16
        %1744 = vbcast.lane.c.b16.xlu0 %v965, %s1743
        %v1745 = vpop.permute.xlu0 %1744
        %s1747 = sor.u32 256, 16
        %1748 = vbcast.lane.c.b16.xlu0 %v972, %s1747
        %v1749 = vpop.permute.xlu0 %1748
        %s1751 = sor.u32 256, 16
        %1752 = vbcast.lane.c.b16.xlu0 %v979, %s1751
        %v1753 = vpop.permute.xlu0 %1752
        %s1755 = sor.u32 256, 16
        %1756 = vbcast.lane.c.b16.xlu0 %v986, %s1755
        %v1757 = vpop.permute.xlu0 %1756
        %s1759 = sor.u32 256, 16
        %1760 = vbcast.lane.c.b16.xlu0 %v993, %s1759
        %v1761 = vpop.permute.xlu0 %1760
        %s1763 = sor.u32 256, 16
        %1764 = vbcast.lane.c.b16.xlu0 %v1000, %s1763
        %v1765 = vpop.permute.xlu0 %1764
        %s1767 = sor.u32 256, 16
        %1768 = vbcast.lane.c.b16.xlu0 %v1007, %s1767
        %v1769 = vpop.permute.xlu0 %1768
        %s1771 = sor.u32 256, 16
        %1772 = vbcast.lane.c.b16.xlu0 %v1014, %s1771
        %v1773 = vpop.permute.xlu0 %1772
        %v1774 = vmul.bf16 %v1713, %v1170
        %v1775 = vmul.bf16 %v1717, %v1177
        %v1776 = vmul.bf16 %v1721, %v1184
        %v1777 = vmul.bf16 %v1725, %v1191
        %v1778 = vmul.bf16 %v1729, %v1198
        %v1779 = vmul.bf16 %v1733, %v1205
        %v1780 = vmul.bf16 %v1737, %v1212
        %v1781 = vmul.bf16 %v1741, %v1219
        %v1782 = vmul.bf16 %v1745, %v1226
        %v1783 = vmul.bf16 %v1749, %v1233
        %v1784 = vmul.bf16 %v1753, %v1240
        %v1785 = vmul.bf16 %v1757, %v1247
        %v1786 = vmul.bf16 %v1761, %v1254
        %v1787 = vmul.bf16 %v1765, %v1261
        %v1788 = vmul.bf16 %v1769, %v1268
        %v1789 = vmul.bf16 %v1773, %v1275
        %1806 = vrot.lane.b32.xlu0 %v1774, 112
        %v1807 = vpop.permute.xlu0 %1806
        %1808 = vrot.lane.b32.xlu0 %v1775, 112
        %v1809 = vpop.permute.xlu0 %1808
        %1810 = vrot.lane.b32.xlu0 %v1776, 112
        %v1811 = vpop.permute.xlu0 %1810
        %1812 = vrot.lane.b32.xlu0 %v1777, 112
        %v1813 = vpop.permute.xlu0 %1812
        %1814 = vrot.lane.b32.xlu0 %v1778, 112
        %v1815 = vpop.permute.xlu0 %1814
        %1816 = vrot.lane.b32.xlu0 %v1779, 112
        %v1817 = vpop.permute.xlu0 %1816
        %1818 = vrot.lane.b32.xlu0 %v1780, 112
        %v1819 = vpop.permute.xlu0 %1818
        %1820 = vrot.lane.b32.xlu0 %v1781, 112
        %v1821 = vpop.permute.xlu0 %1820
        %1822 = vrot.lane.b32.xlu0 %v1782, 112
        %v1823 = vpop.permute.xlu0 %1822
        %1824 = vrot.lane.b32.xlu0 %v1783, 112
        %v1825 = vpop.permute.xlu0 %1824
        %1826 = vrot.lane.b32.xlu0 %v1784, 112
        %v1827 = vpop.permute.xlu0 %1826
        %1828 = vrot.lane.b32.xlu0 %v1785, 112
        %v1829 = vpop.permute.xlu0 %1828
        %1830 = vrot.lane.b32.xlu0 %v1786, 112
        %v1831 = vpop.permute.xlu0 %1830
        %1832 = vrot.lane.b32.xlu0 %v1787, 112
        %v1833 = vpop.permute.xlu0 %1832
        %1834 = vrot.lane.b32.xlu0 %v1788, 112
        %v1835 = vpop.permute.xlu0 %1834
        %1836 = vrot.lane.b32.xlu0 %v1789, 112
        %v1837 = vpop.permute.xlu0 %1836
        %v1854 = vcombine.low %v1807, %v1815
        %v1855 = vcombine.high %v1807, %v1815
        %v1857 = vunpack.c.l.s4 1983009808
        %v1858 = vunpack.c.0.s8 %v1857
        %v1859 = vlaneseq
        %v1860 = vshrl.u32 %v1859, 7
        %v1861 = vsub.s32 %v1858, %v1860
        %v1862 = vrot.slane %v1854, %v1861
        %v1864 = vunpack.c.l.s4 1983009808
        %v1865 = vunpack.c.0.s8 %v1864
        %v1866 = vlaneseq
        %v1867 = vshrl.u32 %v1866, 7
        %v1868 = vsub.s32 %v1865, %v1867
        %v1869 = vrot.slane %v1855, %v1868
        %v1870 = vcombine.low %v1811, %v1819
        %v1871 = vcombine.high %v1811, %v1819
        %v1873 = vunpack.c.l.s4 1983009808
        %v1874 = vunpack.c.0.s8 %v1873
        %v1875 = vlaneseq
        %v1876 = vshrl.u32 %v1875, 7
        %v1877 = vsub.s32 %v1874, %v1876
        %v1878 = vrot.slane %v1870, %v1877
        %v1880 = vunpack.c.l.s4 1983009808
        %v1881 = vunpack.c.0.s8 %v1880
        %v1882 = vlaneseq
        %v1883 = vshrl.u32 %v1882, 7
        %v1884 = vsub.s32 %v1881, %v1883
        %v1885 = vrot.slane %v1871, %v1884
        %v1886 = vcombine.low %v1823, %v1831
        %v1887 = vcombine.high %v1823, %v1831
        %v1889 = vunpack.c.l.s4 1983009808
        %v1890 = vunpack.c.0.s8 %v1889
        %v1891 = vlaneseq
        %v1892 = vshrl.u32 %v1891, 7
        %v1893 = vsub.s32 %v1890, %v1892
        %v1894 = vrot.slane %v1886, %v1893
        %v1896 = vunpack.c.l.s4 1983009808
        %v1897 = vunpack.c.0.s8 %v1896
        %v1898 = vlaneseq
        %v1899 = vshrl.u32 %v1898, 7
        %v1900 = vsub.s32 %v1897, %v1899
        %v1901 = vrot.slane %v1887, %v1900
        %v1902 = vcombine.low %v1827, %v1835
        %v1903 = vcombine.high %v1827, %v1835
        %v1905 = vunpack.c.l.s4 1983009808
        %v1906 = vunpack.c.0.s8 %v1905
        %v1907 = vlaneseq
        %v1908 = vshrl.u32 %v1907, 7
        %v1909 = vsub.s32 %v1906, %v1908
        %v1910 = vrot.slane %v1902, %v1909
        %v1912 = vunpack.c.l.s4 1983009808
        %v1913 = vunpack.c.0.s8 %v1912
        %v1914 = vlaneseq
        %v1915 = vshrl.u32 %v1914, 7
        %v1916 = vsub.s32 %v1913, %v1915
        %v1917 = vrot.slane %v1903, %v1916
        %v1918 = vcombine.low %v1862, %v1878
        %v1919 = vcombine.high %v1862, %v1878
        %v1921 = vunpack.c.l.s4 1934713408
        %v1922 = vunpack.c.0.s8 %v1921
        %v1923 = vlaneseq
        %v1924 = vshrl.u32 %v1923, 7
        %v1925 = vsub.s32 %v1922, %v1924
        %v1926 = vrot.slane %v1918, %v1925
        %v1928 = vunpack.c.l.s4 1934713408
        %v1929 = vunpack.c.0.s8 %v1928
        %v1930 = vlaneseq
        %v1931 = vshrl.u32 %v1930, 7
        %v1932 = vsub.s32 %v1929, %v1931
        %v1933 = vrot.slane %v1919, %v1932
        %v1934 = vcombine.low %v1869, %v1885
        %v1935 = vcombine.high %v1869, %v1885
        %v1937 = vunpack.c.l.s4 1934713408
        %v1938 = vunpack.c.0.s8 %v1937
        %v1939 = vlaneseq
        %v1940 = vshrl.u32 %v1939, 7
        %v1941 = vsub.s32 %v1938, %v1940
        %v1942 = vrot.slane %v1934, %v1941
        %v1944 = vunpack.c.l.s4 1934713408
        %v1945 = vunpack.c.0.s8 %v1944
        %v1946 = vlaneseq
        %v1947 = vshrl.u32 %v1946, 7
        %v1948 = vsub.s32 %v1945, %v1947
        %v1949 = vrot.slane %v1935, %v1948
        %v1950 = vcombine.low %v1894, %v1910
        %v1951 = vcombine.high %v1894, %v1910
        %v1953 = vunpack.c.l.s4 1934713408
        %v1954 = vunpack.c.0.s8 %v1953
        %v1955 = vlaneseq
        %v1956 = vshrl.u32 %v1955, 7
        %v1957 = vsub.s32 %v1954, %v1956
        %v1958 = vrot.slane %v1950, %v1957
        %v1960 = vunpack.c.l.s4 1934713408
        %v1961 = vunpack.c.0.s8 %v1960
        %v1962 = vlaneseq
        %v1963 = vshrl.u32 %v1962, 7
        %v1964 = vsub.s32 %v1961, %v1963
        %v1965 = vrot.slane %v1951, %v1964
        %v1966 = vcombine.low %v1901, %v1917
        %v1967 = vcombine.high %v1901, %v1917
        %v1969 = vunpack.c.l.s4 1934713408
        %v1970 = vunpack.c.0.s8 %v1969
        %v1971 = vlaneseq
        %v1972 = vshrl.u32 %v1971, 7
        %v1973 = vsub.s32 %v1970, %v1972
        %v1974 = vrot.slane %v1966, %v1973
        %v1976 = vunpack.c.l.s4 1934713408
        %v1977 = vunpack.c.0.s8 %v1976
        %v1978 = vlaneseq
        %v1979 = vshrl.u32 %v1978, 7
        %v1980 = vsub.s32 %v1977, %v1979
        %v1981 = vrot.slane %v1967, %v1980
        %v1982 = vcombine.low %v1926, %v1958
        %v1983 = vcombine.high %v1926, %v1958
        %v1984 = vcombine.low %v1933, %v1965
        %v1985 = vcombine.high %v1933, %v1965
        %v1986 = vcombine.low %v1942, %v1974
        %v1987 = vcombine.high %v1942, %v1974
        %v1988 = vcombine.low %v1949, %v1981
        %v1989 = vcombine.high %v1949, %v1981
        %v1990 = vcombine.low %v1809, %v1817
        %v1991 = vcombine.high %v1809, %v1817
        %v1993 = vunpack.c.l.s4 1983009808
        %v1994 = vunpack.c.0.s8 %v1993
        %v1995 = vlaneseq
        %v1996 = vshrl.u32 %v1995, 7
        %v1997 = vsub.s32 %v1994, %v1996
        %v1998 = vrot.slane %v1990, %v1997
        %v2000 = vunpack.c.l.s4 1983009808
        %v2001 = vunpack.c.0.s8 %v2000
        %v2002 = vlaneseq
        %v2003 = vshrl.u32 %v2002, 7
        %v2004 = vsub.s32 %v2001, %v2003
        %v2005 = vrot.slane %v1991, %v2004
        %v2006 = vcombine.low %v1813, %v1821
        %v2007 = vcombine.high %v1813, %v1821
        %v2009 = vunpack.c.l.s4 1983009808
        %v2010 = vunpack.c.0.s8 %v2009
        %v2011 = vlaneseq
        %v2012 = vshrl.u32 %v2011, 7
        %v2013 = vsub.s32 %v2010, %v2012
        %v2014 = vrot.slane %v2006, %v2013
        %v2016 = vunpack.c.l.s4 1983009808
        %v2017 = vunpack.c.0.s8 %v2016
        %v2018 = vlaneseq
        %v2019 = vshrl.u32 %v2018, 7
        %v2020 = vsub.s32 %v2017, %v2019
        %v2021 = vrot.slane %v2007, %v2020
        %v2022 = vcombine.low %v1825, %v1833
        %v2023 = vcombine.high %v1825, %v1833
        %v2025 = vunpack.c.l.s4 1983009808
        %v2026 = vunpack.c.0.s8 %v2025
        %v2027 = vlaneseq
        %v2028 = vshrl.u32 %v2027, 7
        %v2029 = vsub.s32 %v2026, %v2028
        %v2030 = vrot.slane %v2022, %v2029
        %v2032 = vunpack.c.l.s4 1983009808
        %v2033 = vunpack.c.0.s8 %v2032
        %v2034 = vlaneseq
        %v2035 = vshrl.u32 %v2034, 7
        %v2036 = vsub.s32 %v2033, %v2035
        %v2037 = vrot.slane %v2023, %v2036
        %v2038 = vcombine.low %v1829, %v1837
        %v2039 = vcombine.high %v1829, %v1837
        %v2041 = vunpack.c.l.s4 1983009808
        %v2042 = vunpack.c.0.s8 %v2041
        %v2043 = vlaneseq
        %v2044 = vshrl.u32 %v2043, 7
        %v2045 = vsub.s32 %v2042, %v2044
        %v2046 = vrot.slane %v2038, %v2045
        %v2048 = vunpack.c.l.s4 1983009808
        %v2049 = vunpack.c.0.s8 %v2048
        %v2050 = vlaneseq
        %v2051 = vshrl.u32 %v2050, 7
        %v2052 = vsub.s32 %v2049, %v2051
        %v2053 = vrot.slane %v2039, %v2052
        %v2054 = vcombine.low %v1998, %v2014
        %v2055 = vcombine.high %v1998, %v2014
        %v2057 = vunpack.c.l.s4 1934713408
        %v2058 = vunpack.c.0.s8 %v2057
        %v2059 = vlaneseq
        %v2060 = vshrl.u32 %v2059, 7
        %v2061 = vsub.s32 %v2058, %v2060
        %v2062 = vrot.slane %v2054, %v2061
        %v2064 = vunpack.c.l.s4 1934713408
        %v2065 = vunpack.c.0.s8 %v2064
        %v2066 = vlaneseq
        %v2067 = vshrl.u32 %v2066, 7
        %v2068 = vsub.s32 %v2065, %v2067
        %v2069 = vrot.slane %v2055, %v2068
        %v2070 = vcombine.low %v2005, %v2021
        %v2071 = vcombine.high %v2005, %v2021
        %v2073 = vunpack.c.l.s4 1934713408
        %v2074 = vunpack.c.0.s8 %v2073
        %v2075 = vlaneseq
        %v2076 = vshrl.u32 %v2075, 7
        %v2077 = vsub.s32 %v2074, %v2076
        %v2078 = vrot.slane %v2070, %v2077
        %v2080 = vunpack.c.l.s4 1934713408
        %v2081 = vunpack.c.0.s8 %v2080
        %v2082 = vlaneseq
        %v2083 = vshrl.u32 %v2082, 7
        %v2084 = vsub.s32 %v2081, %v2083
        %v2085 = vrot.slane %v2071, %v2084
        %v2086 = vcombine.low %v2030, %v2046
        %v2087 = vcombine.high %v2030, %v2046
        %v2089 = vunpack.c.l.s4 1934713408
        %v2090 = vunpack.c.0.s8 %v2089
        %v2091 = vlaneseq
        %v2092 = vshrl.u32 %v2091, 7
        %v2093 = vsub.s32 %v2090, %v2092
        %v2094 = vrot.slane %v2086, %v2093
        %v2096 = vunpack.c.l.s4 1934713408
        %v2097 = vunpack.c.0.s8 %v2096
        %v2098 = vlaneseq
        %v2099 = vshrl.u32 %v2098, 7
        %v2100 = vsub.s32 %v2097, %v2099
        %v2101 = vrot.slane %v2087, %v2100
        %v2102 = vcombine.low %v2037, %v2053
        %v2103 = vcombine.high %v2037, %v2053
        %v2105 = vunpack.c.l.s4 1934713408
        %v2106 = vunpack.c.0.s8 %v2105
        %v2107 = vlaneseq
        %v2108 = vshrl.u32 %v2107, 7
        %v2109 = vsub.s32 %v2106, %v2108
        %v2110 = vrot.slane %v2102, %v2109
        %v2112 = vunpack.c.l.s4 1934713408
        %v2113 = vunpack.c.0.s8 %v2112
        %v2114 = vlaneseq
        %v2115 = vshrl.u32 %v2114, 7
        %v2116 = vsub.s32 %v2113, %v2115
        %v2117 = vrot.slane %v2103, %v2116
        %v2118 = vcombine.low %v2062, %v2094
        %v2119 = vcombine.high %v2062, %v2094
        %v2120 = vcombine.low %v2069, %v2101
        %v2121 = vcombine.high %v2069, %v2101
        %v2122 = vcombine.low %v2078, %v2110
        %v2123 = vcombine.high %v2078, %v2110
        %v2124 = vcombine.low %v2085, %v2117
        %v2125 = vcombine.high %v2085, %v2117
        %v2128 = vpack.i.b16 %v2118, %v1982
        %v2129 = vshrl.u32 %v1982, 16
        %v2130 = vshrl.u32 %v2118, 16
        %v2131 = vpack.i.b16 %v2130, %v2129
        %v2134 = vpack.i.b16 %v2119, %v1983
        %v2135 = vshrl.u32 %v1983, 16
        %v2136 = vshrl.u32 %v2119, 16
        %v2137 = vpack.i.b16 %v2136, %v2135
        %v2140 = vpack.i.b16 %v2120, %v1984
        %v2141 = vshrl.u32 %v1984, 16
        %v2142 = vshrl.u32 %v2120, 16
        %v2143 = vpack.i.b16 %v2142, %v2141
        %v2146 = vpack.i.b16 %v2121, %v1985
        %v2147 = vshrl.u32 %v1985, 16
        %v2148 = vshrl.u32 %v2121, 16
        %v2149 = vpack.i.b16 %v2148, %v2147
        %v2152 = vpack.i.b16 %v2122, %v1986
        %v2153 = vshrl.u32 %v1986, 16
        %v2154 = vshrl.u32 %v2122, 16
        %v2155 = vpack.i.b16 %v2154, %v2153
        %v2158 = vpack.i.b16 %v2123, %v1987
        %v2159 = vshrl.u32 %v1987, 16
        %v2160 = vshrl.u32 %v2123, 16
        %v2161 = vpack.i.b16 %v2160, %v2159
        %v2164 = vpack.i.b16 %v2124, %v1988
        %v2165 = vshrl.u32 %v1988, 16
        %v2166 = vshrl.u32 %v2124, 16
        %v2167 = vpack.i.b16 %v2166, %v2165
        %v2170 = vpack.i.b16 %v2125, %v1989
        %v2171 = vshrl.u32 %v1989, 16
        %v2172 = vshrl.u32 %v2125, 16
        %v2173 = vpack.i.b16 %v2172, %v2171
        %2174 = vrot.lane.b32.xlu0 %v2131, 16
        %v2175 = vpop.permute.xlu0 %2174
        %2176 = vrot.lane.b32.xlu0 %v2134, 32
        %v2177 = vpop.permute.xlu0 %2176
        %2178 = vrot.lane.b32.xlu0 %v2137, 48
        %v2179 = vpop.permute.xlu0 %2178
        %2180 = vrot.lane.b32.xlu0 %v2140, 64
        %v2181 = vpop.permute.xlu0 %2180
        %2182 = vrot.lane.b32.xlu0 %v2143, 80
        %v2183 = vpop.permute.xlu0 %2182
        %2184 = vrot.lane.b32.xlu0 %v2146, 96
        %v2185 = vpop.permute.xlu0 %2184
        %2186 = vrot.lane.b32.xlu0 %v2149, 112
        %v2187 = vpop.permute.xlu0 %2186
        %2188 = vrot.lane.b32.xlu0 %v2155, 16
        %v2189 = vpop.permute.xlu0 %2188
        %2190 = vrot.lane.b32.xlu0 %v2158, 32
        %v2191 = vpop.permute.xlu0 %2190
        %2192 = vrot.lane.b32.xlu0 %v2161, 48
        %v2193 = vpop.permute.xlu0 %2192
        %2194 = vrot.lane.b32.xlu0 %v2164, 64
        %v2195 = vpop.permute.xlu0 %2194
        %2196 = vrot.lane.b32.xlu0 %v2167, 80
        %v2197 = vpop.permute.xlu0 %2196
        %2198 = vrot.lane.b32.xlu0 %v2170, 96
        %v2199 = vpop.permute.xlu0 %2198
        %2200 = vrot.lane.b32.xlu0 %v2173, 112
        %v2201 = vpop.permute.xlu0 %2200
        %v2204 = vsel %vm1640, %v2128, %v2175
        %v2206 = vsel %vm520, %v2204, %v2177
        %v2208 = vsel %vm1646, %v2206, %v2179
        %v2210 = vsel %vm1649, %v2208, %v2181
        %v2212 = vsel %vm1652, %v2210, %v2183
        %v2214 = vsel %vm1655, %v2212, %v2185
        %v2216 = vsel %vm1658, %v2214, %v2187
        %v2220 = vsel %vm1640, %v2152, %v2189
        %v2222 = vsel %vm520, %v2220, %v2191
        %v2224 = vsel %vm1646, %v2222, %v2193
        %v2226 = vsel %vm1649, %v2224, %v2195
        %v2228 = vsel %vm1652, %v2226, %v2197
        %v2230 = vsel %vm1655, %v2228, %v2199
        %v2232 = vsel %vm1658, %v2230, %v2201
        %v2234 = vld [vmem:[#allocation2 + $0x90] sm:$0xf]
        %v2235 = vld [vmem:[#allocation2 + $0x94] sm:$0xf]
        %v2236 = vld [vmem:[#allocation2 + $0x98] sm:$0xf]
        %v2237 = vld [vmem:[#allocation2 + $0x9c] sm:$0xf]
        %v2238 = vld [vmem:[#allocation2 + $0xa0] sm:$0xf]
        %v2239 = vld [vmem:[#allocation2 + $0xa4] sm:$0xf]
        %v2240 = vld [vmem:[#allocation2 + $0xa8] sm:$0xf]
        %v2241 = vld [vmem:[#allocation2 + $0xac] sm:$0xf]
        %v2242 = vld [vmem:[#allocation2 + $0xb0] sm:$0xf]
        %v2243 = vld [vmem:[#allocation2 + $0xb4] sm:$0xf]
        %v2244 = vld [vmem:[#allocation2 + $0xb8] sm:$0xf]
        %v2245 = vld [vmem:[#allocation2 + $0xbc] sm:$0xf]
        %v2246 = vld [vmem:[#allocation2 + $0xc0] sm:$0xf]
        %v2247 = vld [vmem:[#allocation2 + $0xc4] sm:$0xf]
        %v2248 = vld [vmem:[#allocation2 + $0xc8] sm:$0xf]
        %v2249 = vld [vmem:[#allocation2 + $0xcc] sm:$0xf]
        %v2250 = vld [vmem:[#allocation2 + $0xd0] sm:$0xf]
        %v2251 = vld [vmem:[#allocation2 + $0xd4] sm:$0xf]
        %v2252 = vld [vmem:[#allocation2 + $0xd8] sm:$0xf]
        %v2253 = vld [vmem:[#allocation2 + $0xdc] sm:$0xf]
        %v2254 = vld [vmem:[#allocation2 + $0xe0] sm:$0xf]
        %v2255 = vld [vmem:[#allocation2 + $0xe4] sm:$0xf]
        %v2256 = vld [vmem:[#allocation2 + $0xe8] sm:$0xf]
        %v2257 = vld [vmem:[#allocation2 + $0xec] sm:$0xf]
        %v2258 = vld [vmem:[#allocation2 + $0xf0] sm:$0xf]
        %v2259 = vld [vmem:[#allocation2 + $0xf4] sm:$0xf]
        %v2260 = vld [vmem:[#allocation2 + $0xf8] sm:$0xf]
        %v2261 = vld [vmem:[#allocation2 + $0xfc] sm:$0xf]
        %v2262 = vld [vmem:[#allocation2 + $0x100] sm:$0xf]
        %v2263 = vld [vmem:[#allocation2 + $0x104] sm:$0xf]
        %v2264 = vld [vmem:[#allocation2 + $0x108] sm:$0xf]
        %v2265 = vld [vmem:[#allocation2 + $0x10c] sm:$0xf]
        %v2298 = vunpack.c.l.b16 %v2234
        %v2299 = vunpack.c.l.b16 %v2235
        %v2300 = vunpack.c.l.b16 %v2236
        %v2301 = vunpack.c.l.b16 %v2237
        %v2302 = vunpack.c.l.b16 %v2238
        %v2303 = vunpack.c.l.b16 %v2239
        %v2304 = vunpack.c.l.b16 %v2240
        %v2305 = vunpack.c.l.b16 %v2241
        %v2306 = vunpack.c.l.b16 %v2242
        %v2307 = vunpack.c.l.b16 %v2243
        %v2308 = vunpack.c.l.b16 %v2244
        %v2309 = vunpack.c.l.b16 %v2245
        %v2310 = vunpack.c.l.b16 %v2246
        %v2311 = vunpack.c.l.b16 %v2247
        %v2312 = vunpack.c.l.b16 %v2248
        %v2313 = vunpack.c.l.b16 %v2249
        %v2314 = vunpack.c.l.b16 %v2250
        %v2315 = vunpack.c.l.b16 %v2251
        %v2316 = vunpack.c.l.b16 %v2252
        %v2317 = vunpack.c.l.b16 %v2253
        %v2318 = vunpack.c.l.b16 %v2254
        %v2319 = vunpack.c.l.b16 %v2255
        %v2320 = vunpack.c.l.b16 %v2256
        %v2321 = vunpack.c.l.b16 %v2257
        %v2322 = vunpack.c.l.b16 %v2258
        %v2323 = vunpack.c.l.b16 %v2259
        %v2324 = vunpack.c.l.b16 %v2260
        %v2325 = vunpack.c.l.b16 %v2261
        %v2326 = vunpack.c.l.b16 %v2262
        %v2327 = vunpack.c.l.b16 %v2263
        %v2328 = vunpack.c.l.b16 %v2264
        %v2329 = vunpack.c.l.b16 %v2265
        %v2330 = vpack.c.b16 %v2299, %v2298
        %v2331 = vpack.c.b16 %v2301, %v2300
        %v2332 = vpack.c.b16 %v2303, %v2302
        %v2333 = vpack.c.b16 %v2305, %v2304
        %v2334 = vpack.c.b16 %v2307, %v2306
        %v2335 = vpack.c.b16 %v2309, %v2308
        %v2336 = vpack.c.b16 %v2311, %v2310
        %v2337 = vpack.c.b16 %v2313, %v2312
        %v2338 = vpack.c.b16 %v2315, %v2314
        %v2339 = vpack.c.b16 %v2317, %v2316
        %v2340 = vpack.c.b16 %v2319, %v2318
        %v2341 = vpack.c.b16 %v2321, %v2320
        %v2342 = vpack.c.b16 %v2323, %v2322
        %v2343 = vpack.c.b16 %v2325, %v2324
        %v2344 = vpack.c.b16 %v2327, %v2326
        %v2345 = vpack.c.b16 %v2329, %v2328
        %2362 = vmatprep.subr.bf16.mxu0 0
        %2363 = vmatpush1.bf16.msra.mxu0 %v2337
        %2364 = vmatprep.subr.bf16.mxu0 0
        %2365 = vmatpush1.bf16.msra.mxu0 %v2336
        %2366 = vmatprep.subr.bf16.mxu0 0
        %2367 = vmatpush1.bf16.msra.mxu0 %v2335
        %2368 = vmatprep.subr.bf16.mxu0 0
        %2369 = vmatpush1.bf16.msra.mxu0 %v2334
        %2370 = vmatprep.subr.bf16.mxu0 0
        %2371 = vmatpush1.bf16.msra.mxu0 %v2333
        %2372 = vmatprep.subr.bf16.mxu0 0
        %2373 = vmatpush1.bf16.msra.mxu0 %v2332
        %2374 = vmatprep.subr.bf16.mxu0 0
        %2375 = vmatpush1.bf16.msra.mxu0 %v2331
        %2376 = vmatprep.subr.bf16.mxu0 0
        %2377 = vmatpush1.bf16.msra.mxu0 %v2330
        %2378 = vmatprep.subr.bf16.mxu0 0
        %2379 = vmatpush2.bf16.msra.mxu0 %v2345
        %2380 = vmatprep.subr.bf16.mxu0 0
        %2381 = vmatpush2.bf16.msra.mxu0 %v2344
        %2382 = vmatprep.subr.bf16.mxu0 0
        %2383 = vmatpush2.bf16.msra.mxu0 %v2343
        %2384 = vmatprep.subr.bf16.mxu0 0
        %2385 = vmatpush2.bf16.msra.mxu0 %v2342
        %2386 = vmatprep.subr.bf16.mxu0 0
        %2387 = vmatpush2.bf16.msra.mxu0 %v2341
        %2388 = vmatprep.subr.bf16.mxu0 0
        %2389 = vmatpush2.bf16.msra.mxu0 %v2340
        %2390 = vmatprep.subr.bf16.mxu0 0
        %2391 = vmatpush2.bf16.msra.mxu0 %v2339
        %2392 = vmatprep.subr.bf16.mxu0 0
        %2393 = vmatpush2.bf16.msra.mxu0 %v2338
        %2394 = vmatprep.mubr.bf16.mxu0 %v2232
        %2395 = vmatmul.mubr.bf16.gmra.mxu0 %v2216
        %v2396 = vpop.f32.mrf.mxu0
        %v2397 = vadd.f32 0.0, %v2396
        %v2398 = vpop.f32.mrf.mxu0
        %v2399 = vpop.f32.mrf.mxu0
        %v2400 = vadd.f32 0.0, %v2399
        %v2401 = vpop.f32.mrf.mxu0
        %2402 = vdwg.mxu0
        %v2435 = vunpack.c.l.b16 %v1678
        %v2436 = vunpack.c.l.b16 %v1679
        %v2437 = vunpack.c.l.b16 %v1680
        %v2438 = vunpack.c.l.b16 %v1681
        %v2439 = vunpack.c.l.b16 %v1682
        %v2440 = vunpack.c.l.b16 %v1683
        %v2441 = vunpack.c.l.b16 %v1684
        %v2442 = vunpack.c.l.b16 %v1685
        %v2443 = vunpack.c.l.b16 %v1686
        %v2444 = vunpack.c.l.b16 %v1687
        %v2445 = vunpack.c.l.b16 %v1688
        %v2446 = vunpack.c.l.b16 %v1689
        %v2447 = vunpack.c.l.b16 %v1690
        %v2448 = vunpack.c.l.b16 %v1691
        %v2449 = vunpack.c.l.b16 %v1692
        %v2450 = vunpack.c.l.b16 %v1693
        %v2451 = vunpack.c.l.b16 %v1694
        %v2452 = vunpack.c.l.b16 %v1695
        %v2453 = vunpack.c.l.b16 %v1696
        %v2454 = vunpack.c.l.b16 %v1697
        %v2455 = vunpack.c.l.b16 %v1698
        %v2456 = vunpack.c.l.b16 %v1699
        %v2457 = vunpack.c.l.b16 %v1700
        %v2458 = vunpack.c.l.b16 %v1701
        %v2459 = vunpack.c.l.b16 %v1702
        %v2460 = vunpack.c.l.b16 %v1703
        %v2461 = vunpack.c.l.b16 %v1704
        %v2462 = vunpack.c.l.b16 %v1705
        %v2463 = vunpack.c.l.b16 %v1706
        %v2464 = vunpack.c.l.b16 %v1707
        %v2465 = vunpack.c.l.b16 %v1708
        %v2466 = vunpack.c.l.b16 %v1709
        %v2467 = vpack.c.b16 %v2436, %v2435
        %v2468 = vpack.c.b16 %v2438, %v2437
        %v2469 = vpack.c.b16 %v2440, %v2439
        %v2470 = vpack.c.b16 %v2442, %v2441
        %v2471 = vpack.c.b16 %v2444, %v2443
        %v2472 = vpack.c.b16 %v2446, %v2445
        %v2473 = vpack.c.b16 %v2448, %v2447
        %v2474 = vpack.c.b16 %v2450, %v2449
        %v2475 = vpack.c.b16 %v2452, %v2451
        %v2476 = vpack.c.b16 %v2454, %v2453
        %v2477 = vpack.c.b16 %v2456, %v2455
        %v2478 = vpack.c.b16 %v2458, %v2457
        %v2479 = vpack.c.b16 %v2460, %v2459
        %v2480 = vpack.c.b16 %v2462, %v2461
        %v2481 = vpack.c.b16 %v2464, %v2463
        %v2482 = vpack.c.b16 %v2466, %v2465
        %2499 = vmatprep.subr.bf16.mxu0 0
        %2500 = vmatpush1.bf16.msra.mxu0 %v2474
        %2501 = vmatprep.subr.bf16.mxu0 0
        %2502 = vmatpush1.bf16.msra.mxu0 %v2473
        %2503 = vmatprep.subr.bf16.mxu0 0
        %2504 = vmatpush1.bf16.msra.mxu0 %v2472
        %2505 = vmatprep.subr.bf16.mxu0 0
        %2506 = vmatpush1.bf16.msra.mxu0 %v2471
        %2507 = vmatprep.subr.bf16.mxu0 0
        %2508 = vmatpush1.bf16.msra.mxu0 %v2470
        %2509 = vmatprep.subr.bf16.mxu0 0
        %2510 = vmatpush1.bf16.msra.mxu0 %v2469
        %2511 = vmatprep.subr.bf16.mxu0 0
        %2512 = vmatpush1.bf16.msra.mxu0 %v2468
        %2513 = vmatprep.subr.bf16.mxu0 0
        %2514 = vmatpush1.bf16.msra.mxu0 %v2467
        %2515 = vmatprep.subr.bf16.mxu0 0
        %2516 = vmatpush2.bf16.msra.mxu0 %v2482
        %2517 = vmatprep.subr.bf16.mxu0 0
        %2518 = vmatpush2.bf16.msra.mxu0 %v2481
        %2519 = vmatprep.subr.bf16.mxu0 0
        %2520 = vmatpush2.bf16.msra.mxu0 %v2480
        %2521 = vmatprep.subr.bf16.mxu0 0
        %2522 = vmatpush2.bf16.msra.mxu0 %v2479
        %2523 = vmatprep.subr.bf16.mxu0 0
        %2524 = vmatpush2.bf16.msra.mxu0 %v2478
        %2525 = vmatprep.subr.bf16.mxu0 0
        %2526 = vmatpush2.bf16.msra.mxu0 %v2477
        %2527 = vmatprep.subr.bf16.mxu0 0
        %2528 = vmatpush2.bf16.msra.mxu0 %v2476
        %2529 = vmatprep.subr.bf16.mxu0 0
        %2530 = vmatpush2.bf16.msra.mxu0 %v2475
        %2531 = vmatprep.mubr.bf16.mxu0 %v1676
        %2532 = vmatmul.mubr.bf16.gmra.mxu0 %v1660
        %v2533 = vpop.f32.mrf.mxu0
        %v2534 = vadd.f32 %v2397, %v2533
        %v2535 = vpop.f32.mrf.mxu0
        %v2536 = vpop.f32.mrf.mxu0
        %v2537 = vadd.f32 %v2400, %v2536
        %v2538 = vpop.f32.mrf.mxu0
        %2539 = vdwg.mxu0
        %s2541 = sor.u32 256, 32
        %2542 = vbcast.lane.c.b16.xlu0 %v906, %s2541
        %v2543 = vpop.permute.xlu0 %2542
        %s2545 = sor.u32 256, 32
        %2546 = vbcast.lane.c.b16.xlu0 %v916, %s2545
        %v2547 = vpop.permute.xlu0 %2546
        %s2549 = sor.u32 256, 32
        %2550 = vbcast.lane.c.b16.xlu0 %v923, %s2549
        %v2551 = vpop.permute.xlu0 %2550
        %s2553 = sor.u32 256, 32
        %2554 = vbcast.lane.c.b16.xlu0 %v930, %s2553
        %v2555 = vpop.permute.xlu0 %2554
        %s2557 = sor.u32 256, 32
        %2558 = vbcast.lane.c.b16.xlu0 %v937, %s2557
        %v2559 = vpop.permute.xlu0 %2558
        %s2561 = sor.u32 256, 32
        %2562 = vbcast.lane.c.b16.xlu0 %v944, %s2561
        %v2563 = vpop.permute.xlu0 %2562
        %s2565 = sor.u32 256, 32
        %2566 = vbcast.lane.c.b16.xlu0 %v951, %s2565
        %v2567 = vpop.permute.xlu0 %2566
        %s2569 = sor.u32 256, 32
        %2570 = vbcast.lane.c.b16.xlu0 %v958, %s2569
        %v2571 = vpop.permute.xlu0 %2570
        %s2573 = sor.u32 256, 32
        %2574 = vbcast.lane.c.b16.xlu0 %v965, %s2573
        %v2575 = vpop.permute.xlu0 %2574
        %s2577 = sor.u32 256, 32
        %2578 = vbcast.lane.c.b16.xlu0 %v972, %s2577
        %v2579 = vpop.permute.xlu0 %2578
        %s2581 = sor.u32 256, 32
        %2582 = vbcast.lane.c.b16.xlu0 %v979, %s2581
        %v2583 = vpop.permute.xlu0 %2582
        %s2585 = sor.u32 256, 32
        %2586 = vbcast.lane.c.b16.xlu0 %v986, %s2585
        %v2587 = vpop.permute.xlu0 %2586
        %s2589 = sor.u32 256, 32
        %2590 = vbcast.lane.c.b16.xlu0 %v993, %s2589
        %v2591 = vpop.permute.xlu0 %2590
        %s2593 = sor.u32 256, 32
        %2594 = vbcast.lane.c.b16.xlu0 %v1000, %s2593
        %v2595 = vpop.permute.xlu0 %2594
        %s2597 = sor.u32 256, 32
        %2598 = vbcast.lane.c.b16.xlu0 %v1007, %s2597
        %v2599 = vpop.permute.xlu0 %2598
        %s2601 = sor.u32 256, 32
        %2602 = vbcast.lane.c.b16.xlu0 %v1014, %s2601
        %v2603 = vpop.permute.xlu0 %2602
        %v2604 = vmul.bf16 %v2543, %v1170
        %v2605 = vmul.bf16 %v2547, %v1177
        %v2606 = vmul.bf16 %v2551, %v1184
        %v2607 = vmul.bf16 %v2555, %v1191
        %v2608 = vmul.bf16 %v2559, %v1198
        %v2609 = vmul.bf16 %v2563, %v1205
        %v2610 = vmul.bf16 %v2567, %v1212
        %v2611 = vmul.bf16 %v2571, %v1219
        %v2612 = vmul.bf16 %v2575, %v1226
        %v2613 = vmul.bf16 %v2579, %v1233
        %v2614 = vmul.bf16 %v2583, %v1240
        %v2615 = vmul.bf16 %v2587, %v1247
        %v2616 = vmul.bf16 %v2591, %v1254
        %v2617 = vmul.bf16 %v2595, %v1261
        %v2618 = vmul.bf16 %v2599, %v1268
        %v2619 = vmul.bf16 %v2603, %v1275
        %2636 = vrot.lane.b32.xlu0 %v2604, 96
        %v2637 = vpop.permute.xlu0 %2636
        %2638 = vrot.lane.b32.xlu0 %v2605, 96
        %v2639 = vpop.permute.xlu0 %2638
        %2640 = vrot.lane.b32.xlu0 %v2606, 96
        %v2641 = vpop.permute.xlu0 %2640
        %2642 = vrot.lane.b32.xlu0 %v2607, 96
        %v2643 = vpop.permute.xlu0 %2642
        %2644 = vrot.lane.b32.xlu0 %v2608, 96
        %v2645 = vpop.permute.xlu0 %2644
        %2646 = vrot.lane.b32.xlu0 %v2609, 96
        %v2647 = vpop.permute.xlu0 %2646
        %2648 = vrot.lane.b32.xlu0 %v2610, 96
        %v2649 = vpop.permute.xlu0 %2648
        %2650 = vrot.lane.b32.xlu0 %v2611, 96
        %v2651 = vpop.permute.xlu0 %2650
        %2652 = vrot.lane.b32.xlu0 %v2612, 96
        %v2653 = vpop.permute.xlu0 %2652
        %2654 = vrot.lane.b32.xlu0 %v2613, 96
        %v2655 = vpop.permute.xlu0 %2654
        %2656 = vrot.lane.b32.xlu0 %v2614, 96
        %v2657 = vpop.permute.xlu0 %2656
        %2658 = vrot.lane.b32.xlu0 %v2615, 96
        %v2659 = vpop.permute.xlu0 %2658
        %2660 = vrot.lane.b32.xlu0 %v2616, 96
        %v2661 = vpop.permute.xlu0 %2660
        %2662 = vrot.lane.b32.xlu0 %v2617, 96
        %v2663 = vpop.permute.xlu0 %2662
        %2664 = vrot.lane.b32.xlu0 %v2618, 96
        %v2665 = vpop.permute.xlu0 %2664
        %2666 = vrot.lane.b32.xlu0 %v2619, 96
        %v2667 = vpop.permute.xlu0 %2666
        %v2684 = vcombine.low %v2637, %v2645
        %v2685 = vcombine.high %v2637, %v2645
        %v2687 = vunpack.c.l.s4 1983009808
        %v2688 = vunpack.c.0.s8 %v2687
        %v2689 = vlaneseq
        %v2690 = vshrl.u32 %v2689, 7
        %v2691 = vsub.s32 %v2688, %v2690
        %v2692 = vrot.slane %v2684, %v2691
        %v2694 = vunpack.c.l.s4 1983009808
        %v2695 = vunpack.c.0.s8 %v2694
        %v2696 = vlaneseq
        %v2697 = vshrl.u32 %v2696, 7
        %v2698 = vsub.s32 %v2695, %v2697
        %v2699 = vrot.slane %v2685, %v2698
        %v2700 = vcombine.low %v2641, %v2649
        %v2701 = vcombine.high %v2641, %v2649
        %v2703 = vunpack.c.l.s4 1983009808
        %v2704 = vunpack.c.0.s8 %v2703
        %v2705 = vlaneseq
        %v2706 = vshrl.u32 %v2705, 7
        %v2707 = vsub.s32 %v2704, %v2706
        %v2708 = vrot.slane %v2700, %v2707
        %v2710 = vunpack.c.l.s4 1983009808
        %v2711 = vunpack.c.0.s8 %v2710
        %v2712 = vlaneseq
        %v2713 = vshrl.u32 %v2712, 7
        %v2714 = vsub.s32 %v2711, %v2713
        %v2715 = vrot.slane %v2701, %v2714
        %v2716 = vcombine.low %v2653, %v2661
        %v2717 = vcombine.high %v2653, %v2661
        %v2719 = vunpack.c.l.s4 1983009808
        %v2720 = vunpack.c.0.s8 %v2719
        %v2721 = vlaneseq
        %v2722 = vshrl.u32 %v2721, 7
        %v2723 = vsub.s32 %v2720, %v2722
        %v2724 = vrot.slane %v2716, %v2723
        %v2726 = vunpack.c.l.s4 1983009808
        %v2727 = vunpack.c.0.s8 %v2726
        %v2728 = vlaneseq
        %v2729 = vshrl.u32 %v2728, 7
        %v2730 = vsub.s32 %v2727, %v2729
        %v2731 = vrot.slane %v2717, %v2730
        %v2732 = vcombine.low %v2657, %v2665
        %v2733 = vcombine.high %v2657, %v2665
        %v2735 = vunpack.c.l.s4 1983009808
        %v2736 = vunpack.c.0.s8 %v2735
        %v2737 = vlaneseq
        %v2738 = vshrl.u32 %v2737, 7
        %v2739 = vsub.s32 %v2736, %v2738
        %v2740 = vrot.slane %v2732, %v2739
        %v2742 = vunpack.c.l.s4 1983009808
        %v2743 = vunpack.c.0.s8 %v2742
        %v2744 = vlaneseq
        %v2745 = vshrl.u32 %v2744, 7
        %v2746 = vsub.s32 %v2743, %v2745
        %v2747 = vrot.slane %v2733, %v2746
        %v2748 = vcombine.low %v2692, %v2708
        %v2749 = vcombine.high %v2692, %v2708
        %v2751 = vunpack.c.l.s4 1934713408
        %v2752 = vunpack.c.0.s8 %v2751
        %v2753 = vlaneseq
        %v2754 = vshrl.u32 %v2753, 7
        %v2755 = vsub.s32 %v2752, %v2754
        %v2756 = vrot.slane %v2748, %v2755
        %v2758 = vunpack.c.l.s4 1934713408
        %v2759 = vunpack.c.0.s8 %v2758
        %v2760 = vlaneseq
        %v2761 = vshrl.u32 %v2760, 7
        %v2762 = vsub.s32 %v2759, %v2761
        %v2763 = vrot.slane %v2749, %v2762
        %v2764 = vcombine.low %v2699, %v2715
        %v2765 = vcombine.high %v2699, %v2715
        %v2767 = vunpack.c.l.s4 1934713408
        %v2768 = vunpack.c.0.s8 %v2767
        %v2769 = vlaneseq
        %v2770 = vshrl.u32 %v2769, 7
        %v2771 = vsub.s32 %v2768, %v2770
        %v2772 = vrot.slane %v2764, %v2771
        %v2774 = vunpack.c.l.s4 1934713408
        %v2775 = vunpack.c.0.s8 %v2774
        %v2776 = vlaneseq
        %v2777 = vshrl.u32 %v2776, 7
        %v2778 = vsub.s32 %v2775, %v2777
        %v2779 = vrot.slane %v2765, %v2778
        %v2780 = vcombine.low %v2724, %v2740
        %v2781 = vcombine.high %v2724, %v2740
        %v2783 = vunpack.c.l.s4 1934713408
        %v2784 = vunpack.c.0.s8 %v2783
        %v2785 = vlaneseq
        %v2786 = vshrl.u32 %v2785, 7
        %v2787 = vsub.s32 %v2784, %v2786
        %v2788 = vrot.slane %v2780, %v2787
        %v2790 = vunpack.c.l.s4 1934713408
        %v2791 = vunpack.c.0.s8 %v2790
        %v2792 = vlaneseq
        %v2793 = vshrl.u32 %v2792, 7
        %v2794 = vsub.s32 %v2791, %v2793
        %v2795 = vrot.slane %v2781, %v2794
        %v2796 = vcombine.low %v2731, %v2747
        %v2797 = vcombine.high %v2731, %v2747
        %v2799 = vunpack.c.l.s4 1934713408
        %v2800 = vunpack.c.0.s8 %v2799
        %v2801 = vlaneseq
        %v2802 = vshrl.u32 %v2801, 7
        %v2803 = vsub.s32 %v2800, %v2802
        %v2804 = vrot.slane %v2796, %v2803
        %v2806 = vunpack.c.l.s4 1934713408
        %v2807 = vunpack.c.0.s8 %v2806
        %v2808 = vlaneseq
        %v2809 = vshrl.u32 %v2808, 7
        %v2810 = vsub.s32 %v2807, %v2809
        %v2811 = vrot.slane %v2797, %v2810
        %v2812 = vcombine.low %v2756, %v2788
        %v2813 = vcombine.high %v2756, %v2788
        %v2814 = vcombine.low %v2763, %v2795
        %v2815 = vcombine.high %v2763, %v2795
        %v2816 = vcombine.low %v2772, %v2804
        %v2817 = vcombine.high %v2772, %v2804
        %v2818 = vcombine.low %v2779, %v2811
        %v2819 = vcombine.high %v2779, %v2811
        %v2820 = vcombine.low %v2639, %v2647
        %v2821 = vcombine.high %v2639, %v2647
        %v2823 = vunpack.c.l.s4 1983009808
        %v2824 = vunpack.c.0.s8 %v2823
        %v2825 = vlaneseq
        %v2826 = vshrl.u32 %v2825, 7
        %v2827 = vsub.s32 %v2824, %v2826
        %v2828 = vrot.slane %v2820, %v2827
        %v2830 = vunpack.c.l.s4 1983009808
        %v2831 = vunpack.c.0.s8 %v2830
        %v2832 = vlaneseq
        %v2833 = vshrl.u32 %v2832, 7
        %v2834 = vsub.s32 %v2831, %v2833
        %v2835 = vrot.slane %v2821, %v2834
        %v2836 = vcombine.low %v2643, %v2651
        %v2837 = vcombine.high %v2643, %v2651
        %v2839 = vunpack.c.l.s4 1983009808
        %v2840 = vunpack.c.0.s8 %v2839
        %v2841 = vlaneseq
        %v2842 = vshrl.u32 %v2841, 7
        %v2843 = vsub.s32 %v2840, %v2842
        %v2844 = vrot.slane %v2836, %v2843
        %v2846 = vunpack.c.l.s4 1983009808
        %v2847 = vunpack.c.0.s8 %v2846
        %v2848 = vlaneseq
        %v2849 = vshrl.u32 %v2848, 7
        %v2850 = vsub.s32 %v2847, %v2849
        %v2851 = vrot.slane %v2837, %v2850
        %v2852 = vcombine.low %v2655, %v2663
        %v2853 = vcombine.high %v2655, %v2663
        %v2855 = vunpack.c.l.s4 1983009808
        %v2856 = vunpack.c.0.s8 %v2855
        %v2857 = vlaneseq
        %v2858 = vshrl.u32 %v2857, 7
        %v2859 = vsub.s32 %v2856, %v2858
        %v2860 = vrot.slane %v2852, %v2859
        %v2862 = vunpack.c.l.s4 1983009808
        %v2863 = vunpack.c.0.s8 %v2862
        %v2864 = vlaneseq
        %v2865 = vshrl.u32 %v2864, 7
        %v2866 = vsub.s32 %v2863, %v2865
        %v2867 = vrot.slane %v2853, %v2866
        %v2868 = vcombine.low %v2659, %v2667
        %v2869 = vcombine.high %v2659, %v2667
        %v2871 = vunpack.c.l.s4 1983009808
        %v2872 = vunpack.c.0.s8 %v2871
        %v2873 = vlaneseq
        %v2874 = vshrl.u32 %v2873, 7
        %v2875 = vsub.s32 %v2872, %v2874
        %v2876 = vrot.slane %v2868, %v2875
        %v2878 = vunpack.c.l.s4 1983009808
        %v2879 = vunpack.c.0.s8 %v2878
        %v2880 = vlaneseq
        %v2881 = vshrl.u32 %v2880, 7
        %v2882 = vsub.s32 %v2879, %v2881
        %v2883 = vrot.slane %v2869, %v2882
        %v2884 = vcombine.low %v2828, %v2844
        %v2885 = vcombine.high %v2828, %v2844
        %v2887 = vunpack.c.l.s4 1934713408
        %v2888 = vunpack.c.0.s8 %v2887
        %v2889 = vlaneseq
        %v2890 = vshrl.u32 %v2889, 7
        %v2891 = vsub.s32 %v2888, %v2890
        %v2892 = vrot.slane %v2884, %v2891
        %v2894 = vunpack.c.l.s4 1934713408
        %v2895 = vunpack.c.0.s8 %v2894
        %v2896 = vlaneseq
        %v2897 = vshrl.u32 %v2896, 7
        %v2898 = vsub.s32 %v2895, %v2897
        %v2899 = vrot.slane %v2885, %v2898
        %v2900 = vcombine.low %v2835, %v2851
        %v2901 = vcombine.high %v2835, %v2851
        %v2903 = vunpack.c.l.s4 1934713408
        %v2904 = vunpack.c.0.s8 %v2903
        %v2905 = vlaneseq
        %v2906 = vshrl.u32 %v2905, 7
        %v2907 = vsub.s32 %v2904, %v2906
        %v2908 = vrot.slane %v2900, %v2907
        %v2910 = vunpack.c.l.s4 1934713408
        %v2911 = vunpack.c.0.s8 %v2910
        %v2912 = vlaneseq
        %v2913 = vshrl.u32 %v2912, 7
        %v2914 = vsub.s32 %v2911, %v2913
        %v2915 = vrot.slane %v2901, %v2914
        %v2916 = vcombine.low %v2860, %v2876
        %v2917 = vcombine.high %v2860, %v2876
        %v2919 = vunpack.c.l.s4 1934713408
        %v2920 = vunpack.c.0.s8 %v2919
        %v2921 = vlaneseq
        %v2922 = vshrl.u32 %v2921, 7
        %v2923 = vsub.s32 %v2920, %v2922
        %v2924 = vrot.slane %v2916, %v2923
        %v2926 = vunpack.c.l.s4 1934713408
        %v2927 = vunpack.c.0.s8 %v2926
        %v2928 = vlaneseq
        %v2929 = vshrl.u32 %v2928, 7
        %v2930 = vsub.s32 %v2927, %v2929
        %v2931 = vrot.slane %v2917, %v2930
        %v2932 = vcombine.low %v2867, %v2883
        %v2933 = vcombine.high %v2867, %v2883
        %v2935 = vunpack.c.l.s4 1934713408
        %v2936 = vunpack.c.0.s8 %v2935
        %v2937 = vlaneseq
        %v2938 = vshrl.u32 %v2937, 7
        %v2939 = vsub.s32 %v2936, %v2938
        %v2940 = vrot.slane %v2932, %v2939
        %v2942 = vunpack.c.l.s4 1934713408
        %v2943 = vunpack.c.0.s8 %v2942
        %v2944 = vlaneseq
        %v2945 = vshrl.u32 %v2944, 7
        %v2946 = vsub.s32 %v2943, %v2945
        %v2947 = vrot.slane %v2933, %v2946
        %v2948 = vcombine.low %v2892, %v2924
        %v2949 = vcombine.high %v2892, %v2924
        %v2950 = vcombine.low %v2899, %v2931
        %v2951 = vcombine.high %v2899, %v2931
        %v2952 = vcombine.low %v2908, %v2940
        %v2953 = vcombine.high %v2908, %v2940
        %v2954 = vcombine.low %v2915, %v2947
        %v2955 = vcombine.high %v2915, %v2947
        %v2958 = vpack.i.b16 %v2948, %v2812
        %v2959 = vshrl.u32 %v2812, 16
        %v2960 = vshrl.u32 %v2948, 16
        %v2961 = vpack.i.b16 %v2960, %v2959
        %v2964 = vpack.i.b16 %v2949, %v2813
        %v2965 = vshrl.u32 %v2813, 16
        %v2966 = vshrl.u32 %v2949, 16
        %v2967 = vpack.i.b16 %v2966, %v2965
        %v2970 = vpack.i.b16 %v2950, %v2814
        %v2971 = vshrl.u32 %v2814, 16
        %v2972 = vshrl.u32 %v2950, 16
        %v2973 = vpack.i.b16 %v2972, %v2971
        %v2976 = vpack.i.b16 %v2951, %v2815
        %v2977 = vshrl.u32 %v2815, 16
        %v2978 = vshrl.u32 %v2951, 16
        %v2979 = vpack.i.b16 %v2978, %v2977
        %v2982 = vpack.i.b16 %v2952, %v2816
        %v2983 = vshrl.u32 %v2816, 16
        %v2984 = vshrl.u32 %v2952, 16
        %v2985 = vpack.i.b16 %v2984, %v2983
        %v2988 = vpack.i.b16 %v2953, %v2817
        %v2989 = vshrl.u32 %v2817, 16
        %v2990 = vshrl.u32 %v2953, 16
        %v2991 = vpack.i.b16 %v2990, %v2989
        %v2994 = vpack.i.b16 %v2954, %v2818
        %v2995 = vshrl.u32 %v2818, 16
        %v2996 = vshrl.u32 %v2954, 16
        %v2997 = vpack.i.b16 %v2996, %v2995
        %v3000 = vpack.i.b16 %v2955, %v2819
        %v3001 = vshrl.u32 %v2819, 16
        %v3002 = vshrl.u32 %v2955, 16
        %v3003 = vpack.i.b16 %v3002, %v3001
        %3004 = vrot.lane.b32.xlu0 %v2961, 16
        %v3005 = vpop.permute.xlu0 %3004
        %3006 = vrot.lane.b32.xlu0 %v2964, 32
        %v3007 = vpop.permute.xlu0 %3006
        %3008 = vrot.lane.b32.xlu0 %v2967, 48
        %v3009 = vpop.permute.xlu0 %3008
        %3010 = vrot.lane.b32.xlu0 %v2970, 64
        %v3011 = vpop.permute.xlu0 %3010
        %3012 = vrot.lane.b32.xlu0 %v2973, 80
        %v3013 = vpop.permute.xlu0 %3012
        %3014 = vrot.lane.b32.xlu0 %v2976, 96
        %v3015 = vpop.permute.xlu0 %3014
        %3016 = vrot.lane.b32.xlu0 %v2979, 112
        %v3017 = vpop.permute.xlu0 %3016
        %3018 = vrot.lane.b32.xlu0 %v2985, 16
        %v3019 = vpop.permute.xlu0 %3018
        %3020 = vrot.lane.b32.xlu0 %v2988, 32
        %v3021 = vpop.permute.xlu0 %3020
        %3022 = vrot.lane.b32.xlu0 %v2991, 48
        %v3023 = vpop.permute.xlu0 %3022
        %3024 = vrot.lane.b32.xlu0 %v2994, 64
        %v3025 = vpop.permute.xlu0 %3024
        %3026 = vrot.lane.b32.xlu0 %v2997, 80
        %v3027 = vpop.permute.xlu0 %3026
        %3028 = vrot.lane.b32.xlu0 %v3000, 96
        %v3029 = vpop.permute.xlu0 %3028
        %3030 = vrot.lane.b32.xlu0 %v3003, 112
        %v3031 = vpop.permute.xlu0 %3030
        %v3034 = vsel %vm1640, %v2958, %v3005
        %v3036 = vsel %vm520, %v3034, %v3007
        %v3038 = vsel %vm1646, %v3036, %v3009
        %v3040 = vsel %vm1649, %v3038, %v3011
        %v3042 = vsel %vm1652, %v3040, %v3013
        %v3044 = vsel %vm1655, %v3042, %v3015
        %v3046 = vsel %vm1658, %v3044, %v3017
        %v3050 = vsel %vm1640, %v2982, %v3019
        %v3052 = vsel %vm520, %v3050, %v3021
        %v3054 = vsel %vm1646, %v3052, %v3023
        %v3056 = vsel %vm1649, %v3054, %v3025
        %v3058 = vsel %vm1652, %v3056, %v3027
        %v3060 = vsel %vm1655, %v3058, %v3029
        %v3062 = vsel %vm1658, %v3060, %v3031
        %v3064 = vld [vmem:[#allocation2 + $0x110] sm:$0xf]
        %v3065 = vld [vmem:[#allocation2 + $0x114] sm:$0xf]
        %v3066 = vld [vmem:[#allocation2 + $0x118] sm:$0xf]
        %v3067 = vld [vmem:[#allocation2 + $0x11c] sm:$0xf]
        %v3068 = vld [vmem:[#allocation2 + $0x120] sm:$0xf]
        %v3069 = vld [vmem:[#allocation2 + $0x124] sm:$0xf]
        %v3070 = vld [vmem:[#allocation2 + $0x128] sm:$0xf]
        %v3071 = vld [vmem:[#allocation2 + $0x12c] sm:$0xf]
        %v3072 = vld [vmem:[#allocation2 + $0x130] sm:$0xf]
        %v3073 = vld [vmem:[#allocation2 + $0x134] sm:$0xf]
        %v3074 = vld [vmem:[#allocation2 + $0x138] sm:$0xf]
        %v3075 = vld [vmem:[#allocation2 + $0x13c] sm:$0xf]
        %v3076 = vld [vmem:[#allocation2 + $0x140] sm:$0xf]
        %v3077 = vld [vmem:[#allocation2 + $0x144] sm:$0xf]
        %v3078 = vld [vmem:[#allocation2 + $0x148] sm:$0xf]
        %v3079 = vld [vmem:[#allocation2 + $0x14c] sm:$0xf]
        %v3080 = vld [vmem:[#allocation2 + $0x150] sm:$0xf]
        %v3081 = vld [vmem:[#allocation2 + $0x154] sm:$0xf]
        %v3082 = vld [vmem:[#allocation2 + $0x158] sm:$0xf]
        %v3083 = vld [vmem:[#allocation2 + $0x15c] sm:$0xf]
        %v3084 = vld [vmem:[#allocation2 + $0x160] sm:$0xf]
        %v3085 = vld [vmem:[#allocation2 + $0x164] sm:$0xf]
        %v3086 = vld [vmem:[#allocation2 + $0x168] sm:$0xf]
        %v3087 = vld [vmem:[#allocation2 + $0x16c] sm:$0xf]
        %v3088 = vld [vmem:[#allocation2 + $0x170] sm:$0xf]
        %v3089 = vld [vmem:[#allocation2 + $0x174] sm:$0xf]
        %v3090 = vld [vmem:[#allocation2 + $0x178] sm:$0xf]
        %v3091 = vld [vmem:[#allocation2 + $0x17c] sm:$0xf]
        %v3092 = vld [vmem:[#allocation2 + $0x180] sm:$0xf]
        %v3093 = vld [vmem:[#allocation2 + $0x184] sm:$0xf]
        %v3094 = vld [vmem:[#allocation2 + $0x188] sm:$0xf]
        %v3095 = vld [vmem:[#allocation2 + $0x18c] sm:$0xf]
        %v3128 = vunpack.c.l.b16 %v3064
        %v3129 = vunpack.c.l.b16 %v3065
        %v3130 = vunpack.c.l.b16 %v3066
        %v3131 = vunpack.c.l.b16 %v3067
        %v3132 = vunpack.c.l.b16 %v3068
        %v3133 = vunpack.c.l.b16 %v3069
        %v3134 = vunpack.c.l.b16 %v3070
        %v3135 = vunpack.c.l.b16 %v3071
        %v3136 = vunpack.c.l.b16 %v3072
        %v3137 = vunpack.c.l.b16 %v3073
        %v3138 = vunpack.c.l.b16 %v3074
        %v3139 = vunpack.c.l.b16 %v3075
        %v3140 = vunpack.c.l.b16 %v3076
        %v3141 = vunpack.c.l.b16 %v3077
        %v3142 = vunpack.c.l.b16 %v3078
        %v3143 = vunpack.c.l.b16 %v3079
        %v3144 = vunpack.c.l.b16 %v3080
        %v3145 = vunpack.c.l.b16 %v3081
        %v3146 = vunpack.c.l.b16 %v3082
        %v3147 = vunpack.c.l.b16 %v3083
        %v3148 = vunpack.c.l.b16 %v3084
        %v3149 = vunpack.c.l.b16 %v3085
        %v3150 = vunpack.c.l.b16 %v3086
        %v3151 = vunpack.c.l.b16 %v3087
        %v3152 = vunpack.c.l.b16 %v3088
        %v3153 = vunpack.c.l.b16 %v3089
        %v3154 = vunpack.c.l.b16 %v3090
        %v3155 = vunpack.c.l.b16 %v3091
        %v3156 = vunpack.c.l.b16 %v3092
        %v3157 = vunpack.c.l.b16 %v3093
        %v3158 = vunpack.c.l.b16 %v3094
        %v3159 = vunpack.c.l.b16 %v3095
        %v3160 = vpack.c.b16 %v3129, %v3128
        %v3161 = vpack.c.b16 %v3131, %v3130
        %v3162 = vpack.c.b16 %v3133, %v3132
        %v3163 = vpack.c.b16 %v3135, %v3134
        %v3164 = vpack.c.b16 %v3137, %v3136
        %v3165 = vpack.c.b16 %v3139, %v3138
        %v3166 = vpack.c.b16 %v3141, %v3140
        %v3167 = vpack.c.b16 %v3143, %v3142
        %v3168 = vpack.c.b16 %v3145, %v3144
        %v3169 = vpack.c.b16 %v3147, %v3146
        %v3170 = vpack.c.b16 %v3149, %v3148
        %v3171 = vpack.c.b16 %v3151, %v3150
        %v3172 = vpack.c.b16 %v3153, %v3152
        %v3173 = vpack.c.b16 %v3155, %v3154
        %v3174 = vpack.c.b16 %v3157, %v3156
        %v3175 = vpack.c.b16 %v3159, %v3158
        %3192 = vmatprep.subr.bf16.mxu0 0
        %3193 = vmatpush1.bf16.msra.mxu0 %v3167
        %3194 = vmatprep.subr.bf16.mxu0 0
        %3195 = vmatpush1.bf16.msra.mxu0 %v3166
        %3196 = vmatprep.subr.bf16.mxu0 0
        %3197 = vmatpush1.bf16.msra.mxu0 %v3165
        %3198 = vmatprep.subr.bf16.mxu0 0
        %3199 = vmatpush1.bf16.msra.mxu0 %v3164
        %3200 = vmatprep.subr.bf16.mxu0 0
        %3201 = vmatpush1.bf16.msra.mxu0 %v3163
        %3202 = vmatprep.subr.bf16.mxu0 0
        %3203 = vmatpush1.bf16.msra.mxu0 %v3162
        %3204 = vmatprep.subr.bf16.mxu0 0
        %3205 = vmatpush1.bf16.msra.mxu0 %v3161
        %3206 = vmatprep.subr.bf16.mxu0 0
        %3207 = vmatpush1.bf16.msra.mxu0 %v3160
        %3208 = vmatprep.subr.bf16.mxu0 0
        %3209 = vmatpush2.bf16.msra.mxu0 %v3175
        %3210 = vmatprep.subr.bf16.mxu0 0
        %3211 = vmatpush2.bf16.msra.mxu0 %v3174
        %3212 = vmatprep.subr.bf16.mxu0 0
        %3213 = vmatpush2.bf16.msra.mxu0 %v3173
        %3214 = vmatprep.subr.bf16.mxu0 0
        %3215 = vmatpush2.bf16.msra.mxu0 %v3172
        %3216 = vmatprep.subr.bf16.mxu0 0
        %3217 = vmatpush2.bf16.msra.mxu0 %v3171
        %3218 = vmatprep.subr.bf16.mxu0 0
        %3219 = vmatpush2.bf16.msra.mxu0 %v3170
        %3220 = vmatprep.subr.bf16.mxu0 0
        %3221 = vmatpush2.bf16.msra.mxu0 %v3169
        %3222 = vmatprep.subr.bf16.mxu0 0
        %3223 = vmatpush2.bf16.msra.mxu0 %v3168
        %3224 = vmatprep.mubr.bf16.mxu0 %v3062
        %3225 = vmatmul.mubr.bf16.gmra.mxu0 %v3046
        %v3226 = vpop.f32.mrf.mxu0
        %v3227 = vadd.f32 0.0, %v3226
        %v3228 = vpop.f32.mrf.mxu0
        %v3229 = vpop.f32.mrf.mxu0
        %v3230 = vadd.f32 0.0, %v3229
        %v3231 = vpop.f32.mrf.mxu0
        %3232 = vdwg.mxu0
        %v3233 = vadd.f32 %v2534, %v3227
        %v3234 = vadd.f32 %v2537, %v3230
        %s3236 = sor.u32 256, 48
        %3237 = vbcast.lane.c.b16.xlu0 %v906, %s3236
        %v3238 = vpop.permute.xlu0 %3237
        %s3240 = sor.u32 256, 48
        %3241 = vbcast.lane.c.b16.xlu0 %v916, %s3240
        %v3242 = vpop.permute.xlu0 %3241
        %s3244 = sor.u32 256, 48
        %3245 = vbcast.lane.c.b16.xlu0 %v923, %s3244
        %v3246 = vpop.permute.xlu0 %3245
        %s3248 = sor.u32 256, 48
        %3249 = vbcast.lane.c.b16.xlu0 %v930, %s3248
        %v3250 = vpop.permute.xlu0 %3249
        %s3252 = sor.u32 256, 48
        %3253 = vbcast.lane.c.b16.xlu0 %v937, %s3252
        %v3254 = vpop.permute.xlu0 %3253
        %s3256 = sor.u32 256, 48
        %3257 = vbcast.lane.c.b16.xlu0 %v944, %s3256
        %v3258 = vpop.permute.xlu0 %3257
        %s3260 = sor.u32 256, 48
        %3261 = vbcast.lane.c.b16.xlu0 %v951, %s3260
        %v3262 = vpop.permute.xlu0 %3261
        %s3264 = sor.u32 256, 48
        %3265 = vbcast.lane.c.b16.xlu0 %v958, %s3264
        %v3266 = vpop.permute.xlu0 %3265
        %s3268 = sor.u32 256, 48
        %3269 = vbcast.lane.c.b16.xlu0 %v965, %s3268
        %v3270 = vpop.permute.xlu0 %3269
        %s3272 = sor.u32 256, 48
        %3273 = vbcast.lane.c.b16.xlu0 %v972, %s3272
        %v3274 = vpop.permute.xlu0 %3273
        %s3276 = sor.u32 256, 48
        %3277 = vbcast.lane.c.b16.xlu0 %v979, %s3276
        %v3278 = vpop.permute.xlu0 %3277
        %s3280 = sor.u32 256, 48
        %3281 = vbcast.lane.c.b16.xlu0 %v986, %s3280
        %v3282 = vpop.permute.xlu0 %3281
        %s3284 = sor.u32 256, 48
        %3285 = vbcast.lane.c.b16.xlu0 %v993, %s3284
        %v3286 = vpop.permute.xlu0 %3285
        %s3288 = sor.u32 256, 48
        %3289 = vbcast.lane.c.b16.xlu0 %v1000, %s3288
        %v3290 = vpop.permute.xlu0 %3289
        %s3292 = sor.u32 256, 48
        %3293 = vbcast.lane.c.b16.xlu0 %v1007, %s3292
        %v3294 = vpop.permute.xlu0 %3293
        %s3296 = sor.u32 256, 48
        %3297 = vbcast.lane.c.b16.xlu0 %v1014, %s3296
        %v3298 = vpop.permute.xlu0 %3297
        %v3299 = vmul.bf16 %v3238, %v1170
        %v3300 = vmul.bf16 %v3242, %v1177
        %v3301 = vmul.bf16 %v3246, %v1184
        %v3302 = vmul.bf16 %v3250, %v1191
        %v3303 = vmul.bf16 %v3254, %v1198
        %v3304 = vmul.bf16 %v3258, %v1205
        %v3305 = vmul.bf16 %v3262, %v1212
        %v3306 = vmul.bf16 %v3266, %v1219
        %v3307 = vmul.bf16 %v3270, %v1226
        %v3308 = vmul.bf16 %v3274, %v1233
        %v3309 = vmul.bf16 %v3278, %v1240
        %v3310 = vmul.bf16 %v3282, %v1247
        %v3311 = vmul.bf16 %v3286, %v1254
        %v3312 = vmul.bf16 %v3290, %v1261
        %v3313 = vmul.bf16 %v3294, %v1268
        %v3314 = vmul.bf16 %v3298, %v1275
        %3331 = vrot.lane.b32.xlu0 %v3299, 80
        %v3332 = vpop.permute.xlu0 %3331
        %3333 = vrot.lane.b32.xlu0 %v3300, 80
        %v3334 = vpop.permute.xlu0 %3333
        %3335 = vrot.lane.b32.xlu0 %v3301, 80
        %v3336 = vpop.permute.xlu0 %3335
        %3337 = vrot.lane.b32.xlu0 %v3302, 80
        %v3338 = vpop.permute.xlu0 %3337
        %3339 = vrot.lane.b32.xlu0 %v3303, 80
        %v3340 = vpop.permute.xlu0 %3339
        %3341 = vrot.lane.b32.xlu0 %v3304, 80
        %v3342 = vpop.permute.xlu0 %3341
        %3343 = vrot.lane.b32.xlu0 %v3305, 80
        %v3344 = vpop.permute.xlu0 %3343
        %3345 = vrot.lane.b32.xlu0 %v3306, 80
        %v3346 = vpop.permute.xlu0 %3345
        %3347 = vrot.lane.b32.xlu0 %v3307, 80
        %v3348 = vpop.permute.xlu0 %3347
        %3349 = vrot.lane.b32.xlu0 %v3308, 80
        %v3350 = vpop.permute.xlu0 %3349
        %3351 = vrot.lane.b32.xlu0 %v3309, 80
        %v3352 = vpop.permute.xlu0 %3351
        %3353 = vrot.lane.b32.xlu0 %v3310, 80
        %v3354 = vpop.permute.xlu0 %3353
        %3355 = vrot.lane.b32.xlu0 %v3311, 80
        %v3356 = vpop.permute.xlu0 %3355
        %3357 = vrot.lane.b32.xlu0 %v3312, 80
        %v3358 = vpop.permute.xlu0 %3357
        %3359 = vrot.lane.b32.xlu0 %v3313, 80
        %v3360 = vpop.permute.xlu0 %3359
        %3361 = vrot.lane.b32.xlu0 %v3314, 80
        %v3362 = vpop.permute.xlu0 %3361
        %v3379 = vcombine.low %v3332, %v3340
        %v3380 = vcombine.high %v3332, %v3340
        %v3382 = vunpack.c.l.s4 1983009808
        %v3383 = vunpack.c.0.s8 %v3382
        %v3384 = vlaneseq
        %v3385 = vshrl.u32 %v3384, 7
        %v3386 = vsub.s32 %v3383, %v3385
        %v3387 = vrot.slane %v3379, %v3386
        %v3389 = vunpack.c.l.s4 1983009808
        %v3390 = vunpack.c.0.s8 %v3389
        %v3391 = vlaneseq
        %v3392 = vshrl.u32 %v3391, 7
        %v3393 = vsub.s32 %v3390, %v3392
        %v3394 = vrot.slane %v3380, %v3393
        %v3395 = vcombine.low %v3336, %v3344
        %v3396 = vcombine.high %v3336, %v3344
        %v3398 = vunpack.c.l.s4 1983009808
        %v3399 = vunpack.c.0.s8 %v3398
        %v3400 = vlaneseq
        %v3401 = vshrl.u32 %v3400, 7
        %v3402 = vsub.s32 %v3399, %v3401
        %v3403 = vrot.slane %v3395, %v3402
        %v3405 = vunpack.c.l.s4 1983009808
        %v3406 = vunpack.c.0.s8 %v3405
        %v3407 = vlaneseq
        %v3408 = vshrl.u32 %v3407, 7
        %v3409 = vsub.s32 %v3406, %v3408
        %v3410 = vrot.slane %v3396, %v3409
        %v3411 = vcombine.low %v3348, %v3356
        %v3412 = vcombine.high %v3348, %v3356
        %v3414 = vunpack.c.l.s4 1983009808
        %v3415 = vunpack.c.0.s8 %v3414
        %v3416 = vlaneseq
        %v3417 = vshrl.u32 %v3416, 7
        %v3418 = vsub.s32 %v3415, %v3417
        %v3419 = vrot.slane %v3411, %v3418
        %v3421 = vunpack.c.l.s4 1983009808
        %v3422 = vunpack.c.0.s8 %v3421
        %v3423 = vlaneseq
        %v3424 = vshrl.u32 %v3423, 7
        %v3425 = vsub.s32 %v3422, %v3424
        %v3426 = vrot.slane %v3412, %v3425
        %v3427 = vcombine.low %v3352, %v3360
        %v3428 = vcombine.high %v3352, %v3360
        %v3430 = vunpack.c.l.s4 1983009808
        %v3431 = vunpack.c.0.s8 %v3430
        %v3432 = vlaneseq
        %v3433 = vshrl.u32 %v3432, 7
        %v3434 = vsub.s32 %v3431, %v3433
        %v3435 = vrot.slane %v3427, %v3434
        %v3437 = vunpack.c.l.s4 1983009808
        %v3438 = vunpack.c.0.s8 %v3437
        %v3439 = vlaneseq
        %v3440 = vshrl.u32 %v3439, 7
        %v3441 = vsub.s32 %v3438, %v3440
        %v3442 = vrot.slane %v3428, %v3441
        %v3443 = vcombine.low %v3387, %v3403
        %v3444 = vcombine.high %v3387, %v3403
        %v3446 = vunpack.c.l.s4 1934713408
        %v3447 = vunpack.c.0.s8 %v3446
        %v3448 = vlaneseq
        %v3449 = vshrl.u32 %v3448, 7
        %v3450 = vsub.s32 %v3447, %v3449
        %v3451 = vrot.slane %v3443, %v3450
        %v3453 = vunpack.c.l.s4 1934713408
        %v3454 = vunpack.c.0.s8 %v3453
        %v3455 = vlaneseq
        %v3456 = vshrl.u32 %v3455, 7
        %v3457 = vsub.s32 %v3454, %v3456
        %v3458 = vrot.slane %v3444, %v3457
        %v3459 = vcombine.low %v3394, %v3410
        %v3460 = vcombine.high %v3394, %v3410
        %v3462 = vunpack.c.l.s4 1934713408
        %v3463 = vunpack.c.0.s8 %v3462
        %v3464 = vlaneseq
        %v3465 = vshrl.u32 %v3464, 7
        %v3466 = vsub.s32 %v3463, %v3465
        %v3467 = vrot.slane %v3459, %v3466
        %v3469 = vunpack.c.l.s4 1934713408
        %v3470 = vunpack.c.0.s8 %v3469
        %v3471 = vlaneseq
        %v3472 = vshrl.u32 %v3471, 7
        %v3473 = vsub.s32 %v3470, %v3472
        %v3474 = vrot.slane %v3460, %v3473
        %v3475 = vcombine.low %v3419, %v3435
        %v3476 = vcombine.high %v3419, %v3435
        %v3478 = vunpack.c.l.s4 1934713408
        %v3479 = vunpack.c.0.s8 %v3478
        %v3480 = vlaneseq
        %v3481 = vshrl.u32 %v3480, 7
        %v3482 = vsub.s32 %v3479, %v3481
        %v3483 = vrot.slane %v3475, %v3482
        %v3485 = vunpack.c.l.s4 1934713408
        %v3486 = vunpack.c.0.s8 %v3485
        %v3487 = vlaneseq
        %v3488 = vshrl.u32 %v3487, 7
        %v3489 = vsub.s32 %v3486, %v3488
        %v3490 = vrot.slane %v3476, %v3489
        %v3491 = vcombine.low %v3426, %v3442
        %v3492 = vcombine.high %v3426, %v3442
        %v3494 = vunpack.c.l.s4 1934713408
        %v3495 = vunpack.c.0.s8 %v3494
        %v3496 = vlaneseq
        %v3497 = vshrl.u32 %v3496, 7
        %v3498 = vsub.s32 %v3495, %v3497
        %v3499 = vrot.slane %v3491, %v3498
        %v3501 = vunpack.c.l.s4 1934713408
        %v3502 = vunpack.c.0.s8 %v3501
        %v3503 = vlaneseq
        %v3504 = vshrl.u32 %v3503, 7
        %v3505 = vsub.s32 %v3502, %v3504
        %v3506 = vrot.slane %v3492, %v3505
        %v3507 = vcombine.low %v3451, %v3483
        %v3508 = vcombine.high %v3451, %v3483
        %v3509 = vcombine.low %v3458, %v3490
        %v3510 = vcombine.high %v3458, %v3490
        %v3511 = vcombine.low %v3467, %v3499
        %v3512 = vcombine.high %v3467, %v3499
        %v3513 = vcombine.low %v3474, %v3506
        %v3514 = vcombine.high %v3474, %v3506
        %v3515 = vcombine.low %v3334, %v3342
        %v3516 = vcombine.high %v3334, %v3342
        %v3518 = vunpack.c.l.s4 1983009808
        %v3519 = vunpack.c.0.s8 %v3518
        %v3520 = vlaneseq
        %v3521 = vshrl.u32 %v3520, 7
        %v3522 = vsub.s32 %v3519, %v3521
        %v3523 = vrot.slane %v3515, %v3522
        %v3525 = vunpack.c.l.s4 1983009808
        %v3526 = vunpack.c.0.s8 %v3525
        %v3527 = vlaneseq
        %v3528 = vshrl.u32 %v3527, 7
        %v3529 = vsub.s32 %v3526, %v3528
        %v3530 = vrot.slane %v3516, %v3529
        %v3531 = vcombine.low %v3338, %v3346
        %v3532 = vcombine.high %v3338, %v3346
        %v3534 = vunpack.c.l.s4 1983009808
        %v3535 = vunpack.c.0.s8 %v3534
        %v3536 = vlaneseq
        %v3537 = vshrl.u32 %v3536, 7
        %v3538 = vsub.s32 %v3535, %v3537
        %v3539 = vrot.slane %v3531, %v3538
        %v3541 = vunpack.c.l.s4 1983009808
        %v3542 = vunpack.c.0.s8 %v3541
        %v3543 = vlaneseq
        %v3544 = vshrl.u32 %v3543, 7
        %v3545 = vsub.s32 %v3542, %v3544
        %v3546 = vrot.slane %v3532, %v3545
        %v3547 = vcombine.low %v3350, %v3358
        %v3548 = vcombine.high %v3350, %v3358
        %v3550 = vunpack.c.l.s4 1983009808
        %v3551 = vunpack.c.0.s8 %v3550
        %v3552 = vlaneseq
        %v3553 = vshrl.u32 %v3552, 7
        %v3554 = vsub.s32 %v3551, %v3553
        %v3555 = vrot.slane %v3547, %v3554
        %v3557 = vunpack.c.l.s4 1983009808
        %v3558 = vunpack.c.0.s8 %v3557
        %v3559 = vlaneseq
        %v3560 = vshrl.u32 %v3559, 7
        %v3561 = vsub.s32 %v3558, %v3560
        %v3562 = vrot.slane %v3548, %v3561
        %v3563 = vcombine.low %v3354, %v3362
        %v3564 = vcombine.high %v3354, %v3362
        %v3566 = vunpack.c.l.s4 1983009808
        %v3567 = vunpack.c.0.s8 %v3566
        %v3568 = vlaneseq
        %v3569 = vshrl.u32 %v3568, 7
        %v3570 = vsub.s32 %v3567, %v3569
        %v3571 = vrot.slane %v3563, %v3570
        %v3573 = vunpack.c.l.s4 1983009808
        %v3574 = vunpack.c.0.s8 %v3573
        %v3575 = vlaneseq
        %v3576 = vshrl.u32 %v3575, 7
        %v3577 = vsub.s32 %v3574, %v3576
        %v3578 = vrot.slane %v3564, %v3577
        %v3579 = vcombine.low %v3523, %v3539
        %v3580 = vcombine.high %v3523, %v3539
        %v3582 = vunpack.c.l.s4 1934713408
        %v3583 = vunpack.c.0.s8 %v3582
        %v3584 = vlaneseq
        %v3585 = vshrl.u32 %v3584, 7
        %v3586 = vsub.s32 %v3583, %v3585
        %v3587 = vrot.slane %v3579, %v3586
        %v3589 = vunpack.c.l.s4 1934713408
        %v3590 = vunpack.c.0.s8 %v3589
        %v3591 = vlaneseq
        %v3592 = vshrl.u32 %v3591, 7
        %v3593 = vsub.s32 %v3590, %v3592
        %v3594 = vrot.slane %v3580, %v3593
        %v3595 = vcombine.low %v3530, %v3546
        %v3596 = vcombine.high %v3530, %v3546
        %v3598 = vunpack.c.l.s4 1934713408
        %v3599 = vunpack.c.0.s8 %v3598
        %v3600 = vlaneseq
        %v3601 = vshrl.u32 %v3600, 7
        %v3602 = vsub.s32 %v3599, %v3601
        %v3603 = vrot.slane %v3595, %v3602
        %v3605 = vunpack.c.l.s4 1934713408
        %v3606 = vunpack.c.0.s8 %v3605
        %v3607 = vlaneseq
        %v3608 = vshrl.u32 %v3607, 7
        %v3609 = vsub.s32 %v3606, %v3608
        %v3610 = vrot.slane %v3596, %v3609
        %v3611 = vcombine.low %v3555, %v3571
        %v3612 = vcombine.high %v3555, %v3571
        %v3614 = vunpack.c.l.s4 1934713408
        %v3615 = vunpack.c.0.s8 %v3614
        %v3616 = vlaneseq
        %v3617 = vshrl.u32 %v3616, 7
        %v3618 = vsub.s32 %v3615, %v3617
        %v3619 = vrot.slane %v3611, %v3618
        %v3621 = vunpack.c.l.s4 1934713408
        %v3622 = vunpack.c.0.s8 %v3621
        %v3623 = vlaneseq
        %v3624 = vshrl.u32 %v3623, 7
        %v3625 = vsub.s32 %v3622, %v3624
        %v3626 = vrot.slane %v3612, %v3625
        %v3627 = vcombine.low %v3562, %v3578
        %v3628 = vcombine.high %v3562, %v3578
        %v3630 = vunpack.c.l.s4 1934713408
        %v3631 = vunpack.c.0.s8 %v3630
        %v3632 = vlaneseq
        %v3633 = vshrl.u32 %v3632, 7
        %v3634 = vsub.s32 %v3631, %v3633
        %v3635 = vrot.slane %v3627, %v3634
        %v3637 = vunpack.c.l.s4 1934713408
        %v3638 = vunpack.c.0.s8 %v3637
        %v3639 = vlaneseq
        %v3640 = vshrl.u32 %v3639, 7
        %v3641 = vsub.s32 %v3638, %v3640
        %v3642 = vrot.slane %v3628, %v3641
        %v3643 = vcombine.low %v3587, %v3619
        %v3644 = vcombine.high %v3587, %v3619
        %v3645 = vcombine.low %v3594, %v3626
        %v3646 = vcombine.high %v3594, %v3626
        %v3647 = vcombine.low %v3603, %v3635
        %v3648 = vcombine.high %v3603, %v3635
        %v3649 = vcombine.low %v3610, %v3642
        %v3650 = vcombine.high %v3610, %v3642
        %v3653 = vpack.i.b16 %v3643, %v3507
        %v3654 = vshrl.u32 %v3507, 16
        %v3655 = vshrl.u32 %v3643, 16
        %v3656 = vpack.i.b16 %v3655, %v3654
        %v3659 = vpack.i.b16 %v3644, %v3508
        %v3660 = vshrl.u32 %v3508, 16
        %v3661 = vshrl.u32 %v3644, 16
        %v3662 = vpack.i.b16 %v3661, %v3660
        %v3665 = vpack.i.b16 %v3645, %v3509
        %v3666 = vshrl.u32 %v3509, 16
        %v3667 = vshrl.u32 %v3645, 16
        %v3668 = vpack.i.b16 %v3667, %v3666
        %v3671 = vpack.i.b16 %v3646, %v3510
        %v3672 = vshrl.u32 %v3510, 16
        %v3673 = vshrl.u32 %v3646, 16
        %v3674 = vpack.i.b16 %v3673, %v3672
        %v3677 = vpack.i.b16 %v3647, %v3511
        %v3678 = vshrl.u32 %v3511, 16
        %v3679 = vshrl.u32 %v3647, 16
        %v3680 = vpack.i.b16 %v3679, %v3678
        %v3683 = vpack.i.b16 %v3648, %v3512
        %v3684 = vshrl.u32 %v3512, 16
        %v3685 = vshrl.u32 %v3648, 16
        %v3686 = vpack.i.b16 %v3685, %v3684
        %v3689 = vpack.i.b16 %v3649, %v3513
        %v3690 = vshrl.u32 %v3513, 16
        %v3691 = vshrl.u32 %v3649, 16
        %v3692 = vpack.i.b16 %v3691, %v3690
        %v3695 = vpack.i.b16 %v3650, %v3514
        %v3696 = vshrl.u32 %v3514, 16
        %v3697 = vshrl.u32 %v3650, 16
        %v3698 = vpack.i.b16 %v3697, %v3696
        %3699 = vrot.lane.b32.xlu0 %v3656, 16
        %v3700 = vpop.permute.xlu0 %3699
        %3701 = vrot.lane.b32.xlu0 %v3659, 32
        %v3702 = vpop.permute.xlu0 %3701
        %3703 = vrot.lane.b32.xlu0 %v3662, 48
        %v3704 = vpop.permute.xlu0 %3703
        %3705 = vrot.lane.b32.xlu0 %v3665, 64
        %v3706 = vpop.permute.xlu0 %3705
        %3707 = vrot.lane.b32.xlu0 %v3668, 80
        %v3708 = vpop.permute.xlu0 %3707
        %3709 = vrot.lane.b32.xlu0 %v3671, 96
        %v3710 = vpop.permute.xlu0 %3709
        %3711 = vrot.lane.b32.xlu0 %v3674, 112
        %v3712 = vpop.permute.xlu0 %3711
        %3713 = vrot.lane.b32.xlu0 %v3680, 16
        %v3714 = vpop.permute.xlu0 %3713
        %3715 = vrot.lane.b32.xlu0 %v3683, 32
        %v3716 = vpop.permute.xlu0 %3715
        %3717 = vrot.lane.b32.xlu0 %v3686, 48
        %v3718 = vpop.permute.xlu0 %3717
        %3719 = vrot.lane.b32.xlu0 %v3689, 64
        %v3720 = vpop.permute.xlu0 %3719
        %3721 = vrot.lane.b32.xlu0 %v3692, 80
        %v3722 = vpop.permute.xlu0 %3721
        %3723 = vrot.lane.b32.xlu0 %v3695, 96
        %v3724 = vpop.permute.xlu0 %3723
        %3725 = vrot.lane.b32.xlu0 %v3698, 112
        %v3726 = vpop.permute.xlu0 %3725
        %v3729 = vsel %vm1640, %v3653, %v3700
        %v3731 = vsel %vm520, %v3729, %v3702
        %v3733 = vsel %vm1646, %v3731, %v3704
        %v3735 = vsel %vm1649, %v3733, %v3706
        %v3737 = vsel %vm1652, %v3735, %v3708
        %v3739 = vsel %vm1655, %v3737, %v3710
        %v3741 = vsel %vm1658, %v3739, %v3712
        %v3745 = vsel %vm1640, %v3677, %v3714
        %v3747 = vsel %vm520, %v3745, %v3716
        %v3749 = vsel %vm1646, %v3747, %v3718
        %v3751 = vsel %vm1649, %v3749, %v3720
        %v3753 = vsel %vm1652, %v3751, %v3722
        %v3755 = vsel %vm1655, %v3753, %v3724
        %v3757 = vsel %vm1658, %v3755, %v3726
        %v3759 = vld [vmem:[#allocation2 + $0x190] sm:$0xf]
        %v3760 = vld [vmem:[#allocation2 + $0x194] sm:$0xf]
        %v3761 = vld [vmem:[#allocation2 + $0x198] sm:$0xf]
        %v3762 = vld [vmem:[#allocation2 + $0x19c] sm:$0xf]
        %v3763 = vld [vmem:[#allocation2 + $0x1a0] sm:$0xf]
        %v3764 = vld [vmem:[#allocation2 + $0x1a4] sm:$0xf]
        %v3765 = vld [vmem:[#allocation2 + $0x1a8] sm:$0xf]
        %v3766 = vld [vmem:[#allocation2 + $0x1ac] sm:$0xf]
        %v3767 = vld [vmem:[#allocation2 + $0x1b0] sm:$0xf]
        %v3768 = vld [vmem:[#allocation2 + $0x1b4] sm:$0xf]
        %v3769 = vld [vmem:[#allocation2 + $0x1b8] sm:$0xf]
        %v3770 = vld [vmem:[#allocation2 + $0x1bc] sm:$0xf]
        %v3771 = vld [vmem:[#allocation2 + $0x1c0] sm:$0xf]
        %v3772 = vld [vmem:[#allocation2 + $0x1c4] sm:$0xf]
        %v3773 = vld [vmem:[#allocation2 + $0x1c8] sm:$0xf]
        %v3774 = vld [vmem:[#allocation2 + $0x1cc] sm:$0xf]
        %v3775 = vld [vmem:[#allocation2 + $0x1d0] sm:$0xf]
        %v3776 = vld [vmem:[#allocation2 + $0x1d4] sm:$0xf]
        %v3777 = vld [vmem:[#allocation2 + $0x1d8] sm:$0xf]
        %v3778 = vld [vmem:[#allocation2 + $0x1dc] sm:$0xf]
        %v3779 = vld [vmem:[#allocation2 + $0x1e0] sm:$0xf]
        %v3780 = vld [vmem:[#allocation2 + $0x1e4] sm:$0xf]
        %v3781 = vld [vmem:[#allocation2 + $0x1e8] sm:$0xf]
        %v3782 = vld [vmem:[#allocation2 + $0x1ec] sm:$0xf]
        %v3783 = vld [vmem:[#allocation2 + $0x1f0] sm:$0xf]
        %v3784 = vld [vmem:[#allocation2 + $0x1f4] sm:$0xf]
        %v3785 = vld [vmem:[#allocation2 + $0x1f8] sm:$0xf]
        %v3786 = vld [vmem:[#allocation2 + $0x1fc] sm:$0xf]
        %v3787 = vld [vmem:[#allocation2 + $0x200] sm:$0xf]
        %v3788 = vld [vmem:[#allocation2 + $0x204] sm:$0xf]
        %v3789 = vld [vmem:[#allocation2 + $0x208] sm:$0xf]
        %v3790 = vld [vmem:[#allocation2 + $0x20c] sm:$0xf]
        %v3823 = vunpack.c.l.b16 %v3759
        %v3824 = vunpack.c.l.b16 %v3760
        %v3825 = vunpack.c.l.b16 %v3761
        %v3826 = vunpack.c.l.b16 %v3762
        %v3827 = vunpack.c.l.b16 %v3763
        %v3828 = vunpack.c.l.b16 %v3764
        %v3829 = vunpack.c.l.b16 %v3765
        %v3830 = vunpack.c.l.b16 %v3766
        %v3831 = vunpack.c.l.b16 %v3767
        %v3832 = vunpack.c.l.b16 %v3768
        %v3833 = vunpack.c.l.b16 %v3769
        %v3834 = vunpack.c.l.b16 %v3770
        %v3835 = vunpack.c.l.b16 %v3771
        %v3836 = vunpack.c.l.b16 %v3772
        %v3837 = vunpack.c.l.b16 %v3773
        %v3838 = vunpack.c.l.b16 %v3774
        %v3839 = vunpack.c.l.b16 %v3775
        %v3840 = vunpack.c.l.b16 %v3776
        %v3841 = vunpack.c.l.b16 %v3777
        %v3842 = vunpack.c.l.b16 %v3778
        %v3843 = vunpack.c.l.b16 %v3779
        %v3844 = vunpack.c.l.b16 %v3780
        %v3845 = vunpack.c.l.b16 %v3781
        %v3846 = vunpack.c.l.b16 %v3782
        %v3847 = vunpack.c.l.b16 %v3783
        %v3848 = vunpack.c.l.b16 %v3784
        %v3849 = vunpack.c.l.b16 %v3785
        %v3850 = vunpack.c.l.b16 %v3786
        %v3851 = vunpack.c.l.b16 %v3787
        %v3852 = vunpack.c.l.b16 %v3788
        %v3853 = vunpack.c.l.b16 %v3789
        %v3854 = vunpack.c.l.b16 %v3790
        %v3855 = vpack.c.b16 %v3824, %v3823
        %v3856 = vpack.c.b16 %v3826, %v3825
        %v3857 = vpack.c.b16 %v3828, %v3827
        %v3858 = vpack.c.b16 %v3830, %v3829
        %v3859 = vpack.c.b16 %v3832, %v3831
        %v3860 = vpack.c.b16 %v3834, %v3833
        %v3861 = vpack.c.b16 %v3836, %v3835
        %v3862 = vpack.c.b16 %v3838, %v3837
        %v3863 = vpack.c.b16 %v3840, %v3839
        %v3864 = vpack.c.b16 %v3842, %v3841
        %v3865 = vpack.c.b16 %v3844, %v3843
        %v3866 = vpack.c.b16 %v3846, %v3845
        %v3867 = vpack.c.b16 %v3848, %v3847
        %v3868 = vpack.c.b16 %v3850, %v3849
        %v3869 = vpack.c.b16 %v3852, %v3851
        %v3870 = vpack.c.b16 %v3854, %v3853
        %3887 = vmatprep.subr.bf16.mxu0 0
        %3888 = vmatpush1.bf16.msra.mxu0 %v3862
        %3889 = vmatprep.subr.bf16.mxu0 0
        %3890 = vmatpush1.bf16.msra.mxu0 %v3861
        %3891 = vmatprep.subr.bf16.mxu0 0
        %3892 = vmatpush1.bf16.msra.mxu0 %v3860
        %3893 = vmatprep.subr.bf16.mxu0 0
        %3894 = vmatpush1.bf16.msra.mxu0 %v3859
        %3895 = vmatprep.subr.bf16.mxu0 0
        %3896 = vmatpush1.bf16.msra.mxu0 %v3858
        %3897 = vmatprep.subr.bf16.mxu0 0
        %3898 = vmatpush1.bf16.msra.mxu0 %v3857
        %3899 = vmatprep.subr.bf16.mxu0 0
        %3900 = vmatpush1.bf16.msra.mxu0 %v3856
        %3901 = vmatprep.subr.bf16.mxu0 0
        %3902 = vmatpush1.bf16.msra.mxu0 %v3855
        %3903 = vmatprep.subr.bf16.mxu0 0
        %3904 = vmatpush2.bf16.msra.mxu0 %v3870
        %3905 = vmatprep.subr.bf16.mxu0 0
        %3906 = vmatpush2.bf16.msra.mxu0 %v3869
        %3907 = vmatprep.subr.bf16.mxu0 0
        %3908 = vmatpush2.bf16.msra.mxu0 %v3868
        %3909 = vmatprep.subr.bf16.mxu0 0
        %3910 = vmatpush2.bf16.msra.mxu0 %v3867
        %3911 = vmatprep.subr.bf16.mxu0 0
        %3912 = vmatpush2.bf16.msra.mxu0 %v3866
        %3913 = vmatprep.subr.bf16.mxu0 0
        %3914 = vmatpush2.bf16.msra.mxu0 %v3865
        %3915 = vmatprep.subr.bf16.mxu0 0
        %3916 = vmatpush2.bf16.msra.mxu0 %v3864
        %3917 = vmatprep.subr.bf16.mxu0 0
        %3918 = vmatpush2.bf16.msra.mxu0 %v3863
        %3919 = vmatprep.mubr.bf16.mxu0 %v3757
        %3920 = vmatmul.mubr.bf16.gmra.mxu0 %v3741
        %v3921 = vpop.f32.mrf.mxu0
        %v3922 = vadd.f32 0.0, %v3921
        %v3923 = vpop.f32.mrf.mxu0
        %v3924 = vpop.f32.mrf.mxu0
        %v3925 = vadd.f32 0.0, %v3924
        %v3926 = vpop.f32.mrf.mxu0
        %3927 = vdwg.mxu0
        %v3928 = vadd.f32 %v3233, %v3922
        %v3929 = vadd.f32 %v3234, %v3925
        %v3930 = vlaneseq
        %v3931 = vshrl.u32 %v3930, 7
        %v3932 = vsub.s32 0, %v3931
        %v3933 = vrot.slane %v498, %v3932
        %v3934 = vadd.f32 %v3928, %v3933
        %v3935 = vadd.f32 %v3929, %v3933
        %3936 = vst [vmem:[%s458] sm:$0xff] %v3934
        %3937 = vst [vmem:[%s458 + $0x8] sm:$0xff] %v3935
        %v3938 = vlaneseq
        %v3939 = vand.u32 %v3938, 127
        %vm3940 = vcmp.lt.s32.totalorder %v3939, 8
        %3942 = vset.pattern.permute.xlu0 0
        %3943 = vperm.xlu0 %3942, %v3934
        %v3944 = vpop.permute.xlu0 %3943
        %3947 = vset.pattern.permute.xlu0 0
        %3948 = vperm.xlu0 %3947, %v3935
        %v3949 = vpop.permute.xlu0 %3948
        %vm3951 = vcmp.gt.f32.partialorder %v3934, %v3944
        %vm3952 = vcmp.gt.f32.partialorder %v3935, %v3949
        %vm3953 = vmand %vm3951, %vm3940
        %vm3954 = vmand %vm3952, %vm3940
        %v3955 = vsel %vm3953, 1.0, 0.0
        %v3956 = vsel %vm3954, 1.0, 0.0
        %3957 = vadd.xlane.f32.xlu0 %v3955
        %v3958 = vpop.xlane.xlu0 %3957
        %3959 = vadd.xlane.f32.xlu0 %v3956
        %v3960 = vpop.xlane.xlu0 %3959
        %vm3961 = vcmp.eq.f32.partialorder %v3958, 0.0
        %vm3962 = vcmp.eq.f32.partialorder %v3960, 0.0
        %v3963 = vsel %vm3961, 1, 0
        %v3964 = vsel %vm3962, 1, 0
        %v3965 = vcvt.s32.f32 %v3963
        %v3966 = vcvt.s32.f32 %v3964
        %vm3967 = vcmp.eq.s32.totalorder %v3939, 0
        %v3968 = vsel %vm3967, %v3965, %v3955
        %v3969 = vsel %vm3967, %v3966, %v3956
        %v3970 = vpack.c.bf16 %v3969, %v3968
        %v3972 = vunpack.c.l.b16 %v3970
        %v3973 = vunpack.c.h.b16 %v3970
        %v3974 = vpack.c.b16 %v3972, %v3972
        %v3975 = vpack.c.b16 %v3973, %v3973
        %3978 = vst [vmem:[%s465] sm:$0xf] %v3974
        %3979 = vst [vmem:[%s465 + $0x4] sm:$0xf] %v3975
        %s3980 = sand.u32 %s264, 1
        %s3981 = scalar_lea.sflag [#allocation4], %s3980
        %s3982 = sand.u32 %s264, 1
        %s3983 = smul.addr %s3982, 16
        %s3984 = scalar_lea.vmem [#allocation8], %s3983
        %s3985 = sand.u32 %s290, 1
        %s3986 = scalar_lea.sflag [#allocation10], %s3985
        %s3987 = sand.u32 %s290, 1
        %s3988 = smul.addr %s3987, 8
        %s3989 = scalar_lea.vmem [#allocation9], %s3988
        // Predicated region
        $region73: #{tpu_custom_call.1} parent=59 // pred_check
          %p3990 = pneg %p274
        $region74: #{tpu_custom_call.1} parent=59 // pred_check_branch
          %3992 = sbr.rel (%p3990) target = $region76
        $region75: #{tpu_custom_call.1} parent=59 // pred_region
          %s3993 = smul.u32 2, %s31
          %s3995 = ssub.s32 256, 256
          %3996 = vsyncadd %s3981, %s3995
          %s3997 = smul.addr %s3993, 128
          %s3998 = scalar_lea.hbm %s10, %s3997
          %s3999 = sshll.u32 %s3984, 4
          %s4000 = int_to_ptr.vmem [resolvable:$true] %s3999
          %4005 = dma.vmem_to_hbm [thread:$0]  %s4000, 256, %s3998, %s3981, 128, 128, 8
        $region76: #{tpu_custom_call.1} parent=59 // pred_fallthru
          _
        // Predicated region
        $region77: #{tpu_custom_call.1} parent=59 // pred_check
          %p4006 = pneg %p300
        $region78: #{tpu_custom_call.1} parent=59 // pred_check_branch
          %4008 = sbr.rel (%p4006) target = $region80
        $region79: #{tpu_custom_call.1} parent=59 // pred_region
          %s4009 = smul.u32 2, %s31
          %s4011 = ssub.s32 128, 128
          %4012 = vsyncadd %s3986, %s4011
          %s4013 = smul.addr %s4009, 64
          %s4014 = scalar_lea.hbm %s11, %s4013
          %s4015 = sshll.u32 %s3989, 4
          %s4016 = int_to_ptr.vmem [resolvable:$true] %s4015
          %4021 = dma.vmem_to_hbm [thread:$0]  %s4016, 128, %s4014, %s3986, 64, 64, 4
        $region80: #{tpu_custom_call.1} parent=59 // pred_fallthru
          _
      $region60: #{tpu_custom_call.1} parent=5 // pred_fallthru
        _
      %p4022 = scmp.le.s32.totalorder 2, %s26
      // Predicated region
      $region81: #{tpu_custom_call.1} parent=5 // pred_check
        %p4023 = pneg %p4022
      $region82: #{tpu_custom_call.1} parent=5 // pred_check_branch
        %4025 = sbr.rel (%p4023) target = $region84
      $region83: #{tpu_custom_call.1} parent=5 // pred_region
        %s4026 = ssub.s32 %s26, 2
        // Predicated region
        $region85: #{tpu_custom_call.1} parent=83 // pred_check
          %p4027 = pneg %p280
        $region86: #{tpu_custom_call.1} parent=83 // pred_check_branch
          %4029 = sbr.rel (%p4027) target = $region88
        $region87: #{tpu_custom_call.1} parent=83 // pred_region
          %s4030 = sand.u32 %s265, 1
          %s4031 = scalar_lea.sflag [#allocation4], %s4030
          %s4032 = sand.u32 %s265, 1
          %s4033 = smul.addr %s4032, 16
          %s4034 = scalar_lea.vmem [#allocation8], %s4033
          %4035 = dma.done %s4031, 256
        $region88: #{tpu_custom_call.1} parent=83 // pred_fallthru
          _
        // Predicated region
        $region89: #{tpu_custom_call.1} parent=83 // pred_check
          %p4036 = pneg %p306
        $region90: #{tpu_custom_call.1} parent=83 // pred_check_branch
          %4038 = sbr.rel (%p4036) target = $region92
        $region91: #{tpu_custom_call.1} parent=83 // pred_region
          %s4039 = sand.u32 %s291, 1
          %s4040 = scalar_lea.sflag [#allocation10], %s4039
          %s4041 = sand.u32 %s291, 1
          %s4042 = smul.addr %s4041, 8
          %s4043 = scalar_lea.vmem [#allocation9], %s4042
          %4044 = dma.done %s4040, 128
        $region92: #{tpu_custom_call.1} parent=83 // pred_fallthru
          _
      $region84: #{tpu_custom_call.1} parent=5 // pred_fallthru
        _
    $region6: #{tpu_custom_call.1} parent=1 // loop_footer
      %s30 = sadd.s32 1, %s26
    $region7: #{tpu_custom_call.1} parent=1 // loop_footer_branch
      %25 = sbr.rel target = $region3
    $region8: #{tpu_custom_call.1} parent=1 // loop_exit
      _
    %4045 = vsyncpa [#allocation3], 1
    %s4046 = scalar_lea.sflag [#allocation3], 1
    %4047 = vsyncpa %s4046, 1
    %4048 = vsyncpa [#allocation6], 1
    %4049 = vsyncpa [#allocation4], 1
    %s4050 = scalar_lea.sflag [#allocation4], 1
    %4051 = vsyncpa %s4050, 1
    %4052 = vsyncpa [#allocation10], 1
    %s4053 = scalar_lea.sflag [#allocation10], 1
    %4054 = vsyncpa %s4053, 1

</llo_original>
